<compile_context>
chip_gen: v5e
topology: v5e:2x2
jax: 0.10.0
libtpu: 0.0.40
codegen_flags: <defaults>
</compile_context>

<pallas_src>
import numpy as np
import jax
import jax.numpy as jnp
from jax.experimental import pallas as pl
from jax.experimental.pallas import tpu as pltpu

_LANES = 128
_X_BLOCK_BUDGET = 6 * 1024 * 1024   # target bytes of one x block (per pipeline buffer)
_MAX_TILE_G = 1024                  # 1024 G-rows == 131072 input rows per block


# ----------------------------- kernel bodies ------------------------------- #

def _wavg_kernel_bf16(x_ref, w_hi_ref, o_ref):
    # x_ref: (tile_g, 128*F) bf16; w_hi_ref: (128*F, 128) bf16 block-diag weights
    # (resident, constant index map); o_ref: (tile_g, 128) lane-dense output.
    o_ref[...] = jnp.dot(
        x_ref[...], w_hi_ref[...], preferred_element_type=jnp.float32
    ).astype(o_ref.dtype)


def _wavg_kernel_f32_split(x_ref, w_hi_ref, w_lo_ref, o_ref):
    # f32 input path: bf16 hi/lo split of x and of the weights, 3 bf16 MXU
    # matmuls with f32 accumulation (drops only the x_lo*w_lo term, ~2^-16 rel).
    x = x_ref[...]                                    # f32 (tile_g, 128*F)
    x_hi = x.astype(jnp.bfloat16)
    x_lo = (x - x_hi.astype(jnp.float32)).astype(jnp.bfloat16)
    w_hi = w_hi_ref[...]
    w_lo = w_lo_ref[...]
    acc = jnp.dot(x_hi, w_hi, preferred_element_type=jnp.float32)
    acc = acc + jnp.dot(x_lo, w_hi, preferred_element_type=jnp.float32)
    acc = acc + jnp.dot(x_hi, w_lo, preferred_element_type=jnp.float32)
    o_ref[...] = acc.astype(o_ref.dtype)


# ------------------------------ helpers ------------------------------------ #

def _num_tensorcores() -> int:
    """Best-effort TensorCore count (v7x has 2 per chip; v5e/v6e have 1)."""
    try:
        info = pltpu.get_tpu_info()
        for attr in ("num_cores", "core_count", "tensorcore_count", "num_tensorcores"):
            v = getattr(info, attr, None)
            if isinstance(v, int) and v > 1:
                return v
    except Exception:
        pass
    try:
        if "v7" in jax.devices()[0].device_kind.lower():
            return 2
    except Exception:
        pass
    return 1


def _pick_tiling(g_total: int, in_features: int, itemsize: int, num_tc: int):
    """Choose (tile_g, num_blocks) over the packed (g_total, 128*F) view."""
    bytes_per_g = _LANES * in_features * itemsize
    budget_tile_g = max(8, _X_BLOCK_BUDGET // bytes_per_g)
    max_tile_g = min(_MAX_TILE_G, budget_tile_g)

    # Single-TC chips: one block of the largest size under budget.
    if num_tc <= 1 and g_total <= max_tile_g:
        return g_total, 1

    num_blocks = pl.cdiv(g_total, max_tile_g)
    if num_tc > 1:
        # Keep both v7x TensorCores busy: aim for >= 2 blocks per core when the
        # total work permits, otherwise at least one block per core.
        if g_total >= 16 * num_tc:
            num_blocks = max(num_blocks, 2 * num_tc)
        elif g_total >= 2 * num_tc:
            num_blocks = max(num_blocks, num_tc)

    if num_blocks <= 1:
        return g_total, 1

    # tile_g must be a multiple of 8 (sublane) when it does not span the array.
    # Floor (not ceil) keeps the blocks roughly equal for load balancing.
    tile_g = max(8, (pl.cdiv(g_total, num_blocks) // 8) * 8)
    tile_g = min(tile_g, max(8, (max_tile_g // 8) * 8))
    if tile_g >= g_total:
        return g_total, 1
    return tile_g, pl.cdiv(g_total, tile_g)


# ------------------------------- wrapper ------------------------------------ #

def weighted_average(x: jax.Array, weights: jax.Array, learnable: bool = False) -> jax.Array:
    """Pallas implementation of WeightedAverage.forward."""
    in_features = x.shape[-1]
    assert weights.shape == (in_features,), (weights.shape, in_features)

    if learnable:
        # softmax over a tiny (F,) vector: parameter preprocessing, stays in JAX glue.
        weights = jax.nn.softmax(weights.astype(jnp.float32), axis=-1)
    else:
        weights = weights.astype(jnp.float32)

    lead_shape = x.shape[:-1]
    n_rows = int(np.prod(lead_shape)) if lead_shape else 1
    out_dtype = x.dtype

    # Compute-dtype policy: bf16 inputs -> single bf16 matmul; everything else
    # runs the f32 hi/lo-split path (near-f32 accuracy, bf16 MXU rate).
    if x.dtype == jnp.bfloat16:
        split = False
        x_calc = x
    else:
        split = True
        x_calc = x if x.dtype == jnp.float32 else x.astype(jnp.float32)
    itemsize = jnp.dtype(x_calc.dtype).itemsize

    # ---- pack 128 rows per G-row; pad AT MOST 127 rows (aligned case: no copy) ----
    x2 = x_calc.reshape(n_rows, in_features)
    g_total = pl.cdiv(n_rows, _LANES)
    pad_rows = g_total * _LANES - n_rows
    if pad_rows:
        x2 = jnp.pad(x2, ((0, pad_rows), (0, 0)))
    x_packed = x2.reshape(g_total, _LANES * in_features)

    num_tc = _num_tensorcores()
    tile_g, num_blocks = _pick_tiling(g_total, in_features, itemsize, num_tc)

    # ---- block-diagonal weights: W[p, r] = w[p % F] * (p // F == r), bf16 hi/lo ----
    p = jnp.arange(_LANES * in_features)
    w_rep = weights[jnp.mod(p, in_features)]                               # (128*F,)
    mask = (p[:, None] // in_features) == jnp.arange(_LANES)[None, :]
    w_big = jnp.where(mask, w_rep[:, None], 0.0).astype(jnp.float32)       # (128*F, 128)
    w_hi = w_big.astype(jnp.bfloat16)
    if split:
        w_lo = (w_big - w_hi.astype(jnp.float32)).astype(jnp.bfloat16)
        w_args = (w_hi, w_lo)
        kernel = _wavg_kernel_f32_split
    else:
        w_args = (w_hi,)
        kernel = _wavg_kernel_bf16

    blk_k = _LANES * in_features
    out_itemsize = jnp.dtype(out_dtype).itemsize

    # ---- cost estimate: report the work actually issued (block-diag matmuls) ----
    n_matmuls = 3 if split else 1
    issued_rows = num_blocks * tile_g * _LANES
    cost = pl.CostEstimate(
        flops=2 * n_matmuls * issued_rows * in_features * _LANES,
        transcendentals=0,
        bytes_accessed=(x_packed.size * itemsize
                        + g_total * _LANES * out_itemsize
                        + sum(int(w.size) * 2 for w in w_args)),
    )

    # ---- VMEM limit derived from the actual buffers (not a flat 32 MiB) ----
    x_tile_bytes = tile_g * blk_k * itemsize
    out_tile_bytes = tile_g * _LANES * out_itemsize
    w_bytes = len(w_args) * blk_k * _LANES * 2            # bf16, worst-case 2 buffers
    temp_bytes = 2 * x_tile_bytes if split else 0         # in-kernel hi/lo temporaries
    vmem_need = 2 * x_tile_bytes + 2 * out_tile_bytes + 2 * w_bytes + temp_bytes
    vmem_limit = int(min(56 * 1024 * 1024,
                         max(32 * 1024 * 1024, int(vmem_need * 1.25) + (2 << 20))))

    def _run(weight_pipeline_mode):
        def w_spec():
            if weight_pipeline_mode is None:
                return pl.BlockSpec((blk_k, _LANES), lambda i: (0, 0))
            return pl.BlockSpec((blk_k, _LANES), lambda i: (0, 0),
                                pipeline_mode=weight_pipeline_mode)
        return pl.pallas_call(
            kernel,
            out_shape=jax.ShapeDtypeStruct((g_total, _LANES), out_dtype),
            grid=(num_blocks,),
            in_specs=[pl.BlockSpec((tile_g, blk_k), lambda i: (i, 0))]
                     + [w_spec() for _ in w_args],
            out_specs=pl.BlockSpec((tile_g, _LANES), lambda i: (i, 0)),
            compiler_params=pltpu.CompilerParams(
                dimension_semantics=("parallel",),
                vmem_limit_bytes=vmem_limit,
            ),
            cost_estimate=cost,
        )(x_packed, *w_args)

    buffered_cls = getattr(pl, "Buffered", None)
    if buffered_cls is not None:
        try:
            # Pin the constant-index-map weights to a single VMEM buffer.
            out_packed = _run(buffered_cls(1))
        except Exception:
            # TODO(synk): drop fallback once Buffered(1) resident-weight pinning
            # is guaranteed on all deployed jax versions.
            out_packed = _run(None)
    else:
        out_packed = _run(None)

    out_flat = out_packed.reshape(-1)[:n_rows]
    return out_flat.reshape(lead_shape)


def make_weights(in_features: int, learnable: bool, key=None) -> jax.Array:
    """Deterministic parameter init matching WeightedAverage.__init__."""
    if learnable:
        assert key is not None
        return jax.random.normal(key, (in_features,), dtype=jnp.float32)
    if in_features == 1:
        return jnp.array([0.5], dtype=jnp.float32)
    return jnp.array(
        [0.5] + [0.5 / (in_features - 1)] * (in_features - 1), dtype=jnp.float32
    )


if __name__ == "__main__":
    key = jax.random.PRNGKey(0)
    kx, kw, kx2 = jax.random.split(key, 3)

    in_features = 16
    x = jax.random.normal(kx, (2, 4, 16, in_features), dtype=jnp.float32)

    # --- non-learnable path (module default); 128 rows -> zero-copy pack ---
    w_fixed = make_weights(in_features, learnable=False)
    out = jax.block_until_ready(weighted_average(x, w_fixed, learnable=False))
    ref = np.einsum("...f,f->...",
                    np.asarray(x).astype(np.float64),
                    np.asarray(w_fixed).astype(np.float64))
    assert out.shape == x.shape[:-1], (out.shape, x.shape[:-1])
    np.testing.assert_allclose(np.asarray(out).astype(np.float64), ref,
                               rtol=5e-4, atol=5e-5)

    # --- learnable path (softmax-normalized random weights) ---
    w_learn = make_weights(in_features, learnable=True, key=kw)
    out_l = jax.block_until_ready(weighted_average(x, w_learn, learnable=True))
    w_soft = np.asarray(jax.nn.softmax(w_learn)).astype(np.float64)
    ref_l = np.einsum("...f,f->...", np.asarray(x).astype(np.float64), w_soft)
    np.testing.assert_allclose(np.asarray(out_l).astype(np.float64), ref_l,
                               rtol=5e-4, atol=5e-5)

    # --- ragged row count (2400 rows): <=127-row pad + partial-block path ---
    x_odd = jax.random.normal(kx2, (4, 600, in_features), dtype=jnp.float32)
    out_odd = jax.block_until_ready(weighted_average(x_odd, w_fixed, learnable=False))
    ref_odd = np.einsum("...f,f->...",
                        np.asarray(x_odd).astype(np.float64),
                        np.asarray(w_fixed).astype(np.float64))
    np.testing.assert_allclose(np.asarray(out_odd).astype(np.float64), ref_odd,
                               rtol=5e-4, atol=5e-5)

    # --- bf16 input path (single bf16 matmul; bf16-rounded weights) ---
    x_bf = x.astype(jnp.bfloat16)
    out_bf = jax.block_until_ready(weighted_average(x_bf, w_fixed, learnable=False))
    ref_bf = np.einsum("...f,f->...",
                       np.asarray(x_bf).astype(np.float64),
                       np.asarray(w_fixed).astype(np.float64))
    np.testing.assert_allclose(np.asarray(out_bf).astype(np.float64), ref_bf,
                               rtol=2e-2, atol=1e-2)

    print("KERNEL_OK")
</pallas_src>

<mosaic_0001>
module attributes {stable_mosaic.version = 11 : i64} {
  func.func @_wavg_kernel_f32_split(%arg0: i32, %arg1: memref<1x2048xf32, #tpu.memory_space<vmem>>, %arg2: memref<2048x128xbf16, #tpu.memory_space<vmem>>, %arg3: memref<2048x128xbf16, #tpu.memory_space<vmem>>, %arg4: memref<1x128xf32, #tpu.memory_space<vmem>>) attributes {dimension_semantics = [#tpu.dimension_semantics<parallel>], iteration_bounds = array<i64: 1>, scalar_prefetch = 0 : i64, scratch_operands = 0 : i64, tpu.core_type = #tpu.core_type<tc>, window_params = [{transform_indices = @transform_0, window_bounds = array<i64: 1, 2048>}, {pipeline_mode = #tpu.pipeline_mode<synchronous>, transform_indices = @transform_1, window_bounds = array<i64: 2048, 128>}, {pipeline_mode = #tpu.pipeline_mode<synchronous>, transform_indices = @transform_2, window_bounds = array<i64: 2048, 128>}, {transform_indices = @transform_3, window_bounds = array<i64: 1, 128>}]} {
    %c0 = arith.constant 0 : index
    %c0_0 = arith.constant 0 : index
    %0 = vector.load %arg1[%c0, %c0_0] : memref<1x2048xf32, #tpu.memory_space<vmem>>, vector<1x2048xf32>
    %1 = arith.truncf %0 : vector<1x2048xf32> to vector<1x2048xbf16>
    %2 = arith.extf %1 : vector<1x2048xbf16> to vector<1x2048xf32>
    %3 = arith.subf %0, %2 : vector<1x2048xf32>
    %4 = arith.truncf %3 : vector<1x2048xf32> to vector<1x2048xbf16>
    %c0_1 = arith.constant 0 : index
    %c0_2 = arith.constant 0 : index
    %5 = vector.load %arg2[%c0_1, %c0_2] : memref<2048x128xbf16, #tpu.memory_space<vmem>>, vector<2048x128xbf16>
    %c0_3 = arith.constant 0 : index
    %c0_4 = arith.constant 0 : index
    %6 = vector.load %arg3[%c0_3, %c0_4] : memref<2048x128xbf16, #tpu.memory_space<vmem>>, vector<2048x128xbf16>
    %cst = arith.constant dense<0.000000e+00> : vector<1x128xf32>
    %7 = tpu.matmul %1, %5, %cst {dimension_numbers = #tpu.dot_dimension_numbers<[1], [0], [0], [1], [0, 0, 1, 1], [], []>} : vector<1x2048xbf16>, vector<2048x128xbf16>, vector<1x128xf32> -> vector<1x128xf32>
    %cst_5 = arith.constant dense<0.000000e+00> : vector<1x128xf32>
    %8 = tpu.matmul %4, %5, %cst_5 {dimension_numbers = #tpu.dot_dimension_numbers<[1], [0], [0], [1], [0, 0, 1, 1], [], []>} : vector<1x2048xbf16>, vector<2048x128xbf16>, vector<1x128xf32> -> vector<1x128xf32>
    %9 = arith.addf %7, %8 : vector<1x128xf32>
    %cst_6 = arith.constant dense<0.000000e+00> : vector<1x128xf32>
    %10 = tpu.matmul %1, %6, %cst_6 {dimension_numbers = #tpu.dot_dimension_numbers<[1], [0], [0], [1], [0, 0, 1, 1], [], []>} : vector<1x2048xbf16>, vector<2048x128xbf16>, vector<1x128xf32> -> vector<1x128xf32>
    %11 = arith.addf %9, %10 : vector<1x128xf32>
    %c0_7 = arith.constant 0 : index
    %c0_8 = arith.constant 0 : index
    %12 = vector.load %arg4[%c0_7, %c0_8] : memref<1x128xf32, #tpu.memory_space<vmem>>, vector<1x128xf32>
    tpu.vector_store %arg4[%c0_7, %c0_8], %11 {strides = array<i32>} : memref<1x128xf32, #tpu.memory_space<vmem>>, vector<1x128xf32>,
    return
  }
  func.func @transform_0(%arg0: i32) -> (i32, i32) {
    %c0_i32 = arith.constant 0 : i32
    %c0_i32_0 = arith.constant 0 : i32
    return %arg0, %c0_i32 : i32, i32
  }
  func.func @transform_1(%arg0: i32) -> (i32, i32) {
    %c0_i32 = arith.constant 0 : i32
    %c0_i32_0 = arith.constant 0 : i32
    %c0_i32_1 = arith.constant 0 : i32
    return %c0_i32, %c0_i32_0 : i32, i32
  }
  func.func @transform_2(%arg0: i32) -> (i32, i32) {
    %c0_i32 = arith.constant 0 : i32
    %c0_i32_0 = arith.constant 0 : i32
    %c0_i32_1 = arith.constant 0 : i32
    return %c0_i32, %c0_i32_0 : i32, i32
  }
  func.func @transform_3(%arg0: i32) -> (i32, i32) {
    %c0_i32 = arith.constant 0 : i32
    %c0_i32_0 = arith.constant 0 : i32
    return %arg0, %c0_i32 : i32, i32
  }
}

module attributes {stable_mosaic.version = 11 : i64} {
  func.func @_wavg_kernel_f32_split(%arg0: i32, %arg1: memref<1x2048xf32, #tpu.memory_space<vmem>>, %arg2: memref<2048x128xbf16, #tpu.memory_space<vmem>>, %arg3: memref<2048x128xbf16, #tpu.memory_space<vmem>>, %arg4: memref<1x128xf32, #tpu.memory_space<vmem>>) attributes {dimension_semantics = [#tpu.dimension_semantics<parallel>], iteration_bounds = array<i64: 1>, scalar_prefetch = 0 : i64, scratch_operands = 0 : i64, tpu.core_type = #tpu.core_type<tc>, window_params = [{transform_indices = @transform_0, window_bounds = array<i64: 1, 2048>}, {pipeline_mode = #tpu.pipeline_mode<synchronous>, transform_indices = @transform_1, window_bounds = array<i64: 2048, 128>}, {pipeline_mode = #tpu.pipeline_mode<synchronous>, transform_indices = @transform_2, window_bounds = array<i64: 2048, 128>}, {transform_indices = @transform_3, window_bounds = array<i64: 1, 128>}]} {
    %c0 = arith.constant 0 : index
    %c0_0 = arith.constant 0 : index
    %0 = vector.load %arg1[%c0, %c0_0] : memref<1x2048xf32, #tpu.memory_space<vmem>>, vector<1x2048xf32>
    %1 = arith.truncf %0 : vector<1x2048xf32> to vector<1x2048xbf16>
    %2 = arith.extf %1 : vector<1x2048xbf16> to vector<1x2048xf32>
    %3 = arith.subf %0, %2 : vector<1x2048xf32>
    %4 = arith.truncf %3 : vector<1x2048xf32> to vector<1x2048xbf16>
    %c0_1 = arith.constant 0 : index
    %c0_2 = arith.constant 0 : index
    %5 = vector.load %arg2[%c0_1, %c0_2] : memref<2048x128xbf16, #tpu.memory_space<vmem>>, vector<2048x128xbf16>
    %c0_3 = arith.constant 0 : index
    %c0_4 = arith.constant 0 : index
    %6 = vector.load %arg3[%c0_3, %c0_4] : memref<2048x128xbf16, #tpu.memory_space<vmem>>, vector<2048x128xbf16>
    %cst = arith.constant dense<0.000000e+00> : vector<1x128xf32>
    %7 = tpu.matmul %1, %5, %cst {dimension_numbers = #tpu.dot_dimension_numbers<[1], [0], [0], [1], [0, 0, 1, 1], [], []>} : vector<1x2048xbf16>, vector<2048x128xbf16>, vector<1x128xf32> -> vector<1x128xf32>
    %cst_5 = arith.constant dense<0.000000e+00> : vector<1x128xf32>
    %8 = tpu.matmul %4, %5, %cst_5 {dimension_numbers = #tpu.dot_dimension_numbers<[1], [0], [0], [1], [0, 0, 1, 1], [], []>} : vector<1x2048xbf16>, vector<2048x128xbf16>, vector<1x128xf32> -> vector<1x128xf32>
    %9 = arith.addf %7, %8 : vector<1x128xf32>
    %cst_6 = arith.constant dense<0.000000e+00> : vector<1x128xf32>
    %10 = tpu.matmul %1, %6, %cst_6 {dimension_numbers = #tpu.dot_dimension_numbers<[1], [0], [0], [1], [0, 0, 1, 1], [], []>} : vector<1x2048xbf16>, vector<2048x128xbf16>, vector<1x128xf32> -> vector<1x128xf32>
    %11 = arith.addf %9, %10 : vector<1x128xf32>
    %c0_7 = arith.constant 0 : index
    %c0_8 = arith.constant 0 : index
    %12 = vector.load %arg4[%c0_7, %c0_8] : memref<1x128xf32, #tpu.memory_space<vmem>>, vector<1x128xf32>
    tpu.vector_store %arg4[%c0_7, %c0_8], %11 {strides = array<i32>} : memref<1x128xf32, #tpu.memory_space<vmem>>, vector<1x128xf32>,
    return
  }
  func.func @transform_0(%arg0: i32) -> (i32, i32) {
    %c0_i32 = arith.constant 0 : i32
    %c0_i32_0 = arith.constant 0 : i32
    return %arg0, %c0_i32 : i32, i32
  }
  func.func @transform_1(%arg0: i32) -> (i32, i32) {
    %c0_i32 = arith.constant 0 : i32
    %c0_i32_0 = arith.constant 0 : i32
    %c0_i32_1 = arith.constant 0 : i32
    return %c0_i32, %c0_i32_0 : i32, i32
  }
  func.func @transform_2(%arg0: i32) -> (i32, i32) {
    %c0_i32 = arith.constant 0 : i32
    %c0_i32_0 = arith.constant 0 : i32
    %c0_i32_1 = arith.constant 0 : i32
    return %c0_i32, %c0_i32_0 : i32, i32
  }
  func.func @transform_3(%arg0: i32) -> (i32, i32) {
    %c0_i32 = arith.constant 0 : i32
    %c0_i32_0 = arith.constant 0 : i32
    return %arg0, %c0_i32 : i32, i32
  }
}

</mosaic_0001>

<llo_original>
// kernel: tpu_custom_call.1
$region0: #{tpu_custom_call.1}
  #allocation0 [shape = 'u32[]', space=smem, size = 0x4, offset = 0x4, fixed_abs, tag = 'smem constant byte address 0x4 - core index']
  #allocation1 [shape = 'u32[72,128]{1,0:T(1,128)}', space=vmem, size = 0x9000, scoped, tag = 'internal scratch']
  %s0 = inlined_call_operand.hbm [shape: f32[1,2048], index: 0, kind: input, shape index: {}]
  %s1 = inlined_call_operand.hbm [shape: bf16[2048,128], index: 1, kind: input, shape index: {}]
  %s2 = inlined_call_operand.hbm [shape: bf16[2048,128], index: 2, kind: input, shape index: {}]
  %s3 = inlined_call_operand.hbm [shape: f32[1,128], index: 3, kind: output, shape index: {}]
  %s4 = sld [smem:[#allocation0]]
  $region34: #{tpu_custom_call.1} parent=0
    _
  %s6 = ssub.s32 1, %s4
  %s7 = scalar_select 0, %s6, %s4
  $region1: #{tpu_custom_call.1} parent=0
    #allocation2 [shape = 'u8[8192]{0}', space=vmem, size = 0x2000, scoped, tag = 'input window, operand 0, single buffered']
    #allocation3 [shape = 's32[1]{0}', space=sflag, size = 0x4, scoped, tag = 'scoped memory for tpu_custom_call.1']
    #allocation4 [shape = 's32[1]{0}', space=sflag, size = 0x4, scoped, tag = 'scoped memory for tpu_custom_call.1']
    #allocation5 [shape = 'u8[524288]{0}', space=vmem, size = 0x80000, scoped, tag = 'input window, operand 1, single buffered']
    #allocation6 [shape = 's32[1]{0}', space=sflag, size = 0x4, scoped, tag = 'scoped memory for tpu_custom_call.1']
    #allocation7 [shape = 'u8[524288]{0}', space=vmem, size = 0x80000, scoped, tag = 'input window, operand 2, single buffered']
    #allocation8 [shape = 'u8[512]{0}', space=vmem, size = 0x400, scoped, tag = 'output window, operand 0, single buffered']
    %8 = vsyncpa [#allocation3], 0
    %9 = vsyncpa [#allocation6], 0
    %10 = vsyncpa [#allocation4], 0
    // Predicated region
    $region2: #{tpu_custom_call.1} parent=1 // pred_check
      _
    $region3: #{tpu_custom_call.1} parent=1 // pred_check_branch
      %12 = sbr.rel (0) target = $region5
    $region4: #{tpu_custom_call.1} parent=1 // pred_region
      %14 = vsyncadd [#allocation3], 0
      %s16 = sshll.u32 %s0, 4
      %s17 = int_to_ptr.hbm [resolvable:$true] %s16
      %s18 = sshll.u32 [#allocation2], 4
      %s19 = int_to_ptr.vmem [resolvable:$true] %s18
      %21 = dma.hbm_to_vmem [thread:$0]  %s17, 256, %s19, [#allocation3]
    $region5: #{tpu_custom_call.1} parent=1 // pred_fallthru
      _
    // Predicated region
    $region6: #{tpu_custom_call.1} parent=1 // pred_check
      _
    $region7: #{tpu_custom_call.1} parent=1 // pred_check_branch
      %23 = sbr.rel (0) target = $region9
    $region8: #{tpu_custom_call.1} parent=1 // pred_region
      %25 = vsyncadd [#allocation6], 0
      %s26 = sshll.u32 %s1, 4
      %s27 = int_to_ptr.hbm [resolvable:$true] %s26
      %s28 = sshll.u32 [#allocation5], 4
      %s29 = int_to_ptr.vmem [resolvable:$true] %s28
      %34 = dma.hbm_to_vmem [thread:$0]  %s27, 16384, %s29, [#allocation6], 64, 64, 4
    $region9: #{tpu_custom_call.1} parent=1 // pred_fallthru
      _
    // Predicated region
    $region10: #{tpu_custom_call.1} parent=1 // pred_check
      _
    $region11: #{tpu_custom_call.1} parent=1 // pred_check_branch
      %36 = sbr.rel (0) target = $region13
    $region12: #{tpu_custom_call.1} parent=1 // pred_region
      %38 = vsyncadd [#allocation6], 0
      %s39 = sshll.u32 %s2, 4
      %s40 = int_to_ptr.hbm [resolvable:$true] %s39
      %s41 = sshll.u32 [#allocation7], 4
      %s42 = int_to_ptr.vmem [resolvable:$true] %s41
      %47 = dma.hbm_to_vmem [thread:$0]  %s40, 16384, %s42, [#allocation6], 64, 64, 4
    $region13: #{tpu_custom_call.1} parent=1 // pred_fallthru
      _
    // Predicated region
    $region14: #{tpu_custom_call.1} parent=1 // pred_check
      _
    $region15: #{tpu_custom_call.1} parent=1 // pred_check_branch
      %49 = sbr.rel (0) target = $region17
    $region16: #{tpu_custom_call.1} parent=1 // pred_region
      %51 = dma.done [#allocation3], 256
    $region17: #{tpu_custom_call.1} parent=1 // pred_fallthru
      _
    // Predicated region
    $region18: #{tpu_custom_call.1} parent=1 // pred_check
      _
    $region19: #{tpu_custom_call.1} parent=1 // pred_check_branch
      %53 = sbr.rel (0) target = $region21
    $region20: #{tpu_custom_call.1} parent=1 // pred_region
      %55 = dma.done [#allocation6], 16384
    $region21: #{tpu_custom_call.1} parent=1 // pred_fallthru
      _
    // Predicated region
    $region22: #{tpu_custom_call.1} parent=1 // pred_check
      _
    $region23: #{tpu_custom_call.1} parent=1 // pred_check_branch
      %57 = sbr.rel (0) target = $region25
    $region24: #{tpu_custom_call.1} parent=1 // pred_region
      %59 = dma.done [#allocation6], 16384
    $region25: #{tpu_custom_call.1} parent=1 // pred_fallthru
      _
    %v60 = vld [vmem:[#allocation2] sm:$0xff]
    %v61 = vld [vmem:[#allocation2 + $0x8] sm:$0xff]
    %v64 = vperm.slane %v60, 0
    %v65 = vperm.slane %v60, 1
    %v66 = vperm.slane %v60, 2
    %v67 = vperm.slane %v60, 3
    %v68 = vperm.slane %v60, 4
    %v69 = vperm.slane %v60, 5
    %v70 = vperm.slane %v60, 6
    %v71 = vperm.slane %v60, 7
    %v72 = vperm.slane %v61, 0
    %v73 = vperm.slane %v61, 1
    %v74 = vperm.slane %v61, 2
    %v75 = vperm.slane %v61, 3
    %v76 = vperm.slane %v61, 4
    %v77 = vperm.slane %v61, 5
    %v78 = vperm.slane %v61, 6
    %v79 = vperm.slane %v61, 7
    %v96 = vpack.c.bf16 %v65, %v64
    %v97 = vpack.c.bf16 %v67, %v66
    %v98 = vpack.c.bf16 %v69, %v68
    %v99 = vpack.c.bf16 %v71, %v70
    %v100 = vpack.c.bf16 %v73, %v72
    %v101 = vpack.c.bf16 %v75, %v74
    %v102 = vpack.c.bf16 %v77, %v76
    %v103 = vpack.c.bf16 %v79, %v78
    %v104 = vunpack.c.l.bf16 %v96
    %v105 = vunpack.c.h.bf16 %v96
    %v106 = vunpack.c.l.bf16 %v97
    %v107 = vunpack.c.h.bf16 %v97
    %v108 = vunpack.c.l.bf16 %v98
    %v109 = vunpack.c.h.bf16 %v98
    %v110 = vunpack.c.l.bf16 %v99
    %v111 = vunpack.c.h.bf16 %v99
    %v112 = vunpack.c.l.bf16 %v100
    %v113 = vunpack.c.h.bf16 %v100
    %v114 = vunpack.c.l.bf16 %v101
    %v115 = vunpack.c.h.bf16 %v101
    %v116 = vunpack.c.l.bf16 %v102
    %v117 = vunpack.c.h.bf16 %v102
    %v118 = vunpack.c.l.bf16 %v103
    %v119 = vunpack.c.h.bf16 %v103
    %v136 = vrot.slane %v105, 7
    %v137 = vrot.slane %v106, 6
    %v138 = vrot.slane %v107, 5
    %v139 = vrot.slane %v108, 4
    %v140 = vrot.slane %v109, 3
    %v141 = vrot.slane %v110, 2
    %v142 = vrot.slane %v111, 1
    %v143 = vrot.slane %v113, 7
    %v144 = vrot.slane %v114, 6
    %v145 = vrot.slane %v115, 5
    %v146 = vrot.slane %v116, 4
    %v147 = vrot.slane %v117, 3
    %v148 = vrot.slane %v118, 2
    %v149 = vrot.slane %v119, 1
    %vm150 = vcmask 1040384
    %v151 = vsel %vm150, %v104, %v136
    %vm152 = vcmask 1042434
    %v153 = vsel %vm152, %v137, %v138
    %vm154 = vcmask 1041408
    %v155 = vsel %vm154, %v151, %v153
    %vm156 = vcmask 1044484
    %v157 = vsel %vm156, %v139, %v140
    %vm158 = vcmask 1046534
    %v159 = vsel %vm158, %v141, %v142
    %vm160 = vcmask 1045508
    %v161 = vsel %vm160, %v157, %v159
    %vm162 = vcmask 1043456
    %v163 = vsel %vm162, %v155, %v161
    %v164 = vsel %vm150, %v112, %v143
    %v165 = vsel %vm152, %v144, %v145
    %v166 = vsel %vm154, %v164, %v165
    %v167 = vsel %vm156, %v146, %v147
    %v168 = vsel %vm158, %v148, %v149
    %v169 = vsel %vm160, %v167, %v168
    %v170 = vsel %vm162, %v166, %v169
    %v173 = vsub.f32 %v60, %v163
    %v174 = vsub.f32 %v61, %v170
    %v177 = vperm.slane %v173, 0
    %v178 = vperm.slane %v173, 1
    %v179 = vperm.slane %v173, 2
    %v180 = vperm.slane %v173, 3
    %v181 = vperm.slane %v173, 4
    %v182 = vperm.slane %v173, 5
    %v183 = vperm.slane %v173, 6
    %v184 = vperm.slane %v173, 7
    %v185 = vperm.slane %v174, 0
    %v186 = vperm.slane %v174, 1
    %v187 = vperm.slane %v174, 2
    %v188 = vperm.slane %v174, 3
    %v189 = vperm.slane %v174, 4
    %v190 = vperm.slane %v174, 5
    %v191 = vperm.slane %v174, 6
    %v192 = vperm.slane %v174, 7
    %v209 = vpack.c.bf16 %v177, %v177
    %v210 = vpack.c.bf16 %v178, %v178
    %v211 = vpack.c.bf16 %v179, %v179
    %v212 = vpack.c.bf16 %v180, %v180
    %v213 = vpack.c.bf16 %v181, %v181
    %v214 = vpack.c.bf16 %v182, %v182
    %v215 = vpack.c.bf16 %v183, %v183
    %v216 = vpack.c.bf16 %v184, %v184
    %v217 = vpack.c.bf16 %v185, %v185
    %v218 = vpack.c.bf16 %v186, %v186
    %v219 = vpack.c.bf16 %v187, %v187
    %v220 = vpack.c.bf16 %v188, %v188
    %v221 = vpack.c.bf16 %v189, %v189
    %v222 = vpack.c.bf16 %v190, %v190
    %v223 = vpack.c.bf16 %v191, %v191
    %v224 = vpack.c.bf16 %v192, %v192
    %v225 = vld [vmem:[#allocation5] sm:$0xf]
    %v226 = vld [vmem:[#allocation5 + $0x4] sm:$0xf]
    %v227 = vld [vmem:[#allocation5 + $0x8] sm:$0xf]
    %v228 = vld [vmem:[#allocation5 + $0xc] sm:$0xf]
    %v229 = vld [vmem:[#allocation5 + $0x10] sm:$0xf]
    %v230 = vld [vmem:[#allocation5 + $0x14] sm:$0xf]
    %v231 = vld [vmem:[#allocation5 + $0x18] sm:$0xf]
    %v232 = vld [vmem:[#allocation5 + $0x1c] sm:$0xf]
    %v233 = vld [vmem:[#allocation5 + $0x20] sm:$0xf]
    %v234 = vld [vmem:[#allocation5 + $0x24] sm:$0xf]
    %v235 = vld [vmem:[#allocation5 + $0x28] sm:$0xf]
    %v236 = vld [vmem:[#allocation5 + $0x2c] sm:$0xf]
    %v237 = vld [vmem:[#allocation5 + $0x30] sm:$0xf]
    %v238 = vld [vmem:[#allocation5 + $0x34] sm:$0xf]
    %v239 = vld [vmem:[#allocation5 + $0x38] sm:$0xf]
    %v240 = vld [vmem:[#allocation5 + $0x3c] sm:$0xf]
    %v241 = vld [vmem:[#allocation5 + $0x40] sm:$0xf]
    %v242 = vld [vmem:[#allocation5 + $0x44] sm:$0xf]
    %v243 = vld [vmem:[#allocation5 + $0x48] sm:$0xf]
    %v244 = vld [vmem:[#allocation5 + $0x4c] sm:$0xf]
    %v245 = vld [vmem:[#allocation5 + $0x50] sm:$0xf]
    %v246 = vld [vmem:[#allocation5 + $0x54] sm:$0xf]
    %v247 = vld [vmem:[#allocation5 + $0x58] sm:$0xf]
    %v248 = vld [vmem:[#allocation5 + $0x5c] sm:$0xf]
    %v249 = vld [vmem:[#allocation5 + $0x60] sm:$0xf]
    %v250 = vld [vmem:[#allocation5 + $0x64] sm:$0xf]
    %v251 = vld [vmem:[#allocation5 + $0x68] sm:$0xf]
    %v252 = vld [vmem:[#allocation5 + $0x6c] sm:$0xf]
    %v253 = vld [vmem:[#allocation5 + $0x70] sm:$0xf]
    %v254 = vld [vmem:[#allocation5 + $0x74] sm:$0xf]
    %v255 = vld [vmem:[#allocation5 + $0x78] sm:$0xf]
    %v256 = vld [vmem:[#allocation5 + $0x7c] sm:$0xf]
    %v257 = vld [vmem:[#allocation5 + $0x80] sm:$0xf]
    %v258 = vld [vmem:[#allocation5 + $0x84] sm:$0xf]
    %v259 = vld [vmem:[#allocation5 + $0x88] sm:$0xf]
    %v260 = vld [vmem:[#allocation5 + $0x8c] sm:$0xf]
    %v261 = vld [vmem:[#allocation5 + $0x90] sm:$0xf]
    %v262 = vld [vmem:[#allocation5 + $0x94] sm:$0xf]
    %v263 = vld [vmem:[#allocation5 + $0x98] sm:$0xf]
    %v264 = vld [vmem:[#allocation5 + $0x9c] sm:$0xf]
    %v265 = vld [vmem:[#allocation5 + $0xa0] sm:$0xf]
    %v266 = vld [vmem:[#allocation5 + $0xa4] sm:$0xf]
    %v267 = vld [vmem:[#allocation5 + $0xa8] sm:$0xf]
    %v268 = vld [vmem:[#allocation5 + $0xac] sm:$0xf]
    %v269 = vld [vmem:[#allocation5 + $0xb0] sm:$0xf]
    %v270 = vld [vmem:[#allocation5 + $0xb4] sm:$0xf]
    %v271 = vld [vmem:[#allocation5 + $0xb8] sm:$0xf]
    %v272 = vld [vmem:[#allocation5 + $0xbc] sm:$0xf]
    %v273 = vld [vmem:[#allocation5 + $0xc0] sm:$0xf]
    %v274 = vld [vmem:[#allocation5 + $0xc4] sm:$0xf]
    %v275 = vld [vmem:[#allocation5 + $0xc8] sm:$0xf]
    %v276 = vld [vmem:[#allocation5 + $0xcc] sm:$0xf]
    %v277 = vld [vmem:[#allocation5 + $0xd0] sm:$0xf]
    %v278 = vld [vmem:[#allocation5 + $0xd4] sm:$0xf]
    %v279 = vld [vmem:[#allocation5 + $0xd8] sm:$0xf]
    %v280 = vld [vmem:[#allocation5 + $0xdc] sm:$0xf]
    %v281 = vld [vmem:[#allocation5 + $0xe0] sm:$0xf]
    %v282 = vld [vmem:[#allocation5 + $0xe4] sm:$0xf]
    %v283 = vld [vmem:[#allocation5 + $0xe8] sm:$0xf]
    %v284 = vld [vmem:[#allocation5 + $0xec] sm:$0xf]
    %v285 = vld [vmem:[#allocation5 + $0xf0] sm:$0xf]
    %v286 = vld [vmem:[#allocation5 + $0xf4] sm:$0xf]
    %v287 = vld [vmem:[#allocation5 + $0xf8] sm:$0xf]
    %v288 = vld [vmem:[#allocation5 + $0xfc] sm:$0xf]
    %v289 = vld [vmem:[#allocation5 + $0x100] sm:$0xf]
    %v290 = vld [vmem:[#allocation5 + $0x104] sm:$0xf]
    %v291 = vld [vmem:[#allocation5 + $0x108] sm:$0xf]
    %v292 = vld [vmem:[#allocation5 + $0x10c] sm:$0xf]
    %v293 = vld [vmem:[#allocation5 + $0x110] sm:$0xf]
    %v294 = vld [vmem:[#allocation5 + $0x114] sm:$0xf]
    %v295 = vld [vmem:[#allocation5 + $0x118] sm:$0xf]
    %v296 = vld [vmem:[#allocation5 + $0x11c] sm:$0xf]
    %v297 = vld [vmem:[#allocation5 + $0x120] sm:$0xf]
    %v298 = vld [vmem:[#allocation5 + $0x124] sm:$0xf]
    %v299 = vld [vmem:[#allocation5 + $0x128] sm:$0xf]
    %v300 = vld [vmem:[#allocation5 + $0x12c] sm:$0xf]
    %v301 = vld [vmem:[#allocation5 + $0x130] sm:$0xf]
    %v302 = vld [vmem:[#allocation5 + $0x134] sm:$0xf]
    %v303 = vld [vmem:[#allocation5 + $0x138] sm:$0xf]
    %v304 = vld [vmem:[#allocation5 + $0x13c] sm:$0xf]
    %v305 = vld [vmem:[#allocation5 + $0x140] sm:$0xf]
    %v306 = vld [vmem:[#allocation5 + $0x144] sm:$0xf]
    %v307 = vld [vmem:[#allocation5 + $0x148] sm:$0xf]
    %v308 = vld [vmem:[#allocation5 + $0x14c] sm:$0xf]
    %v309 = vld [vmem:[#allocation5 + $0x150] sm:$0xf]
    %v310 = vld [vmem:[#allocation5 + $0x154] sm:$0xf]
    %v311 = vld [vmem:[#allocation5 + $0x158] sm:$0xf]
    %v312 = vld [vmem:[#allocation5 + $0x15c] sm:$0xf]
    %v313 = vld [vmem:[#allocation5 + $0x160] sm:$0xf]
    %v314 = vld [vmem:[#allocation5 + $0x164] sm:$0xf]
    %v315 = vld [vmem:[#allocation5 + $0x168] sm:$0xf]
    %v316 = vld [vmem:[#allocation5 + $0x16c] sm:$0xf]
    %v317 = vld [vmem:[#allocation5 + $0x170] sm:$0xf]
    %v318 = vld [vmem:[#allocation5 + $0x174] sm:$0xf]
    %v319 = vld [vmem:[#allocation5 + $0x178] sm:$0xf]
    %v320 = vld [vmem:[#allocation5 + $0x17c] sm:$0xf]
    %v321 = vld [vmem:[#allocation5 + $0x180] sm:$0xf]
    %v322 = vld [vmem:[#allocation5 + $0x184] sm:$0xf]
    %v323 = vld [vmem:[#allocation5 + $0x188] sm:$0xf]
    %v324 = vld [vmem:[#allocation5 + $0x18c] sm:$0xf]
    %v325 = vld [vmem:[#allocation5 + $0x190] sm:$0xf]
    %v326 = vld [vmem:[#allocation5 + $0x194] sm:$0xf]
    %v327 = vld [vmem:[#allocation5 + $0x198] sm:$0xf]
    %v328 = vld [vmem:[#allocation5 + $0x19c] sm:$0xf]
    %v329 = vld [vmem:[#allocation5 + $0x1a0] sm:$0xf]
    %v330 = vld [vmem:[#allocation5 + $0x1a4] sm:$0xf]
    %v331 = vld [vmem:[#allocation5 + $0x1a8] sm:$0xf]
    %v332 = vld [vmem:[#allocation5 + $0x1ac] sm:$0xf]
    %v333 = vld [vmem:[#allocation5 + $0x1b0] sm:$0xf]
    %v334 = vld [vmem:[#allocation5 + $0x1b4] sm:$0xf]
    %v335 = vld [vmem:[#allocation5 + $0x1b8] sm:$0xf]
    %v336 = vld [vmem:[#allocation5 + $0x1bc] sm:$0xf]
    %v337 = vld [vmem:[#allocation5 + $0x1c0] sm:$0xf]
    %v338 = vld [vmem:[#allocation5 + $0x1c4] sm:$0xf]
    %v339 = vld [vmem:[#allocation5 + $0x1c8] sm:$0xf]
    %v340 = vld [vmem:[#allocation5 + $0x1cc] sm:$0xf]
    %v341 = vld [vmem:[#allocation5 + $0x1d0] sm:$0xf]
    %v342 = vld [vmem:[#allocation5 + $0x1d4] sm:$0xf]
    %v343 = vld [vmem:[#allocation5 + $0x1d8] sm:$0xf]
    %v344 = vld [vmem:[#allocation5 + $0x1dc] sm:$0xf]
    %v345 = vld [vmem:[#allocation5 + $0x1e0] sm:$0xf]
    %v346 = vld [vmem:[#allocation5 + $0x1e4] sm:$0xf]
    %v347 = vld [vmem:[#allocation5 + $0x1e8] sm:$0xf]
    %v348 = vld [vmem:[#allocation5 + $0x1ec] sm:$0xf]
    %v349 = vld [vmem:[#allocation5 + $0x1f0] sm:$0xf]
    %v350 = vld [vmem:[#allocation5 + $0x1f4] sm:$0xf]
    %v351 = vld [vmem:[#allocation5 + $0x1f8] sm:$0xf]
    %v352 = vld [vmem:[#allocation5 + $0x1fc] sm:$0xf]
    %v353 = vld [vmem:[#allocation5 + $0x200] sm:$0xf]
    %v354 = vld [vmem:[#allocation5 + $0x204] sm:$0xf]
    %v355 = vld [vmem:[#allocation5 + $0x208] sm:$0xf]
    %v356 = vld [vmem:[#allocation5 + $0x20c] sm:$0xf]
    %v357 = vld [vmem:[#allocation5 + $0x210] sm:$0xf]
    %v358 = vld [vmem:[#allocation5 + $0x214] sm:$0xf]
    %v359 = vld [vmem:[#allocation5 + $0x218] sm:$0xf]
    %v360 = vld [vmem:[#allocation5 + $0x21c] sm:$0xf]
    %v361 = vld [vmem:[#allocation5 + $0x220] sm:$0xf]
    %v362 = vld [vmem:[#allocation5 + $0x224] sm:$0xf]
    %v363 = vld [vmem:[#allocation5 + $0x228] sm:$0xf]
    %v364 = vld [vmem:[#allocation5 + $0x22c] sm:$0xf]
    %v365 = vld [vmem:[#allocation5 + $0x230] sm:$0xf]
    %v366 = vld [vmem:[#allocation5 + $0x234] sm:$0xf]
    %v367 = vld [vmem:[#allocation5 + $0x238] sm:$0xf]
    %v368 = vld [vmem:[#allocation5 + $0x23c] sm:$0xf]
    %v369 = vld [vmem:[#allocation5 + $0x240] sm:$0xf]
    %v370 = vld [vmem:[#allocation5 + $0x244] sm:$0xf]
    %v371 = vld [vmem:[#allocation5 + $0x248] sm:$0xf]
    %v372 = vld [vmem:[#allocation5 + $0x24c] sm:$0xf]
    %v373 = vld [vmem:[#allocation5 + $0x250] sm:$0xf]
    %v374 = vld [vmem:[#allocation5 + $0x254] sm:$0xf]
    %v375 = vld [vmem:[#allocation5 + $0x258] sm:$0xf]
    %v376 = vld [vmem:[#allocation5 + $0x25c] sm:$0xf]
    %v377 = vld [vmem:[#allocation5 + $0x260] sm:$0xf]
    %v378 = vld [vmem:[#allocation5 + $0x264] sm:$0xf]
    %v379 = vld [vmem:[#allocation5 + $0x268] sm:$0xf]
    %v380 = vld [vmem:[#allocation5 + $0x26c] sm:$0xf]
    %v381 = vld [vmem:[#allocation5 + $0x270] sm:$0xf]
    %v382 = vld [vmem:[#allocation5 + $0x274] sm:$0xf]
    %v383 = vld [vmem:[#allocation5 + $0x278] sm:$0xf]
    %v384 = vld [vmem:[#allocation5 + $0x27c] sm:$0xf]
    %v385 = vld [vmem:[#allocation5 + $0x280] sm:$0xf]
    %v386 = vld [vmem:[#allocation5 + $0x284] sm:$0xf]
    %v387 = vld [vmem:[#allocation5 + $0x288] sm:$0xf]
    %v388 = vld [vmem:[#allocation5 + $0x28c] sm:$0xf]
    %v389 = vld [vmem:[#allocation5 + $0x290] sm:$0xf]
    %v390 = vld [vmem:[#allocation5 + $0x294] sm:$0xf]
    %v391 = vld [vmem:[#allocation5 + $0x298] sm:$0xf]
    %v392 = vld [vmem:[#allocation5 + $0x29c] sm:$0xf]
    %v393 = vld [vmem:[#allocation5 + $0x2a0] sm:$0xf]
    %v394 = vld [vmem:[#allocation5 + $0x2a4] sm:$0xf]
    %v395 = vld [vmem:[#allocation5 + $0x2a8] sm:$0xf]
    %v396 = vld [vmem:[#allocation5 + $0x2ac] sm:$0xf]
    %v397 = vld [vmem:[#allocation5 + $0x2b0] sm:$0xf]
    %v398 = vld [vmem:[#allocation5 + $0x2b4] sm:$0xf]
    %v399 = vld [vmem:[#allocation5 + $0x2b8] sm:$0xf]
    %v400 = vld [vmem:[#allocation5 + $0x2bc] sm:$0xf]
    %v401 = vld [vmem:[#allocation5 + $0x2c0] sm:$0xf]
    %v402 = vld [vmem:[#allocation5 + $0x2c4] sm:$0xf]
    %v403 = vld [vmem:[#allocation5 + $0x2c8] sm:$0xf]
    %v404 = vld [vmem:[#allocation5 + $0x2cc] sm:$0xf]
    %v405 = vld [vmem:[#allocation5 + $0x2d0] sm:$0xf]
    %v406 = vld [vmem:[#allocation5 + $0x2d4] sm:$0xf]
    %v407 = vld [vmem:[#allocation5 + $0x2d8] sm:$0xf]
    %v408 = vld [vmem:[#allocation5 + $0x2dc] sm:$0xf]
    %v409 = vld [vmem:[#allocation5 + $0x2e0] sm:$0xf]
    %v410 = vld [vmem:[#allocation5 + $0x2e4] sm:$0xf]
    %v411 = vld [vmem:[#allocation5 + $0x2e8] sm:$0xf]
    %v412 = vld [vmem:[#allocation5 + $0x2ec] sm:$0xf]
    %v413 = vld [vmem:[#allocation5 + $0x2f0] sm:$0xf]
    %v414 = vld [vmem:[#allocation5 + $0x2f4] sm:$0xf]
    %v415 = vld [vmem:[#allocation5 + $0x2f8] sm:$0xf]
    %v416 = vld [vmem:[#allocation5 + $0x2fc] sm:$0xf]
    %v417 = vld [vmem:[#allocation5 + $0x300] sm:$0xf]
    %v418 = vld [vmem:[#allocation5 + $0x304] sm:$0xf]
    %v419 = vld [vmem:[#allocation5 + $0x308] sm:$0xf]
    %v420 = vld [vmem:[#allocation5 + $0x30c] sm:$0xf]
    %v421 = vld [vmem:[#allocation5 + $0x310] sm:$0xf]
    %v422 = vld [vmem:[#allocation5 + $0x314] sm:$0xf]
    %v423 = vld [vmem:[#allocation5 + $0x318] sm:$0xf]
    %v424 = vld [vmem:[#allocation5 + $0x31c] sm:$0xf]
    %v425 = vld [vmem:[#allocation5 + $0x320] sm:$0xf]
    %v426 = vld [vmem:[#allocation5 + $0x324] sm:$0xf]
    %v427 = vld [vmem:[#allocation5 + $0x328] sm:$0xf]
    %v428 = vld [vmem:[#allocation5 + $0x32c] sm:$0xf]
    %v429 = vld [vmem:[#allocation5 + $0x330] sm:$0xf]
    %v430 = vld [vmem:[#allocation5 + $0x334] sm:$0xf]
    %v431 = vld [vmem:[#allocation5 + $0x338] sm:$0xf]
    %v432 = vld [vmem:[#allocation5 + $0x33c] sm:$0xf]
    %v433 = vld [vmem:[#allocation5 + $0x340] sm:$0xf]
    %v434 = vld [vmem:[#allocation5 + $0x344] sm:$0xf]
    %v435 = vld [vmem:[#allocation5 + $0x348] sm:$0xf]
    %v436 = vld [vmem:[#allocation5 + $0x34c] sm:$0xf]
    %v437 = vld [vmem:[#allocation5 + $0x350] sm:$0xf]
    %v438 = vld [vmem:[#allocation5 + $0x354] sm:$0xf]
    %v439 = vld [vmem:[#allocation5 + $0x358] sm:$0xf]
    %v440 = vld [vmem:[#allocation5 + $0x35c] sm:$0xf]
    %v441 = vld [vmem:[#allocation5 + $0x360] sm:$0xf]
    %v442 = vld [vmem:[#allocation5 + $0x364] sm:$0xf]
    %v443 = vld [vmem:[#allocation5 + $0x368] sm:$0xf]
    %v444 = vld [vmem:[#allocation5 + $0x36c] sm:$0xf]
    %v445 = vld [vmem:[#allocation5 + $0x370] sm:$0xf]
    %v446 = vld [vmem:[#allocation5 + $0x374] sm:$0xf]
    %v447 = vld [vmem:[#allocation5 + $0x378] sm:$0xf]
    %v448 = vld [vmem:[#allocation5 + $0x37c] sm:$0xf]
    %v449 = vld [vmem:[#allocation5 + $0x380] sm:$0xf]
    %v450 = vld [vmem:[#allocation5 + $0x384] sm:$0xf]
    %v451 = vld [vmem:[#allocation5 + $0x388] sm:$0xf]
    %v452 = vld [vmem:[#allocation5 + $0x38c] sm:$0xf]
    %v453 = vld [vmem:[#allocation5 + $0x390] sm:$0xf]
    %v454 = vld [vmem:[#allocation5 + $0x394] sm:$0xf]
    %v455 = vld [vmem:[#allocation5 + $0x398] sm:$0xf]
    %v456 = vld [vmem:[#allocation5 + $0x39c] sm:$0xf]
    %v457 = vld [vmem:[#allocation5 + $0x3a0] sm:$0xf]
    %v458 = vld [vmem:[#allocation5 + $0x3a4] sm:$0xf]
    %v459 = vld [vmem:[#allocation5 + $0x3a8] sm:$0xf]
    %v460 = vld [vmem:[#allocation5 + $0x3ac] sm:$0xf]
    %v461 = vld [vmem:[#allocation5 + $0x3b0] sm:$0xf]
    %v462 = vld [vmem:[#allocation5 + $0x3b4] sm:$0xf]
    %v463 = vld [vmem:[#allocation5 + $0x3b8] sm:$0xf]
    %v464 = vld [vmem:[#allocation5 + $0x3bc] sm:$0xf]
    %v465 = vld [vmem:[#allocation5 + $0x3c0] sm:$0xf]
    %v466 = vld [vmem:[#allocation5 + $0x3c4] sm:$0xf]
    %v467 = vld [vmem:[#allocation5 + $0x3c8] sm:$0xf]
    %v468 = vld [vmem:[#allocation5 + $0x3cc] sm:$0xf]
    %v469 = vld [vmem:[#allocation5 + $0x3d0] sm:$0xf]
    %v470 = vld [vmem:[#allocation5 + $0x3d4] sm:$0xf]
    %v471 = vld [vmem:[#allocation5 + $0x3d8] sm:$0xf]
    %v472 = vld [vmem:[#allocation5 + $0x3dc] sm:$0xf]
    %v473 = vld [vmem:[#allocation5 + $0x3e0] sm:$0xf]
    %v474 = vld [vmem:[#allocation5 + $0x3e4] sm:$0xf]
    %v475 = vld [vmem:[#allocation5 + $0x3e8] sm:$0xf]
    %v476 = vld [vmem:[#allocation5 + $0x3ec] sm:$0xf]
    %v477 = vld [vmem:[#allocation5 + $0x3f0] sm:$0xf]
    %v478 = vld [vmem:[#allocation5 + $0x3f4] sm:$0xf]
    %v479 = vld [vmem:[#allocation5 + $0x3f8] sm:$0xf]
    %v480 = vld [vmem:[#allocation5 + $0x3fc] sm:$0xf]
    %v481 = vld [vmem:[#allocation7] sm:$0xf]
    %v482 = vld [vmem:[#allocation7 + $0x4] sm:$0xf]
    %v483 = vld [vmem:[#allocation7 + $0x8] sm:$0xf]
    %v484 = vld [vmem:[#allocation7 + $0xc] sm:$0xf]
    %v485 = vld [vmem:[#allocation7 + $0x10] sm:$0xf]
    %v486 = vld [vmem:[#allocation7 + $0x14] sm:$0xf]
    %v487 = vld [vmem:[#allocation7 + $0x18] sm:$0xf]
    %v488 = vld [vmem:[#allocation7 + $0x1c] sm:$0xf]
    %v489 = vld [vmem:[#allocation7 + $0x20] sm:$0xf]
    %v490 = vld [vmem:[#allocation7 + $0x24] sm:$0xf]
    %v491 = vld [vmem:[#allocation7 + $0x28] sm:$0xf]
    %v492 = vld [vmem:[#allocation7 + $0x2c] sm:$0xf]
    %v493 = vld [vmem:[#allocation7 + $0x30] sm:$0xf]
    %v494 = vld [vmem:[#allocation7 + $0x34] sm:$0xf]
    %v495 = vld [vmem:[#allocation7 + $0x38] sm:$0xf]
    %v496 = vld [vmem:[#allocation7 + $0x3c] sm:$0xf]
    %v497 = vld [vmem:[#allocation7 + $0x40] sm:$0xf]
    %v498 = vld [vmem:[#allocation7 + $0x44] sm:$0xf]
    %v499 = vld [vmem:[#allocation7 + $0x48] sm:$0xf]
    %v500 = vld [vmem:[#allocation7 + $0x4c] sm:$0xf]
    %v501 = vld [vmem:[#allocation7 + $0x50] sm:$0xf]
    %v502 = vld [vmem:[#allocation7 + $0x54] sm:$0xf]
    %v503 = vld [vmem:[#allocation7 + $0x58] sm:$0xf]
    %v504 = vld [vmem:[#allocation7 + $0x5c] sm:$0xf]
    %v505 = vld [vmem:[#allocation7 + $0x60] sm:$0xf]
    %v506 = vld [vmem:[#allocation7 + $0x64] sm:$0xf]
    %v507 = vld [vmem:[#allocation7 + $0x68] sm:$0xf]
    %v508 = vld [vmem:[#allocation7 + $0x6c] sm:$0xf]
    %v509 = vld [vmem:[#allocation7 + $0x70] sm:$0xf]
    %v510 = vld [vmem:[#allocation7 + $0x74] sm:$0xf]
    %v511 = vld [vmem:[#allocation7 + $0x78] sm:$0xf]
    %v512 = vld [vmem:[#allocation7 + $0x7c] sm:$0xf]
    %v513 = vld [vmem:[#allocation7 + $0x80] sm:$0xf]
    %v514 = vld [vmem:[#allocation7 + $0x84] sm:$0xf]
    %v515 = vld [vmem:[#allocation7 + $0x88] sm:$0xf]
    %v516 = vld [vmem:[#allocation7 + $0x8c] sm:$0xf]
    %v517 = vld [vmem:[#allocation7 + $0x90] sm:$0xf]
    %v518 = vld [vmem:[#allocation7 + $0x94] sm:$0xf]
    %v519 = vld [vmem:[#allocation7 + $0x98] sm:$0xf]
    %v520 = vld [vmem:[#allocation7 + $0x9c] sm:$0xf]
    %v521 = vld [vmem:[#allocation7 + $0xa0] sm:$0xf]
    %v522 = vld [vmem:[#allocation7 + $0xa4] sm:$0xf]
    %v523 = vld [vmem:[#allocation7 + $0xa8] sm:$0xf]
    %v524 = vld [vmem:[#allocation7 + $0xac] sm:$0xf]
    %v525 = vld [vmem:[#allocation7 + $0xb0] sm:$0xf]
    %v526 = vld [vmem:[#allocation7 + $0xb4] sm:$0xf]
    %v527 = vld [vmem:[#allocation7 + $0xb8] sm:$0xf]
    %v528 = vld [vmem:[#allocation7 + $0xbc] sm:$0xf]
    %v529 = vld [vmem:[#allocation7 + $0xc0] sm:$0xf]
    %v530 = vld [vmem:[#allocation7 + $0xc4] sm:$0xf]
    %v531 = vld [vmem:[#allocation7 + $0xc8] sm:$0xf]
    %v532 = vld [vmem:[#allocation7 + $0xcc] sm:$0xf]
    %v533 = vld [vmem:[#allocation7 + $0xd0] sm:$0xf]
    %v534 = vld [vmem:[#allocation7 + $0xd4] sm:$0xf]
    %v535 = vld [vmem:[#allocation7 + $0xd8] sm:$0xf]
    %v536 = vld [vmem:[#allocation7 + $0xdc] sm:$0xf]
    %v537 = vld [vmem:[#allocation7 + $0xe0] sm:$0xf]
    %v538 = vld [vmem:[#allocation7 + $0xe4] sm:$0xf]
    %v539 = vld [vmem:[#allocation7 + $0xe8] sm:$0xf]
    %v540 = vld [vmem:[#allocation7 + $0xec] sm:$0xf]
    %v541 = vld [vmem:[#allocation7 + $0xf0] sm:$0xf]
    %v542 = vld [vmem:[#allocation7 + $0xf4] sm:$0xf]
    %v543 = vld [vmem:[#allocation7 + $0xf8] sm:$0xf]
    %v544 = vld [vmem:[#allocation7 + $0xfc] sm:$0xf]
    %v545 = vld [vmem:[#allocation7 + $0x100] sm:$0xf]
    %v546 = vld [vmem:[#allocation7 + $0x104] sm:$0xf]
    %v547 = vld [vmem:[#allocation7 + $0x108] sm:$0xf]
    %v548 = vld [vmem:[#allocation7 + $0x10c] sm:$0xf]
    %v549 = vld [vmem:[#allocation7 + $0x110] sm:$0xf]
    %v550 = vld [vmem:[#allocation7 + $0x114] sm:$0xf]
    %v551 = vld [vmem:[#allocation7 + $0x118] sm:$0xf]
    %v552 = vld [vmem:[#allocation7 + $0x11c] sm:$0xf]
    %v553 = vld [vmem:[#allocation7 + $0x120] sm:$0xf]
    %v554 = vld [vmem:[#allocation7 + $0x124] sm:$0xf]
    %v555 = vld [vmem:[#allocation7 + $0x128] sm:$0xf]
    %v556 = vld [vmem:[#allocation7 + $0x12c] sm:$0xf]
    %v557 = vld [vmem:[#allocation7 + $0x130] sm:$0xf]
    %v558 = vld [vmem:[#allocation7 + $0x134] sm:$0xf]
    %v559 = vld [vmem:[#allocation7 + $0x138] sm:$0xf]
    %v560 = vld [vmem:[#allocation7 + $0x13c] sm:$0xf]
    %v561 = vld [vmem:[#allocation7 + $0x140] sm:$0xf]
    %v562 = vld [vmem:[#allocation7 + $0x144] sm:$0xf]
    %v563 = vld [vmem:[#allocation7 + $0x148] sm:$0xf]
    %v564 = vld [vmem:[#allocation7 + $0x14c] sm:$0xf]
    %v565 = vld [vmem:[#allocation7 + $0x150] sm:$0xf]
    %v566 = vld [vmem:[#allocation7 + $0x154] sm:$0xf]
    %v567 = vld [vmem:[#allocation7 + $0x158] sm:$0xf]
    %v568 = vld [vmem:[#allocation7 + $0x15c] sm:$0xf]
    %v569 = vld [vmem:[#allocation7 + $0x160] sm:$0xf]
    %v570 = vld [vmem:[#allocation7 + $0x164] sm:$0xf]
    %v571 = vld [vmem:[#allocation7 + $0x168] sm:$0xf]
    %v572 = vld [vmem:[#allocation7 + $0x16c] sm:$0xf]
    %v573 = vld [vmem:[#allocation7 + $0x170] sm:$0xf]
    %v574 = vld [vmem:[#allocation7 + $0x174] sm:$0xf]
    %v575 = vld [vmem:[#allocation7 + $0x178] sm:$0xf]
    %v576 = vld [vmem:[#allocation7 + $0x17c] sm:$0xf]
    %v577 = vld [vmem:[#allocation7 + $0x180] sm:$0xf]
    %v578 = vld [vmem:[#allocation7 + $0x184] sm:$0xf]
    %v579 = vld [vmem:[#allocation7 + $0x188] sm:$0xf]
    %v580 = vld [vmem:[#allocation7 + $0x18c] sm:$0xf]
    %v581 = vld [vmem:[#allocation7 + $0x190] sm:$0xf]
    %v582 = vld [vmem:[#allocation7 + $0x194] sm:$0xf]
    %v583 = vld [vmem:[#allocation7 + $0x198] sm:$0xf]
    %v584 = vld [vmem:[#allocation7 + $0x19c] sm:$0xf]
    %v585 = vld [vmem:[#allocation7 + $0x1a0] sm:$0xf]
    %v586 = vld [vmem:[#allocation7 + $0x1a4] sm:$0xf]
    %v587 = vld [vmem:[#allocation7 + $0x1a8] sm:$0xf]
    %v588 = vld [vmem:[#allocation7 + $0x1ac] sm:$0xf]
    %v589 = vld [vmem:[#allocation7 + $0x1b0] sm:$0xf]
    %v590 = vld [vmem:[#allocation7 + $0x1b4] sm:$0xf]
    %v591 = vld [vmem:[#allocation7 + $0x1b8] sm:$0xf]
    %v592 = vld [vmem:[#allocation7 + $0x1bc] sm:$0xf]
    %v593 = vld [vmem:[#allocation7 + $0x1c0] sm:$0xf]
    %v594 = vld [vmem:[#allocation7 + $0x1c4] sm:$0xf]
    %v595 = vld [vmem:[#allocation7 + $0x1c8] sm:$0xf]
    %v596 = vld [vmem:[#allocation7 + $0x1cc] sm:$0xf]
    %v597 = vld [vmem:[#allocation7 + $0x1d0] sm:$0xf]
    %v598 = vld [vmem:[#allocation7 + $0x1d4] sm:$0xf]
    %v599 = vld [vmem:[#allocation7 + $0x1d8] sm:$0xf]
    %v600 = vld [vmem:[#allocation7 + $0x1dc] sm:$0xf]
    %v601 = vld [vmem:[#allocation7 + $0x1e0] sm:$0xf]
    %v602 = vld [vmem:[#allocation7 + $0x1e4] sm:$0xf]
    %v603 = vld [vmem:[#allocation7 + $0x1e8] sm:$0xf]
    %v604 = vld [vmem:[#allocation7 + $0x1ec] sm:$0xf]
    %v605 = vld [vmem:[#allocation7 + $0x1f0] sm:$0xf]
    %v606 = vld [vmem:[#allocation7 + $0x1f4] sm:$0xf]
    %v607 = vld [vmem:[#allocation7 + $0x1f8] sm:$0xf]
    %v608 = vld [vmem:[#allocation7 + $0x1fc] sm:$0xf]
    %v609 = vld [vmem:[#allocation7 + $0x200] sm:$0xf]
    %v610 = vld [vmem:[#allocation7 + $0x204] sm:$0xf]
    %v611 = vld [vmem:[#allocation7 + $0x208] sm:$0xf]
    %v612 = vld [vmem:[#allocation7 + $0x20c] sm:$0xf]
    %v613 = vld [vmem:[#allocation7 + $0x210] sm:$0xf]
    %v614 = vld [vmem:[#allocation7 + $0x214] sm:$0xf]
    %v615 = vld [vmem:[#allocation7 + $0x218] sm:$0xf]
    %v616 = vld [vmem:[#allocation7 + $0x21c] sm:$0xf]
    %v617 = vld [vmem:[#allocation7 + $0x220] sm:$0xf]
    %v618 = vld [vmem:[#allocation7 + $0x224] sm:$0xf]
    %v619 = vld [vmem:[#allocation7 + $0x228] sm:$0xf]
    %v620 = vld [vmem:[#allocation7 + $0x22c] sm:$0xf]
    %v621 = vld [vmem:[#allocation7 + $0x230] sm:$0xf]
    %v622 = vld [vmem:[#allocation7 + $0x234] sm:$0xf]
    %v623 = vld [vmem:[#allocation7 + $0x238] sm:$0xf]
    %v624 = vld [vmem:[#allocation7 + $0x23c] sm:$0xf]
    %v625 = vld [vmem:[#allocation7 + $0x240] sm:$0xf]
    %v626 = vld [vmem:[#allocation7 + $0x244] sm:$0xf]
    %v627 = vld [vmem:[#allocation7 + $0x248] sm:$0xf]
    %v628 = vld [vmem:[#allocation7 + $0x24c] sm:$0xf]
    %v629 = vld [vmem:[#allocation7 + $0x250] sm:$0xf]
    %v630 = vld [vmem:[#allocation7 + $0x254] sm:$0xf]
    %v631 = vld [vmem:[#allocation7 + $0x258] sm:$0xf]
    %v632 = vld [vmem:[#allocation7 + $0x25c] sm:$0xf]
    %v633 = vld [vmem:[#allocation7 + $0x260] sm:$0xf]
    %v634 = vld [vmem:[#allocation7 + $0x264] sm:$0xf]
    %v635 = vld [vmem:[#allocation7 + $0x268] sm:$0xf]
    %v636 = vld [vmem:[#allocation7 + $0x26c] sm:$0xf]
    %v637 = vld [vmem:[#allocation7 + $0x270] sm:$0xf]
    %v638 = vld [vmem:[#allocation7 + $0x274] sm:$0xf]
    %v639 = vld [vmem:[#allocation7 + $0x278] sm:$0xf]
    %v640 = vld [vmem:[#allocation7 + $0x27c] sm:$0xf]
    %v641 = vld [vmem:[#allocation7 + $0x280] sm:$0xf]
    %v642 = vld [vmem:[#allocation7 + $0x284] sm:$0xf]
    %v643 = vld [vmem:[#allocation7 + $0x288] sm:$0xf]
    %v644 = vld [vmem:[#allocation7 + $0x28c] sm:$0xf]
    %v645 = vld [vmem:[#allocation7 + $0x290] sm:$0xf]
    %v646 = vld [vmem:[#allocation7 + $0x294] sm:$0xf]
    %v647 = vld [vmem:[#allocation7 + $0x298] sm:$0xf]
    %v648 = vld [vmem:[#allocation7 + $0x29c] sm:$0xf]
    %v649 = vld [vmem:[#allocation7 + $0x2a0] sm:$0xf]
    %v650 = vld [vmem:[#allocation7 + $0x2a4] sm:$0xf]
    %v651 = vld [vmem:[#allocation7 + $0x2a8] sm:$0xf]
    %v652 = vld [vmem:[#allocation7 + $0x2ac] sm:$0xf]
    %v653 = vld [vmem:[#allocation7 + $0x2b0] sm:$0xf]
    %v654 = vld [vmem:[#allocation7 + $0x2b4] sm:$0xf]
    %v655 = vld [vmem:[#allocation7 + $0x2b8] sm:$0xf]
    %v656 = vld [vmem:[#allocation7 + $0x2bc] sm:$0xf]
    %v657 = vld [vmem:[#allocation7 + $0x2c0] sm:$0xf]
    %v658 = vld [vmem:[#allocation7 + $0x2c4] sm:$0xf]
    %v659 = vld [vmem:[#allocation7 + $0x2c8] sm:$0xf]
    %v660 = vld [vmem:[#allocation7 + $0x2cc] sm:$0xf]
    %v661 = vld [vmem:[#allocation7 + $0x2d0] sm:$0xf]
    %v662 = vld [vmem:[#allocation7 + $0x2d4] sm:$0xf]
    %v663 = vld [vmem:[#allocation7 + $0x2d8] sm:$0xf]
    %v664 = vld [vmem:[#allocation7 + $0x2dc] sm:$0xf]
    %v665 = vld [vmem:[#allocation7 + $0x2e0] sm:$0xf]
    %v666 = vld [vmem:[#allocation7 + $0x2e4] sm:$0xf]
    %v667 = vld [vmem:[#allocation7 + $0x2e8] sm:$0xf]
    %v668 = vld [vmem:[#allocation7 + $0x2ec] sm:$0xf]
    %v669 = vld [vmem:[#allocation7 + $0x2f0] sm:$0xf]
    %v670 = vld [vmem:[#allocation7 + $0x2f4] sm:$0xf]
    %v671 = vld [vmem:[#allocation7 + $0x2f8] sm:$0xf]
    %v672 = vld [vmem:[#allocation7 + $0x2fc] sm:$0xf]
    %v673 = vld [vmem:[#allocation7 + $0x300] sm:$0xf]
    %v674 = vld [vmem:[#allocation7 + $0x304] sm:$0xf]
    %v675 = vld [vmem:[#allocation7 + $0x308] sm:$0xf]
    %v676 = vld [vmem:[#allocation7 + $0x30c] sm:$0xf]
    %v677 = vld [vmem:[#allocation7 + $0x310] sm:$0xf]
    %v678 = vld [vmem:[#allocation7 + $0x314] sm:$0xf]
    %v679 = vld [vmem:[#allocation7 + $0x318] sm:$0xf]
    %v680 = vld [vmem:[#allocation7 + $0x31c] sm:$0xf]
    %v681 = vld [vmem:[#allocation7 + $0x320] sm:$0xf]
    %v682 = vld [vmem:[#allocation7 + $0x324] sm:$0xf]
    %v683 = vld [vmem:[#allocation7 + $0x328] sm:$0xf]
    %v684 = vld [vmem:[#allocation7 + $0x32c] sm:$0xf]
    %v685 = vld [vmem:[#allocation7 + $0x330] sm:$0xf]
    %v686 = vld [vmem:[#allocation7 + $0x334] sm:$0xf]
    %v687 = vld [vmem:[#allocation7 + $0x338] sm:$0xf]
    %v688 = vld [vmem:[#allocation7 + $0x33c] sm:$0xf]
    %v689 = vld [vmem:[#allocation7 + $0x340] sm:$0xf]
    %v690 = vld [vmem:[#allocation7 + $0x344] sm:$0xf]
    %v691 = vld [vmem:[#allocation7 + $0x348] sm:$0xf]
    %v692 = vld [vmem:[#allocation7 + $0x34c] sm:$0xf]
    %v693 = vld [vmem:[#allocation7 + $0x350] sm:$0xf]
    %v694 = vld [vmem:[#allocation7 + $0x354] sm:$0xf]
    %v695 = vld [vmem:[#allocation7 + $0x358] sm:$0xf]
    %v696 = vld [vmem:[#allocation7 + $0x35c] sm:$0xf]
    %v697 = vld [vmem:[#allocation7 + $0x360] sm:$0xf]
    %v698 = vld [vmem:[#allocation7 + $0x364] sm:$0xf]
    %v699 = vld [vmem:[#allocation7 + $0x368] sm:$0xf]
    %v700 = vld [vmem:[#allocation7 + $0x36c] sm:$0xf]
    %v701 = vld [vmem:[#allocation7 + $0x370] sm:$0xf]
    %v702 = vld [vmem:[#allocation7 + $0x374] sm:$0xf]
    %v703 = vld [vmem:[#allocation7 + $0x378] sm:$0xf]
    %v704 = vld [vmem:[#allocation7 + $0x37c] sm:$0xf]
    %v705 = vld [vmem:[#allocation7 + $0x380] sm:$0xf]
    %v706 = vld [vmem:[#allocation7 + $0x384] sm:$0xf]
    %v707 = vld [vmem:[#allocation7 + $0x388] sm:$0xf]
    %v708 = vld [vmem:[#allocation7 + $0x38c] sm:$0xf]
    %v709 = vld [vmem:[#allocation7 + $0x390] sm:$0xf]
    %v710 = vld [vmem:[#allocation7 + $0x394] sm:$0xf]
    %v711 = vld [vmem:[#allocation7 + $0x398] sm:$0xf]
    %v712 = vld [vmem:[#allocation7 + $0x39c] sm:$0xf]
    %v713 = vld [vmem:[#allocation7 + $0x3a0] sm:$0xf]
    %v714 = vld [vmem:[#allocation7 + $0x3a4] sm:$0xf]
    %v715 = vld [vmem:[#allocation7 + $0x3a8] sm:$0xf]
    %v716 = vld [vmem:[#allocation7 + $0x3ac] sm:$0xf]
    %v717 = vld [vmem:[#allocation7 + $0x3b0] sm:$0xf]
    %v718 = vld [vmem:[#allocation7 + $0x3b4] sm:$0xf]
    %v719 = vld [vmem:[#allocation7 + $0x3b8] sm:$0xf]
    %v720 = vld [vmem:[#allocation7 + $0x3bc] sm:$0xf]
    %v721 = vld [vmem:[#allocation7 + $0x3c0] sm:$0xf]
    %v722 = vld [vmem:[#allocation7 + $0x3c4] sm:$0xf]
    %v723 = vld [vmem:[#allocation7 + $0x3c8] sm:$0xf]
    %v724 = vld [vmem:[#allocation7 + $0x3cc] sm:$0xf]
    %v725 = vld [vmem:[#allocation7 + $0x3d0] sm:$0xf]
    %v726 = vld [vmem:[#allocation7 + $0x3d4] sm:$0xf]
    %v727 = vld [vmem:[#allocation7 + $0x3d8] sm:$0xf]
    %v728 = vld [vmem:[#allocation7 + $0x3dc] sm:$0xf]
    %v729 = vld [vmem:[#allocation7 + $0x3e0] sm:$0xf]
    %v730 = vld [vmem:[#allocation7 + $0x3e4] sm:$0xf]
    %v731 = vld [vmem:[#allocation7 + $0x3e8] sm:$0xf]
    %v732 = vld [vmem:[#allocation7 + $0x3ec] sm:$0xf]
    %v733 = vld [vmem:[#allocation7 + $0x3f0] sm:$0xf]
    %v734 = vld [vmem:[#allocation7 + $0x3f4] sm:$0xf]
    %v735 = vld [vmem:[#allocation7 + $0x3f8] sm:$0xf]
    %v736 = vld [vmem:[#allocation7 + $0x3fc] sm:$0xf]
    %v993 = vunpack.c.l.b16 %v225
    %v994 = vunpack.c.l.b16 %v226
    %v995 = vunpack.c.l.b16 %v227
    %v996 = vunpack.c.l.b16 %v228
    %v997 = vunpack.c.l.b16 %v229
    %v998 = vunpack.c.l.b16 %v230
    %v999 = vunpack.c.l.b16 %v231
    %v1000 = vunpack.c.l.b16 %v232
    %v1001 = vunpack.c.l.b16 %v233
    %v1002 = vunpack.c.l.b16 %v234
    %v1003 = vunpack.c.l.b16 %v235
    %v1004 = vunpack.c.l.b16 %v236
    %v1005 = vunpack.c.l.b16 %v237
    %v1006 = vunpack.c.l.b16 %v238
    %v1007 = vunpack.c.l.b16 %v239
    %v1008 = vunpack.c.l.b16 %v240
    %v1009 = vunpack.c.l.b16 %v241
    %v1010 = vunpack.c.l.b16 %v242
    %v1011 = vunpack.c.l.b16 %v243
    %v1012 = vunpack.c.l.b16 %v244
    %v1013 = vunpack.c.l.b16 %v245
    %v1014 = vunpack.c.l.b16 %v246
    %v1015 = vunpack.c.l.b16 %v247
    %v1016 = vunpack.c.l.b16 %v248
    %v1017 = vunpack.c.l.b16 %v249
    %v1018 = vunpack.c.l.b16 %v250
    %v1019 = vunpack.c.l.b16 %v251
    %v1020 = vunpack.c.l.b16 %v252
    %v1021 = vunpack.c.l.b16 %v253
    %v1022 = vunpack.c.l.b16 %v254
    %v1023 = vunpack.c.l.b16 %v255
    %v1024 = vunpack.c.l.b16 %v256
    %v1025 = vunpack.c.l.b16 %v257
    %v1026 = vunpack.c.l.b16 %v258
    %v1027 = vunpack.c.l.b16 %v259
    %v1028 = vunpack.c.l.b16 %v260
    %v1029 = vunpack.c.l.b16 %v261
    %v1030 = vunpack.c.l.b16 %v262
    %v1031 = vunpack.c.l.b16 %v263
    %v1032 = vunpack.c.l.b16 %v264
    %v1033 = vunpack.c.l.b16 %v265
    %v1034 = vunpack.c.l.b16 %v266
    %v1035 = vunpack.c.l.b16 %v267
    %v1036 = vunpack.c.l.b16 %v268
    %v1037 = vunpack.c.l.b16 %v269
    %v1038 = vunpack.c.l.b16 %v270
    %v1039 = vunpack.c.l.b16 %v271
    %v1040 = vunpack.c.l.b16 %v272
    %v1041 = vunpack.c.l.b16 %v273
    %v1042 = vunpack.c.l.b16 %v274
    %v1043 = vunpack.c.l.b16 %v275
    %v1044 = vunpack.c.l.b16 %v276
    %v1045 = vunpack.c.l.b16 %v277
    %v1046 = vunpack.c.l.b16 %v278
    %v1047 = vunpack.c.l.b16 %v279
    %v1048 = vunpack.c.l.b16 %v280
    %v1049 = vunpack.c.l.b16 %v281
    %v1050 = vunpack.c.l.b16 %v282
    %v1051 = vunpack.c.l.b16 %v283
    %v1052 = vunpack.c.l.b16 %v284
    %v1053 = vunpack.c.l.b16 %v285
    %v1054 = vunpack.c.l.b16 %v286
    %v1055 = vunpack.c.l.b16 %v287
    %v1056 = vunpack.c.l.b16 %v288
    %v1057 = vunpack.c.l.b16 %v289
    %v1058 = vunpack.c.l.b16 %v290
    %v1059 = vunpack.c.l.b16 %v291
    %v1060 = vunpack.c.l.b16 %v292
    %v1061 = vunpack.c.l.b16 %v293
    %v1062 = vunpack.c.l.b16 %v294
    %v1063 = vunpack.c.l.b16 %v295
    %v1064 = vunpack.c.l.b16 %v296
    %v1065 = vunpack.c.l.b16 %v297
    %v1066 = vunpack.c.l.b16 %v298
    %v1067 = vunpack.c.l.b16 %v299
    %v1068 = vunpack.c.l.b16 %v300
    %v1069 = vunpack.c.l.b16 %v301
    %v1070 = vunpack.c.l.b16 %v302
    %v1071 = vunpack.c.l.b16 %v303
    %v1072 = vunpack.c.l.b16 %v304
    %v1073 = vunpack.c.l.b16 %v305
    %v1074 = vunpack.c.l.b16 %v306
    %v1075 = vunpack.c.l.b16 %v307
    %v1076 = vunpack.c.l.b16 %v308
    %v1077 = vunpack.c.l.b16 %v309
    %v1078 = vunpack.c.l.b16 %v310
    %v1079 = vunpack.c.l.b16 %v311
    %v1080 = vunpack.c.l.b16 %v312
    %v1081 = vunpack.c.l.b16 %v313
    %v1082 = vunpack.c.l.b16 %v314
    %v1083 = vunpack.c.l.b16 %v315
    %v1084 = vunpack.c.l.b16 %v316
    %v1085 = vunpack.c.l.b16 %v317
    %v1086 = vunpack.c.l.b16 %v318
    %v1087 = vunpack.c.l.b16 %v319
    %v1088 = vunpack.c.l.b16 %v320
    %v1089 = vunpack.c.l.b16 %v321
    %v1090 = vunpack.c.l.b16 %v322
    %v1091 = vunpack.c.l.b16 %v323
    %v1092 = vunpack.c.l.b16 %v324
    %v1093 = vunpack.c.l.b16 %v325
    %v1094 = vunpack.c.l.b16 %v326
    %v1095 = vunpack.c.l.b16 %v327
    %v1096 = vunpack.c.l.b16 %v328
    %v1097 = vunpack.c.l.b16 %v329
    %v1098 = vunpack.c.l.b16 %v330
    %v1099 = vunpack.c.l.b16 %v331
    %v1100 = vunpack.c.l.b16 %v332
    %v1101 = vunpack.c.l.b16 %v333
    %v1102 = vunpack.c.l.b16 %v334
    %v1103 = vunpack.c.l.b16 %v335
    %v1104 = vunpack.c.l.b16 %v336
    %v1105 = vunpack.c.l.b16 %v337
    %v1106 = vunpack.c.l.b16 %v338
    %v1107 = vunpack.c.l.b16 %v339
    %v1108 = vunpack.c.l.b16 %v340
    %v1109 = vunpack.c.l.b16 %v341
    %v1110 = vunpack.c.l.b16 %v342
    %v1111 = vunpack.c.l.b16 %v343
    %v1112 = vunpack.c.l.b16 %v344
    %v1113 = vunpack.c.l.b16 %v345
    %v1114 = vunpack.c.l.b16 %v346
    %v1115 = vunpack.c.l.b16 %v347
    %v1116 = vunpack.c.l.b16 %v348
    %v1117 = vunpack.c.l.b16 %v349
    %v1118 = vunpack.c.l.b16 %v350
    %v1119 = vunpack.c.l.b16 %v351
    %v1120 = vunpack.c.l.b16 %v352
    %v1121 = vunpack.c.l.b16 %v353
    %v1122 = vunpack.c.l.b16 %v354
    %v1123 = vunpack.c.l.b16 %v355
    %v1124 = vunpack.c.l.b16 %v356
    %v1125 = vunpack.c.l.b16 %v357
    %v1126 = vunpack.c.l.b16 %v358
    %v1127 = vunpack.c.l.b16 %v359
    %v1128 = vunpack.c.l.b16 %v360
    %v1129 = vunpack.c.l.b16 %v361
    %v1130 = vunpack.c.l.b16 %v362
    %v1131 = vunpack.c.l.b16 %v363
    %v1132 = vunpack.c.l.b16 %v364
    %v1133 = vunpack.c.l.b16 %v365
    %v1134 = vunpack.c.l.b16 %v366
    %v1135 = vunpack.c.l.b16 %v367
    %v1136 = vunpack.c.l.b16 %v368
    %v1137 = vunpack.c.l.b16 %v369
    %v1138 = vunpack.c.l.b16 %v370
    %v1139 = vunpack.c.l.b16 %v371
    %v1140 = vunpack.c.l.b16 %v372
    %v1141 = vunpack.c.l.b16 %v373
    %v1142 = vunpack.c.l.b16 %v374
    %v1143 = vunpack.c.l.b16 %v375
    %v1144 = vunpack.c.l.b16 %v376
    %v1145 = vunpack.c.l.b16 %v377
    %v1146 = vunpack.c.l.b16 %v378
    %v1147 = vunpack.c.l.b16 %v379
    %v1148 = vunpack.c.l.b16 %v380
    %v1149 = vunpack.c.l.b16 %v381
    %v1150 = vunpack.c.l.b16 %v382
    %v1151 = vunpack.c.l.b16 %v383
    %v1152 = vunpack.c.l.b16 %v384
    %v1153 = vunpack.c.l.b16 %v385
    %v1154 = vunpack.c.l.b16 %v386
    %v1155 = vunpack.c.l.b16 %v387
    %v1156 = vunpack.c.l.b16 %v388
    %v1157 = vunpack.c.l.b16 %v389
    %v1158 = vunpack.c.l.b16 %v390
    %v1159 = vunpack.c.l.b16 %v391
    %v1160 = vunpack.c.l.b16 %v392
    %v1161 = vunpack.c.l.b16 %v393
    %v1162 = vunpack.c.l.b16 %v394
    %v1163 = vunpack.c.l.b16 %v395
    %v1164 = vunpack.c.l.b16 %v396
    %v1165 = vunpack.c.l.b16 %v397
    %v1166 = vunpack.c.l.b16 %v398
    %v1167 = vunpack.c.l.b16 %v399
    %v1168 = vunpack.c.l.b16 %v400
    %v1169 = vunpack.c.l.b16 %v401
    %v1170 = vunpack.c.l.b16 %v402
    %v1171 = vunpack.c.l.b16 %v403
    %v1172 = vunpack.c.l.b16 %v404
    %v1173 = vunpack.c.l.b16 %v405
    %v1174 = vunpack.c.l.b16 %v406
    %v1175 = vunpack.c.l.b16 %v407
    %v1176 = vunpack.c.l.b16 %v408
    %v1177 = vunpack.c.l.b16 %v409
    %v1178 = vunpack.c.l.b16 %v410
    %v1179 = vunpack.c.l.b16 %v411
    %v1180 = vunpack.c.l.b16 %v412
    %v1181 = vunpack.c.l.b16 %v413
    %v1182 = vunpack.c.l.b16 %v414
    %v1183 = vunpack.c.l.b16 %v415
    %v1184 = vunpack.c.l.b16 %v416
    %v1185 = vunpack.c.l.b16 %v417
    %v1186 = vunpack.c.l.b16 %v418
    %v1187 = vunpack.c.l.b16 %v419
    %v1188 = vunpack.c.l.b16 %v420
    %v1189 = vunpack.c.l.b16 %v421
    %v1190 = vunpack.c.l.b16 %v422
    %v1191 = vunpack.c.l.b16 %v423
    %v1192 = vunpack.c.l.b16 %v424
    %v1193 = vunpack.c.l.b16 %v425
    %v1194 = vunpack.c.l.b16 %v426
    %v1195 = vunpack.c.l.b16 %v427
    %v1196 = vunpack.c.l.b16 %v428
    %v1197 = vunpack.c.l.b16 %v429
    %v1198 = vunpack.c.l.b16 %v430
    %v1199 = vunpack.c.l.b16 %v431
    %v1200 = vunpack.c.l.b16 %v432
    %v1201 = vunpack.c.l.b16 %v433
    %v1202 = vunpack.c.l.b16 %v434
    %v1203 = vunpack.c.l.b16 %v435
    %v1204 = vunpack.c.l.b16 %v436
    %v1205 = vunpack.c.l.b16 %v437
    %v1206 = vunpack.c.l.b16 %v438
    %v1207 = vunpack.c.l.b16 %v439
    %v1208 = vunpack.c.l.b16 %v440
    %v1209 = vunpack.c.l.b16 %v441
    %v1210 = vunpack.c.l.b16 %v442
    %v1211 = vunpack.c.l.b16 %v443
    %v1212 = vunpack.c.l.b16 %v444
    %v1213 = vunpack.c.l.b16 %v445
    %v1214 = vunpack.c.l.b16 %v446
    %v1215 = vunpack.c.l.b16 %v447
    %v1216 = vunpack.c.l.b16 %v448
    %v1217 = vunpack.c.l.b16 %v449
    %v1218 = vunpack.c.l.b16 %v450
    %v1219 = vunpack.c.l.b16 %v451
    %v1220 = vunpack.c.l.b16 %v452
    %v1221 = vunpack.c.l.b16 %v453
    %v1222 = vunpack.c.l.b16 %v454
    %v1223 = vunpack.c.l.b16 %v455
    %v1224 = vunpack.c.l.b16 %v456
    %v1225 = vunpack.c.l.b16 %v457
    %v1226 = vunpack.c.l.b16 %v458
    %v1227 = vunpack.c.l.b16 %v459
    %v1228 = vunpack.c.l.b16 %v460
    %v1229 = vunpack.c.l.b16 %v461
    %v1230 = vunpack.c.l.b16 %v462
    %v1231 = vunpack.c.l.b16 %v463
    %v1232 = vunpack.c.l.b16 %v464
    %v1233 = vunpack.c.l.b16 %v465
    %v1234 = vunpack.c.l.b16 %v466
    %v1235 = vunpack.c.l.b16 %v467
    %v1236 = vunpack.c.l.b16 %v468
    %v1237 = vunpack.c.l.b16 %v469
    %v1238 = vunpack.c.l.b16 %v470
    %v1239 = vunpack.c.l.b16 %v471
    %v1240 = vunpack.c.l.b16 %v472
    %v1241 = vunpack.c.l.b16 %v473
    %v1242 = vunpack.c.l.b16 %v474
    %v1243 = vunpack.c.l.b16 %v475
    %v1244 = vunpack.c.l.b16 %v476
    %v1245 = vunpack.c.l.b16 %v477
    %v1246 = vunpack.c.l.b16 %v478
    %v1247 = vunpack.c.l.b16 %v479
    %v1248 = vunpack.c.l.b16 %v480
    %v1249 = vpack.c.b16 %v994, %v993
    %v1250 = vpack.c.b16 %v996, %v995
    %v1251 = vpack.c.b16 %v998, %v997
    %v1252 = vpack.c.b16 %v1000, %v999
    %v1253 = vpack.c.b16 %v1002, %v1001
    %v1254 = vpack.c.b16 %v1004, %v1003
    %v1255 = vpack.c.b16 %v1006, %v1005
    %v1256 = vpack.c.b16 %v1008, %v1007
    %v1257 = vpack.c.b16 %v1010, %v1009
    %v1258 = vpack.c.b16 %v1012, %v1011
    %v1259 = vpack.c.b16 %v1014, %v1013
    %v1260 = vpack.c.b16 %v1016, %v1015
    %v1261 = vpack.c.b16 %v1018, %v1017
    %v1262 = vpack.c.b16 %v1020, %v1019
    %v1263 = vpack.c.b16 %v1022, %v1021
    %v1264 = vpack.c.b16 %v1024, %v1023
    %v1265 = vpack.c.b16 %v1026, %v1025
    %v1266 = vpack.c.b16 %v1028, %v1027
    %v1267 = vpack.c.b16 %v1030, %v1029
    %v1268 = vpack.c.b16 %v1032, %v1031
    %v1269 = vpack.c.b16 %v1034, %v1033
    %v1270 = vpack.c.b16 %v1036, %v1035
    %v1271 = vpack.c.b16 %v1038, %v1037
    %v1272 = vpack.c.b16 %v1040, %v1039
    %v1273 = vpack.c.b16 %v1042, %v1041
    %v1274 = vpack.c.b16 %v1044, %v1043
    %v1275 = vpack.c.b16 %v1046, %v1045
    %v1276 = vpack.c.b16 %v1048, %v1047
    %v1277 = vpack.c.b16 %v1050, %v1049
    %v1278 = vpack.c.b16 %v1052, %v1051
    %v1279 = vpack.c.b16 %v1054, %v1053
    %v1280 = vpack.c.b16 %v1056, %v1055
    %v1281 = vpack.c.b16 %v1058, %v1057
    %v1282 = vpack.c.b16 %v1060, %v1059
    %v1283 = vpack.c.b16 %v1062, %v1061
    %v1284 = vpack.c.b16 %v1064, %v1063
    %v1285 = vpack.c.b16 %v1066, %v1065
    %v1286 = vpack.c.b16 %v1068, %v1067
    %v1287 = vpack.c.b16 %v1070, %v1069
    %v1288 = vpack.c.b16 %v1072, %v1071
    %v1289 = vpack.c.b16 %v1074, %v1073
    %v1290 = vpack.c.b16 %v1076, %v1075
    %v1291 = vpack.c.b16 %v1078, %v1077
    %v1292 = vpack.c.b16 %v1080, %v1079
    %v1293 = vpack.c.b16 %v1082, %v1081
    %v1294 = vpack.c.b16 %v1084, %v1083
    %v1295 = vpack.c.b16 %v1086, %v1085
    %v1296 = vpack.c.b16 %v1088, %v1087
    %v1297 = vpack.c.b16 %v1090, %v1089
    %v1298 = vpack.c.b16 %v1092, %v1091
    %v1299 = vpack.c.b16 %v1094, %v1093
    %v1300 = vpack.c.b16 %v1096, %v1095
    %v1301 = vpack.c.b16 %v1098, %v1097
    %v1302 = vpack.c.b16 %v1100, %v1099
    %v1303 = vpack.c.b16 %v1102, %v1101
    %v1304 = vpack.c.b16 %v1104, %v1103
    %v1305 = vpack.c.b16 %v1106, %v1105
    %v1306 = vpack.c.b16 %v1108, %v1107
    %v1307 = vpack.c.b16 %v1110, %v1109
    %v1308 = vpack.c.b16 %v1112, %v1111
    %v1309 = vpack.c.b16 %v1114, %v1113
    %v1310 = vpack.c.b16 %v1116, %v1115
    %v1311 = vpack.c.b16 %v1118, %v1117
    %v1312 = vpack.c.b16 %v1120, %v1119
    %v1313 = vpack.c.b16 %v1122, %v1121
    %v1314 = vpack.c.b16 %v1124, %v1123
    %v1315 = vpack.c.b16 %v1126, %v1125
    %v1316 = vpack.c.b16 %v1128, %v1127
    %v1317 = vpack.c.b16 %v1130, %v1129
    %v1318 = vpack.c.b16 %v1132, %v1131
    %v1319 = vpack.c.b16 %v1134, %v1133
    %v1320 = vpack.c.b16 %v1136, %v1135
    %v1321 = vpack.c.b16 %v1138, %v1137
    %v1322 = vpack.c.b16 %v1140, %v1139
    %v1323 = vpack.c.b16 %v1142, %v1141
    %v1324 = vpack.c.b16 %v1144, %v1143
    %v1325 = vpack.c.b16 %v1146, %v1145
    %v1326 = vpack.c.b16 %v1148, %v1147
    %v1327 = vpack.c.b16 %v1150, %v1149
    %v1328 = vpack.c.b16 %v1152, %v1151
    %v1329 = vpack.c.b16 %v1154, %v1153
    %v1330 = vpack.c.b16 %v1156, %v1155
    %v1331 = vpack.c.b16 %v1158, %v1157
    %v1332 = vpack.c.b16 %v1160, %v1159
    %v1333 = vpack.c.b16 %v1162, %v1161
    %v1334 = vpack.c.b16 %v1164, %v1163
    %v1335 = vpack.c.b16 %v1166, %v1165
    %v1336 = vpack.c.b16 %v1168, %v1167
    %v1337 = vpack.c.b16 %v1170, %v1169
    %v1338 = vpack.c.b16 %v1172, %v1171
    %v1339 = vpack.c.b16 %v1174, %v1173
    %v1340 = vpack.c.b16 %v1176, %v1175
    %v1341 = vpack.c.b16 %v1178, %v1177
    %v1342 = vpack.c.b16 %v1180, %v1179
    %v1343 = vpack.c.b16 %v1182, %v1181
    %v1344 = vpack.c.b16 %v1184, %v1183
    %v1345 = vpack.c.b16 %v1186, %v1185
    %v1346 = vpack.c.b16 %v1188, %v1187
    %v1347 = vpack.c.b16 %v1190, %v1189
    %v1348 = vpack.c.b16 %v1192, %v1191
    %v1349 = vpack.c.b16 %v1194, %v1193
    %v1350 = vpack.c.b16 %v1196, %v1195
    %v1351 = vpack.c.b16 %v1198, %v1197
    %v1352 = vpack.c.b16 %v1200, %v1199
    %v1353 = vpack.c.b16 %v1202, %v1201
    %v1354 = vpack.c.b16 %v1204, %v1203
    %v1355 = vpack.c.b16 %v1206, %v1205
    %v1356 = vpack.c.b16 %v1208, %v1207
    %v1357 = vpack.c.b16 %v1210, %v1209
    %v1358 = vpack.c.b16 %v1212, %v1211
    %v1359 = vpack.c.b16 %v1214, %v1213
    %v1360 = vpack.c.b16 %v1216, %v1215
    %v1361 = vpack.c.b16 %v1218, %v1217
    %v1362 = vpack.c.b16 %v1220, %v1219
    %v1363 = vpack.c.b16 %v1222, %v1221
    %v1364 = vpack.c.b16 %v1224, %v1223
    %v1365 = vpack.c.b16 %v1226, %v1225
    %v1366 = vpack.c.b16 %v1228, %v1227
    %v1367 = vpack.c.b16 %v1230, %v1229
    %v1368 = vpack.c.b16 %v1232, %v1231
    %v1369 = vpack.c.b16 %v1234, %v1233
    %v1370 = vpack.c.b16 %v1236, %v1235
    %v1371 = vpack.c.b16 %v1238, %v1237
    %v1372 = vpack.c.b16 %v1240, %v1239
    %v1373 = vpack.c.b16 %v1242, %v1241
    %v1374 = vpack.c.b16 %v1244, %v1243
    %v1375 = vpack.c.b16 %v1246, %v1245
    %v1376 = vpack.c.b16 %v1248, %v1247
    %1505 = vmatpush.bf16.msra.mxu0 %v1256
    %1506 = vmatpush.bf16.msra.mxu0 %v1255
    %1507 = vmatpush.bf16.msra.mxu0 %v1254
    %1508 = vmatpush.bf16.msra.mxu0 %v1253
    %1509 = vmatpush.bf16.msra.mxu0 %v1252
    %1510 = vmatpush.bf16.msra.mxu0 %v1251
    %1511 = vmatpush.bf16.msra.mxu0 %v1250
    %1512 = vmatpush.bf16.msra.mxu0 %v1249
    %1513 = vmatmul.bf16.gmra.mxu0 %v209
    %v1514 = vpop.f32.mrf.mxu0
    %v1515 = vadd.f32 0.0, %v1514
    %v1516 = vpop.f32.mrf.mxu0
    %1517 = vdwg.mxu0
    %1518 = vmatpush.bf16.msra.mxu0 %v1264
    %1519 = vmatpush.bf16.msra.mxu0 %v1263
    %1520 = vmatpush.bf16.msra.mxu0 %v1262
    %1521 = vmatpush.bf16.msra.mxu0 %v1261
    %1522 = vmatpush.bf16.msra.mxu0 %v1260
    %1523 = vmatpush.bf16.msra.mxu0 %v1259
    %1524 = vmatpush.bf16.msra.mxu0 %v1258
    %1525 = vmatpush.bf16.msra.mxu0 %v1257
    %1526 = vmatmul.bf16.gmra.mxu0 %v210
    %v1527 = vpop.f32.mrf.mxu0
    %v1528 = vadd.f32 %v1515, %v1527
    %v1529 = vpop.f32.mrf.mxu0
    %1530 = vdwg.mxu0
    %1531 = vmatpush.bf16.msra.mxu0 %v1272
    %1532 = vmatpush.bf16.msra.mxu0 %v1271
    %1533 = vmatpush.bf16.msra.mxu0 %v1270
    %1534 = vmatpush.bf16.msra.mxu0 %v1269
    %1535 = vmatpush.bf16.msra.mxu0 %v1268
    %1536 = vmatpush.bf16.msra.mxu0 %v1267
    %1537 = vmatpush.bf16.msra.mxu0 %v1266
    %1538 = vmatpush.bf16.msra.mxu0 %v1265
    %1539 = vmatmul.bf16.gmra.mxu0 %v211
    %v1540 = vpop.f32.mrf.mxu0
    %v1541 = vadd.f32 %v1528, %v1540
    %v1542 = vpop.f32.mrf.mxu0
    %1543 = vdwg.mxu0
    %1544 = vmatpush.bf16.msra.mxu0 %v1280
    %1545 = vmatpush.bf16.msra.mxu0 %v1279
    %1546 = vmatpush.bf16.msra.mxu0 %v1278
    %1547 = vmatpush.bf16.msra.mxu0 %v1277
    %1548 = vmatpush.bf16.msra.mxu0 %v1276
    %1549 = vmatpush.bf16.msra.mxu0 %v1275
    %1550 = vmatpush.bf16.msra.mxu0 %v1274
    %1551 = vmatpush.bf16.msra.mxu0 %v1273
    %1552 = vmatmul.bf16.gmra.mxu0 %v212
    %v1553 = vpop.f32.mrf.mxu0
    %v1554 = vadd.f32 %v1541, %v1553
    %v1555 = vpop.f32.mrf.mxu0
    %1556 = vdwg.mxu0
    %1557 = vmatpush.bf16.msra.mxu0 %v1288
    %1558 = vmatpush.bf16.msra.mxu0 %v1287
    %1559 = vmatpush.bf16.msra.mxu0 %v1286
    %1560 = vmatpush.bf16.msra.mxu0 %v1285
    %1561 = vmatpush.bf16.msra.mxu0 %v1284
    %1562 = vmatpush.bf16.msra.mxu0 %v1283
    %1563 = vmatpush.bf16.msra.mxu0 %v1282
    %1564 = vmatpush.bf16.msra.mxu0 %v1281
    %1565 = vmatmul.bf16.gmra.mxu0 %v213
    %v1566 = vpop.f32.mrf.mxu0
    %v1567 = vadd.f32 %v1554, %v1566
    %v1568 = vpop.f32.mrf.mxu0
    %1569 = vdwg.mxu0
    %1570 = vmatpush.bf16.msra.mxu0 %v1296
    %1571 = vmatpush.bf16.msra.mxu0 %v1295
    %1572 = vmatpush.bf16.msra.mxu0 %v1294
    %1573 = vmatpush.bf16.msra.mxu0 %v1293
    %1574 = vmatpush.bf16.msra.mxu0 %v1292
    %1575 = vmatpush.bf16.msra.mxu0 %v1291
    %1576 = vmatpush.bf16.msra.mxu0 %v1290
    %1577 = vmatpush.bf16.msra.mxu0 %v1289
    %1578 = vmatmul.bf16.gmra.mxu0 %v214
    %v1579 = vpop.f32.mrf.mxu0
    %v1580 = vadd.f32 %v1567, %v1579
    %v1581 = vpop.f32.mrf.mxu0
    %1582 = vdwg.mxu0
    %1583 = vmatpush.bf16.msra.mxu0 %v1304
    %1584 = vmatpush.bf16.msra.mxu0 %v1303
    %1585 = vmatpush.bf16.msra.mxu0 %v1302
    %1586 = vmatpush.bf16.msra.mxu0 %v1301
    %1587 = vmatpush.bf16.msra.mxu0 %v1300
    %1588 = vmatpush.bf16.msra.mxu0 %v1299
    %1589 = vmatpush.bf16.msra.mxu0 %v1298
    %1590 = vmatpush.bf16.msra.mxu0 %v1297
    %1591 = vmatmul.bf16.gmra.mxu0 %v215
    %v1592 = vpop.f32.mrf.mxu0
    %v1593 = vadd.f32 %v1580, %v1592
    %v1594 = vpop.f32.mrf.mxu0
    %1595 = vdwg.mxu0
    %1596 = vmatpush.bf16.msra.mxu0 %v1312
    %1597 = vmatpush.bf16.msra.mxu0 %v1311
    %1598 = vmatpush.bf16.msra.mxu0 %v1310
    %1599 = vmatpush.bf16.msra.mxu0 %v1309
    %1600 = vmatpush.bf16.msra.mxu0 %v1308
    %1601 = vmatpush.bf16.msra.mxu0 %v1307
    %1602 = vmatpush.bf16.msra.mxu0 %v1306
    %1603 = vmatpush.bf16.msra.mxu0 %v1305
    %1604 = vmatmul.bf16.gmra.mxu0 %v216
    %v1605 = vpop.f32.mrf.mxu0
    %v1606 = vadd.f32 %v1593, %v1605
    %v1607 = vpop.f32.mrf.mxu0
    %1608 = vdwg.mxu0
    %1609 = vmatpush.bf16.msra.mxu0 %v1320
    %1610 = vmatpush.bf16.msra.mxu0 %v1319
    %1611 = vmatpush.bf16.msra.mxu0 %v1318
    %1612 = vmatpush.bf16.msra.mxu0 %v1317
    %1613 = vmatpush.bf16.msra.mxu0 %v1316
    %1614 = vmatpush.bf16.msra.mxu0 %v1315
    %1615 = vmatpush.bf16.msra.mxu0 %v1314
    %1616 = vmatpush.bf16.msra.mxu0 %v1313
    %1617 = vmatmul.bf16.gmra.mxu0 %v217
    %v1618 = vpop.f32.mrf.mxu0
    %v1619 = vadd.f32 %v1606, %v1618
    %v1620 = vpop.f32.mrf.mxu0
    %1621 = vdwg.mxu0
    %1622 = vmatpush.bf16.msra.mxu0 %v1328
    %1623 = vmatpush.bf16.msra.mxu0 %v1327
    %1624 = vmatpush.bf16.msra.mxu0 %v1326
    %1625 = vmatpush.bf16.msra.mxu0 %v1325
    %1626 = vmatpush.bf16.msra.mxu0 %v1324
    %1627 = vmatpush.bf16.msra.mxu0 %v1323
    %1628 = vmatpush.bf16.msra.mxu0 %v1322
    %1629 = vmatpush.bf16.msra.mxu0 %v1321
    %1630 = vmatmul.bf16.gmra.mxu0 %v218
    %v1631 = vpop.f32.mrf.mxu0
    %v1632 = vadd.f32 %v1619, %v1631
    %v1633 = vpop.f32.mrf.mxu0
    %1634 = vdwg.mxu0
    %1635 = vmatpush.bf16.msra.mxu0 %v1336
    %1636 = vmatpush.bf16.msra.mxu0 %v1335
    %1637 = vmatpush.bf16.msra.mxu0 %v1334
    %1638 = vmatpush.bf16.msra.mxu0 %v1333
    %1639 = vmatpush.bf16.msra.mxu0 %v1332
    %1640 = vmatpush.bf16.msra.mxu0 %v1331
    %1641 = vmatpush.bf16.msra.mxu0 %v1330
    %1642 = vmatpush.bf16.msra.mxu0 %v1329
    %1643 = vmatmul.bf16.gmra.mxu0 %v219
    %v1644 = vpop.f32.mrf.mxu0
    %v1645 = vadd.f32 %v1632, %v1644
    %v1646 = vpop.f32.mrf.mxu0
    %1647 = vdwg.mxu0
    %1648 = vmatpush.bf16.msra.mxu0 %v1344
    %1649 = vmatpush.bf16.msra.mxu0 %v1343
    %1650 = vmatpush.bf16.msra.mxu0 %v1342
    %1651 = vmatpush.bf16.msra.mxu0 %v1341
    %1652 = vmatpush.bf16.msra.mxu0 %v1340
    %1653 = vmatpush.bf16.msra.mxu0 %v1339
    %1654 = vmatpush.bf16.msra.mxu0 %v1338
    %1655 = vmatpush.bf16.msra.mxu0 %v1337
    %1656 = vmatmul.bf16.gmra.mxu0 %v220
    %v1657 = vpop.f32.mrf.mxu0
    %v1658 = vadd.f32 %v1645, %v1657
    %v1659 = vpop.f32.mrf.mxu0
    %1660 = vdwg.mxu0
    %1661 = vmatpush.bf16.msra.mxu0 %v1352
    %1662 = vmatpush.bf16.msra.mxu0 %v1351
    %1663 = vmatpush.bf16.msra.mxu0 %v1350
    %1664 = vmatpush.bf16.msra.mxu0 %v1349
    %1665 = vmatpush.bf16.msra.mxu0 %v1348
    %1666 = vmatpush.bf16.msra.mxu0 %v1347
    %1667 = vmatpush.bf16.msra.mxu0 %v1346
    %1668 = vmatpush.bf16.msra.mxu0 %v1345
    %1669 = vmatmul.bf16.gmra.mxu0 %v221
    %v1670 = vpop.f32.mrf.mxu0
    %v1671 = vadd.f32 %v1658, %v1670
    %v1672 = vpop.f32.mrf.mxu0
    %1673 = vdwg.mxu0
    %1674 = vmatpush.bf16.msra.mxu0 %v1360
    %1675 = vmatpush.bf16.msra.mxu0 %v1359
    %1676 = vmatpush.bf16.msra.mxu0 %v1358
    %1677 = vmatpush.bf16.msra.mxu0 %v1357
    %1678 = vmatpush.bf16.msra.mxu0 %v1356
    %1679 = vmatpush.bf16.msra.mxu0 %v1355
    %1680 = vmatpush.bf16.msra.mxu0 %v1354
    %1681 = vmatpush.bf16.msra.mxu0 %v1353
    %1682 = vmatmul.bf16.gmra.mxu0 %v222
    %v1683 = vpop.f32.mrf.mxu0
    %v1684 = vadd.f32 %v1671, %v1683
    %v1685 = vpop.f32.mrf.mxu0
    %1686 = vdwg.mxu0
    %1687 = vmatpush.bf16.msra.mxu0 %v1368
    %1688 = vmatpush.bf16.msra.mxu0 %v1367
    %1689 = vmatpush.bf16.msra.mxu0 %v1366
    %1690 = vmatpush.bf16.msra.mxu0 %v1365
    %1691 = vmatpush.bf16.msra.mxu0 %v1364
    %1692 = vmatpush.bf16.msra.mxu0 %v1363
    %1693 = vmatpush.bf16.msra.mxu0 %v1362
    %1694 = vmatpush.bf16.msra.mxu0 %v1361
    %1695 = vmatmul.bf16.gmra.mxu0 %v223
    %v1696 = vpop.f32.mrf.mxu0
    %v1697 = vadd.f32 %v1684, %v1696
    %v1698 = vpop.f32.mrf.mxu0
    %1699 = vdwg.mxu0
    %1700 = vmatpush.bf16.msra.mxu0 %v1376
    %1701 = vmatpush.bf16.msra.mxu0 %v1375
    %1702 = vmatpush.bf16.msra.mxu0 %v1374
    %1703 = vmatpush.bf16.msra.mxu0 %v1373
    %1704 = vmatpush.bf16.msra.mxu0 %v1372
    %1705 = vmatpush.bf16.msra.mxu0 %v1371
    %1706 = vmatpush.bf16.msra.mxu0 %v1370
    %1707 = vmatpush.bf16.msra.mxu0 %v1369
    %1708 = vmatmul.bf16.gmra.mxu0 %v224
    %v1709 = vpop.f32.mrf.mxu0
    %v1710 = vadd.f32 %v1697, %v1709
    %v1711 = vpop.f32.mrf.mxu0
    %1712 = vdwg.mxu0
    %v1721 = vunpack.c.l.b16 %v96
    %v1722 = vunpack.c.h.b16 %v96
    %v1723 = vunpack.c.l.b16 %v97
    %v1724 = vunpack.c.h.b16 %v97
    %v1725 = vunpack.c.l.b16 %v98
    %v1726 = vunpack.c.h.b16 %v98
    %v1727 = vunpack.c.l.b16 %v99
    %v1728 = vunpack.c.h.b16 %v99
    %v1729 = vunpack.c.l.b16 %v100
    %v1730 = vunpack.c.h.b16 %v100
    %v1731 = vunpack.c.l.b16 %v101
    %v1732 = vunpack.c.h.b16 %v101
    %v1733 = vunpack.c.l.b16 %v102
    %v1734 = vunpack.c.h.b16 %v102
    %v1735 = vunpack.c.l.b16 %v103
    %v1736 = vunpack.c.h.b16 %v103
    %v1737 = vpack.c.b16 %v1721, %v1721
    %v1738 = vpack.c.b16 %v1722, %v1722
    %v1739 = vpack.c.b16 %v1723, %v1723
    %v1740 = vpack.c.b16 %v1724, %v1724
    %v1741 = vpack.c.b16 %v1725, %v1725
    %v1742 = vpack.c.b16 %v1726, %v1726
    %v1743 = vpack.c.b16 %v1727, %v1727
    %v1744 = vpack.c.b16 %v1728, %v1728
    %v1745 = vpack.c.b16 %v1729, %v1729
    %v1746 = vpack.c.b16 %v1730, %v1730
    %v1747 = vpack.c.b16 %v1731, %v1731
    %v1748 = vpack.c.b16 %v1732, %v1732
    %v1749 = vpack.c.b16 %v1733, %v1733
    %v1750 = vpack.c.b16 %v1734, %v1734
    %v1751 = vpack.c.b16 %v1735, %v1735
    %v1752 = vpack.c.b16 %v1736, %v1736
    %1769 = vmatpush.bf16.msra.mxu0 %v1256
    %1770 = vmatpush.bf16.msra.mxu0 %v1255
    %1771 = vmatpush.bf16.msra.mxu0 %v1254
    %1772 = vmatpush.bf16.msra.mxu0 %v1253
    %1773 = vmatpush.bf16.msra.mxu0 %v1252
    %1774 = vmatpush.bf16.msra.mxu0 %v1251
    %1775 = vmatpush.bf16.msra.mxu0 %v1250
    %1776 = vmatpush.bf16.msra.mxu0 %v1249
    %1777 = vmatmul.bf16.gmra.mxu0 %v1737
    %v1778 = vpop.f32.mrf.mxu0
    %v1779 = vadd.f32 %v1710, %v1778
    %v1780 = vpop.f32.mrf.mxu0
    %1781 = vdwg.mxu0
    %1782 = vmatpush.bf16.msra.mxu0 %v1264
    %1783 = vmatpush.bf16.msra.mxu0 %v1263
    %1784 = vmatpush.bf16.msra.mxu0 %v1262
    %1785 = vmatpush.bf16.msra.mxu0 %v1261
    %1786 = vmatpush.bf16.msra.mxu0 %v1260
    %1787 = vmatpush.bf16.msra.mxu0 %v1259
    %1788 = vmatpush.bf16.msra.mxu0 %v1258
    %1789 = vmatpush.bf16.msra.mxu0 %v1257
    %1790 = vmatmul.bf16.gmra.mxu0 %v1738
    %v1791 = vpop.f32.mrf.mxu0
    %v1792 = vadd.f32 %v1779, %v1791
    %v1793 = vpop.f32.mrf.mxu0
    %1794 = vdwg.mxu0
    %1795 = vmatpush.bf16.msra.mxu0 %v1272
    %1796 = vmatpush.bf16.msra.mxu0 %v1271
    %1797 = vmatpush.bf16.msra.mxu0 %v1270
    %1798 = vmatpush.bf16.msra.mxu0 %v1269
    %1799 = vmatpush.bf16.msra.mxu0 %v1268
    %1800 = vmatpush.bf16.msra.mxu0 %v1267
    %1801 = vmatpush.bf16.msra.mxu0 %v1266
    %1802 = vmatpush.bf16.msra.mxu0 %v1265
    %1803 = vmatmul.bf16.gmra.mxu0 %v1739
    %v1804 = vpop.f32.mrf.mxu0
    %v1805 = vadd.f32 %v1792, %v1804
    %v1806 = vpop.f32.mrf.mxu0
    %1807 = vdwg.mxu0
    %1808 = vmatpush.bf16.msra.mxu0 %v1280
    %1809 = vmatpush.bf16.msra.mxu0 %v1279
    %1810 = vmatpush.bf16.msra.mxu0 %v1278
    %1811 = vmatpush.bf16.msra.mxu0 %v1277
    %1812 = vmatpush.bf16.msra.mxu0 %v1276
    %1813 = vmatpush.bf16.msra.mxu0 %v1275
    %1814 = vmatpush.bf16.msra.mxu0 %v1274
    %1815 = vmatpush.bf16.msra.mxu0 %v1273
    %1816 = vmatmul.bf16.gmra.mxu0 %v1740
    %v1817 = vpop.f32.mrf.mxu0
    %v1818 = vadd.f32 %v1805, %v1817
    %v1819 = vpop.f32.mrf.mxu0
    %1820 = vdwg.mxu0
    %1821 = vmatpush.bf16.msra.mxu0 %v1288
    %1822 = vmatpush.bf16.msra.mxu0 %v1287
    %1823 = vmatpush.bf16.msra.mxu0 %v1286
    %1824 = vmatpush.bf16.msra.mxu0 %v1285
    %1825 = vmatpush.bf16.msra.mxu0 %v1284
    %1826 = vmatpush.bf16.msra.mxu0 %v1283
    %1827 = vmatpush.bf16.msra.mxu0 %v1282
    %1828 = vmatpush.bf16.msra.mxu0 %v1281
    %1829 = vmatmul.bf16.gmra.mxu0 %v1741
    %v1830 = vpop.f32.mrf.mxu0
    %v1831 = vadd.f32 %v1818, %v1830
    %v1832 = vpop.f32.mrf.mxu0
    %1833 = vdwg.mxu0
    %1834 = vmatpush.bf16.msra.mxu0 %v1296
    %1835 = vmatpush.bf16.msra.mxu0 %v1295
    %1836 = vmatpush.bf16.msra.mxu0 %v1294
    %1837 = vmatpush.bf16.msra.mxu0 %v1293
    %1838 = vmatpush.bf16.msra.mxu0 %v1292
    %1839 = vmatpush.bf16.msra.mxu0 %v1291
    %1840 = vmatpush.bf16.msra.mxu0 %v1290
    %1841 = vmatpush.bf16.msra.mxu0 %v1289
    %1842 = vmatmul.bf16.gmra.mxu0 %v1742
    %v1843 = vpop.f32.mrf.mxu0
    %v1844 = vadd.f32 %v1831, %v1843
    %v1845 = vpop.f32.mrf.mxu0
    %1846 = vdwg.mxu0
    %1847 = vmatpush.bf16.msra.mxu0 %v1304
    %1848 = vmatpush.bf16.msra.mxu0 %v1303
    %1849 = vmatpush.bf16.msra.mxu0 %v1302
    %1850 = vmatpush.bf16.msra.mxu0 %v1301
    %1851 = vmatpush.bf16.msra.mxu0 %v1300
    %1852 = vmatpush.bf16.msra.mxu0 %v1299
    %1853 = vmatpush.bf16.msra.mxu0 %v1298
    %1854 = vmatpush.bf16.msra.mxu0 %v1297
    %1855 = vmatmul.bf16.gmra.mxu0 %v1743
    %v1856 = vpop.f32.mrf.mxu0
    %v1857 = vadd.f32 %v1844, %v1856
    %v1858 = vpop.f32.mrf.mxu0
    %1859 = vdwg.mxu0
    %1860 = vmatpush.bf16.msra.mxu0 %v1312
    %1861 = vmatpush.bf16.msra.mxu0 %v1311
    %1862 = vmatpush.bf16.msra.mxu0 %v1310
    %1863 = vmatpush.bf16.msra.mxu0 %v1309
    %1864 = vmatpush.bf16.msra.mxu0 %v1308
    %1865 = vmatpush.bf16.msra.mxu0 %v1307
    %1866 = vmatpush.bf16.msra.mxu0 %v1306
    %1867 = vmatpush.bf16.msra.mxu0 %v1305
    %1868 = vmatmul.bf16.gmra.mxu0 %v1744
    %v1869 = vpop.f32.mrf.mxu0
    %v1870 = vadd.f32 %v1857, %v1869
    %v1871 = vpop.f32.mrf.mxu0
    %1872 = vdwg.mxu0
    %1873 = vmatpush.bf16.msra.mxu0 %v1320
    %1874 = vmatpush.bf16.msra.mxu0 %v1319
    %1875 = vmatpush.bf16.msra.mxu0 %v1318
    %1876 = vmatpush.bf16.msra.mxu0 %v1317
    %1877 = vmatpush.bf16.msra.mxu0 %v1316
    %1878 = vmatpush.bf16.msra.mxu0 %v1315
    %1879 = vmatpush.bf16.msra.mxu0 %v1314
    %1880 = vmatpush.bf16.msra.mxu0 %v1313
    %1881 = vmatmul.bf16.gmra.mxu0 %v1745
    %v1882 = vpop.f32.mrf.mxu0
    %v1883 = vadd.f32 %v1870, %v1882
    %v1884 = vpop.f32.mrf.mxu0
    %1885 = vdwg.mxu0
    %1886 = vmatpush.bf16.msra.mxu0 %v1328
    %1887 = vmatpush.bf16.msra.mxu0 %v1327
    %1888 = vmatpush.bf16.msra.mxu0 %v1326
    %1889 = vmatpush.bf16.msra.mxu0 %v1325
    %1890 = vmatpush.bf16.msra.mxu0 %v1324
    %1891 = vmatpush.bf16.msra.mxu0 %v1323
    %1892 = vmatpush.bf16.msra.mxu0 %v1322
    %1893 = vmatpush.bf16.msra.mxu0 %v1321
    %1894 = vmatmul.bf16.gmra.mxu0 %v1746
    %v1895 = vpop.f32.mrf.mxu0
    %v1896 = vadd.f32 %v1883, %v1895
    %v1897 = vpop.f32.mrf.mxu0
    %1898 = vdwg.mxu0
    %1899 = vmatpush.bf16.msra.mxu0 %v1336
    %1900 = vmatpush.bf16.msra.mxu0 %v1335
    %1901 = vmatpush.bf16.msra.mxu0 %v1334
    %1902 = vmatpush.bf16.msra.mxu0 %v1333
    %1903 = vmatpush.bf16.msra.mxu0 %v1332
    %1904 = vmatpush.bf16.msra.mxu0 %v1331
    %1905 = vmatpush.bf16.msra.mxu0 %v1330
    %1906 = vmatpush.bf16.msra.mxu0 %v1329
    %1907 = vmatmul.bf16.gmra.mxu0 %v1747
    %v1908 = vpop.f32.mrf.mxu0
    %v1909 = vadd.f32 %v1896, %v1908
    %v1910 = vpop.f32.mrf.mxu0
    %1911 = vdwg.mxu0
    %1912 = vmatpush.bf16.msra.mxu0 %v1344
    %1913 = vmatpush.bf16.msra.mxu0 %v1343
    %1914 = vmatpush.bf16.msra.mxu0 %v1342
    %1915 = vmatpush.bf16.msra.mxu0 %v1341
    %1916 = vmatpush.bf16.msra.mxu0 %v1340
    %1917 = vmatpush.bf16.msra.mxu0 %v1339
    %1918 = vmatpush.bf16.msra.mxu0 %v1338
    %1919 = vmatpush.bf16.msra.mxu0 %v1337
    %1920 = vmatmul.bf16.gmra.mxu0 %v1748
    %v1921 = vpop.f32.mrf.mxu0
    %v1922 = vadd.f32 %v1909, %v1921
    %v1923 = vpop.f32.mrf.mxu0
    %1924 = vdwg.mxu0
    %1925 = vmatpush.bf16.msra.mxu0 %v1352
    %1926 = vmatpush.bf16.msra.mxu0 %v1351
    %1927 = vmatpush.bf16.msra.mxu0 %v1350
    %1928 = vmatpush.bf16.msra.mxu0 %v1349
    %1929 = vmatpush.bf16.msra.mxu0 %v1348
    %1930 = vmatpush.bf16.msra.mxu0 %v1347
    %1931 = vmatpush.bf16.msra.mxu0 %v1346
    %1932 = vmatpush.bf16.msra.mxu0 %v1345
    %1933 = vmatmul.bf16.gmra.mxu0 %v1749
    %v1934 = vpop.f32.mrf.mxu0
    %v1935 = vadd.f32 %v1922, %v1934
    %v1936 = vpop.f32.mrf.mxu0
    %1937 = vdwg.mxu0
    %1938 = vmatpush.bf16.msra.mxu0 %v1360
    %1939 = vmatpush.bf16.msra.mxu0 %v1359
    %1940 = vmatpush.bf16.msra.mxu0 %v1358
    %1941 = vmatpush.bf16.msra.mxu0 %v1357
    %1942 = vmatpush.bf16.msra.mxu0 %v1356
    %1943 = vmatpush.bf16.msra.mxu0 %v1355
    %1944 = vmatpush.bf16.msra.mxu0 %v1354
    %1945 = vmatpush.bf16.msra.mxu0 %v1353
    %1946 = vmatmul.bf16.gmra.mxu0 %v1750
    %v1947 = vpop.f32.mrf.mxu0
    %v1948 = vadd.f32 %v1935, %v1947
    %v1949 = vpop.f32.mrf.mxu0
    %1950 = vdwg.mxu0
    %1951 = vmatpush.bf16.msra.mxu0 %v1368
    %1952 = vmatpush.bf16.msra.mxu0 %v1367
    %1953 = vmatpush.bf16.msra.mxu0 %v1366
    %1954 = vmatpush.bf16.msra.mxu0 %v1365
    %1955 = vmatpush.bf16.msra.mxu0 %v1364
    %1956 = vmatpush.bf16.msra.mxu0 %v1363
    %1957 = vmatpush.bf16.msra.mxu0 %v1362
    %1958 = vmatpush.bf16.msra.mxu0 %v1361
    %1959 = vmatmul.bf16.gmra.mxu0 %v1751
    %v1960 = vpop.f32.mrf.mxu0
    %v1961 = vadd.f32 %v1948, %v1960
    %v1962 = vpop.f32.mrf.mxu0
    %1963 = vdwg.mxu0
    %1964 = vmatpush.bf16.msra.mxu0 %v1376
    %1965 = vmatpush.bf16.msra.mxu0 %v1375
    %1966 = vmatpush.bf16.msra.mxu0 %v1374
    %1967 = vmatpush.bf16.msra.mxu0 %v1373
    %1968 = vmatpush.bf16.msra.mxu0 %v1372
    %1969 = vmatpush.bf16.msra.mxu0 %v1371
    %1970 = vmatpush.bf16.msra.mxu0 %v1370
    %1971 = vmatpush.bf16.msra.mxu0 %v1369
    %1972 = vmatmul.bf16.gmra.mxu0 %v1752
    %v1973 = vpop.f32.mrf.mxu0
    %v1974 = vadd.f32 %v1961, %v1973
    %v1975 = vpop.f32.mrf.mxu0
    %1976 = vdwg.mxu0
    %v2233 = vunpack.c.l.b16 %v481
    %v2234 = vunpack.c.l.b16 %v482
    %v2235 = vunpack.c.l.b16 %v483
    %v2236 = vunpack.c.l.b16 %v484
    %v2237 = vunpack.c.l.b16 %v485
    %v2238 = vunpack.c.l.b16 %v486
    %v2239 = vunpack.c.l.b16 %v487
    %v2240 = vunpack.c.l.b16 %v488
    %v2241 = vunpack.c.l.b16 %v489
    %v2242 = vunpack.c.l.b16 %v490
    %v2243 = vunpack.c.l.b16 %v491
    %v2244 = vunpack.c.l.b16 %v492
    %v2245 = vunpack.c.l.b16 %v493
    %v2246 = vunpack.c.l.b16 %v494
    %v2247 = vunpack.c.l.b16 %v495
    %v2248 = vunpack.c.l.b16 %v496
    %v2249 = vunpack.c.l.b16 %v497
    %v2250 = vunpack.c.l.b16 %v498
    %v2251 = vunpack.c.l.b16 %v499
    %v2252 = vunpack.c.l.b16 %v500
    %v2253 = vunpack.c.l.b16 %v501
    %v2254 = vunpack.c.l.b16 %v502
    %v2255 = vunpack.c.l.b16 %v503
    %v2256 = vunpack.c.l.b16 %v504
    %v2257 = vunpack.c.l.b16 %v505
    %v2258 = vunpack.c.l.b16 %v506
    %v2259 = vunpack.c.l.b16 %v507
    %v2260 = vunpack.c.l.b16 %v508
    %v2261 = vunpack.c.l.b16 %v509
    %v2262 = vunpack.c.l.b16 %v510
    %v2263 = vunpack.c.l.b16 %v511
    %v2264 = vunpack.c.l.b16 %v512
    %v2265 = vunpack.c.l.b16 %v513
    %v2266 = vunpack.c.l.b16 %v514
    %v2267 = vunpack.c.l.b16 %v515
    %v2268 = vunpack.c.l.b16 %v516
    %v2269 = vunpack.c.l.b16 %v517
    %v2270 = vunpack.c.l.b16 %v518
    %v2271 = vunpack.c.l.b16 %v519
    %v2272 = vunpack.c.l.b16 %v520
    %v2273 = vunpack.c.l.b16 %v521
    %v2274 = vunpack.c.l.b16 %v522
    %v2275 = vunpack.c.l.b16 %v523
    %v2276 = vunpack.c.l.b16 %v524
    %v2277 = vunpack.c.l.b16 %v525
    %v2278 = vunpack.c.l.b16 %v526
    %v2279 = vunpack.c.l.b16 %v527
    %v2280 = vunpack.c.l.b16 %v528
    %v2281 = vunpack.c.l.b16 %v529
    %v2282 = vunpack.c.l.b16 %v530
    %v2283 = vunpack.c.l.b16 %v531
    %v2284 = vunpack.c.l.b16 %v532
    %v2285 = vunpack.c.l.b16 %v533
    %v2286 = vunpack.c.l.b16 %v534
    %v2287 = vunpack.c.l.b16 %v535
    %v2288 = vunpack.c.l.b16 %v536
    %v2289 = vunpack.c.l.b16 %v537
    %v2290 = vunpack.c.l.b16 %v538
    %v2291 = vunpack.c.l.b16 %v539
    %v2292 = vunpack.c.l.b16 %v540
    %v2293 = vunpack.c.l.b16 %v541
    %v2294 = vunpack.c.l.b16 %v542
    %v2295 = vunpack.c.l.b16 %v543
    %v2296 = vunpack.c.l.b16 %v544
    %v2297 = vunpack.c.l.b16 %v545
    %v2298 = vunpack.c.l.b16 %v546
    %v2299 = vunpack.c.l.b16 %v547
    %v2300 = vunpack.c.l.b16 %v548
    %v2301 = vunpack.c.l.b16 %v549
    %v2302 = vunpack.c.l.b16 %v550
    %v2303 = vunpack.c.l.b16 %v551
    %v2304 = vunpack.c.l.b16 %v552
    %v2305 = vunpack.c.l.b16 %v553
    %v2306 = vunpack.c.l.b16 %v554
    %v2307 = vunpack.c.l.b16 %v555
    %v2308 = vunpack.c.l.b16 %v556
    %v2309 = vunpack.c.l.b16 %v557
    %v2310 = vunpack.c.l.b16 %v558
    %v2311 = vunpack.c.l.b16 %v559
    %v2312 = vunpack.c.l.b16 %v560
    %v2313 = vunpack.c.l.b16 %v561
    %v2314 = vunpack.c.l.b16 %v562
    %v2315 = vunpack.c.l.b16 %v563
    %v2316 = vunpack.c.l.b16 %v564
    %v2317 = vunpack.c.l.b16 %v565
    %v2318 = vunpack.c.l.b16 %v566
    %v2319 = vunpack.c.l.b16 %v567
    %v2320 = vunpack.c.l.b16 %v568
    %v2321 = vunpack.c.l.b16 %v569
    %v2322 = vunpack.c.l.b16 %v570
    %v2323 = vunpack.c.l.b16 %v571
    %v2324 = vunpack.c.l.b16 %v572
    %v2325 = vunpack.c.l.b16 %v573
    %v2326 = vunpack.c.l.b16 %v574
    %v2327 = vunpack.c.l.b16 %v575
    %v2328 = vunpack.c.l.b16 %v576
    %v2329 = vunpack.c.l.b16 %v577
    %v2330 = vunpack.c.l.b16 %v578
    %v2331 = vunpack.c.l.b16 %v579
    %v2332 = vunpack.c.l.b16 %v580
    %v2333 = vunpack.c.l.b16 %v581
    %v2334 = vunpack.c.l.b16 %v582
    %v2335 = vunpack.c.l.b16 %v583
    %v2336 = vunpack.c.l.b16 %v584
    %v2337 = vunpack.c.l.b16 %v585
    %v2338 = vunpack.c.l.b16 %v586
    %v2339 = vunpack.c.l.b16 %v587
    %v2340 = vunpack.c.l.b16 %v588
    %v2341 = vunpack.c.l.b16 %v589
    %v2342 = vunpack.c.l.b16 %v590
    %v2343 = vunpack.c.l.b16 %v591
    %v2344 = vunpack.c.l.b16 %v592
    %v2345 = vunpack.c.l.b16 %v593
    %v2346 = vunpack.c.l.b16 %v594
    %v2347 = vunpack.c.l.b16 %v595
    %v2348 = vunpack.c.l.b16 %v596
    %v2349 = vunpack.c.l.b16 %v597
    %v2350 = vunpack.c.l.b16 %v598
    %v2351 = vunpack.c.l.b16 %v599
    %v2352 = vunpack.c.l.b16 %v600
    %v2353 = vunpack.c.l.b16 %v601
    %v2354 = vunpack.c.l.b16 %v602
    %v2355 = vunpack.c.l.b16 %v603
    %v2356 = vunpack.c.l.b16 %v604
    %v2357 = vunpack.c.l.b16 %v605
    %v2358 = vunpack.c.l.b16 %v606
    %v2359 = vunpack.c.l.b16 %v607
    %v2360 = vunpack.c.l.b16 %v608
    %v2361 = vunpack.c.l.b16 %v609
    %v2362 = vunpack.c.l.b16 %v610
    %v2363 = vunpack.c.l.b16 %v611
    %v2364 = vunpack.c.l.b16 %v612
    %v2365 = vunpack.c.l.b16 %v613
    %v2366 = vunpack.c.l.b16 %v614
    %v2367 = vunpack.c.l.b16 %v615
    %v2368 = vunpack.c.l.b16 %v616
    %v2369 = vunpack.c.l.b16 %v617
    %v2370 = vunpack.c.l.b16 %v618
    %v2371 = vunpack.c.l.b16 %v619
    %v2372 = vunpack.c.l.b16 %v620
    %v2373 = vunpack.c.l.b16 %v621
    %v2374 = vunpack.c.l.b16 %v622
    %v2375 = vunpack.c.l.b16 %v623
    %v2376 = vunpack.c.l.b16 %v624
    %v2377 = vunpack.c.l.b16 %v625
    %v2378 = vunpack.c.l.b16 %v626
    %v2379 = vunpack.c.l.b16 %v627
    %v2380 = vunpack.c.l.b16 %v628
    %v2381 = vunpack.c.l.b16 %v629
    %v2382 = vunpack.c.l.b16 %v630
    %v2383 = vunpack.c.l.b16 %v631
    %v2384 = vunpack.c.l.b16 %v632
    %v2385 = vunpack.c.l.b16 %v633
    %v2386 = vunpack.c.l.b16 %v634
    %v2387 = vunpack.c.l.b16 %v635
    %v2388 = vunpack.c.l.b16 %v636
    %v2389 = vunpack.c.l.b16 %v637
    %v2390 = vunpack.c.l.b16 %v638
    %v2391 = vunpack.c.l.b16 %v639
    %v2392 = vunpack.c.l.b16 %v640
    %v2393 = vunpack.c.l.b16 %v641
    %v2394 = vunpack.c.l.b16 %v642
    %v2395 = vunpack.c.l.b16 %v643
    %v2396 = vunpack.c.l.b16 %v644
    %v2397 = vunpack.c.l.b16 %v645
    %v2398 = vunpack.c.l.b16 %v646
    %v2399 = vunpack.c.l.b16 %v647
    %v2400 = vunpack.c.l.b16 %v648
    %v2401 = vunpack.c.l.b16 %v649
    %v2402 = vunpack.c.l.b16 %v650
    %v2403 = vunpack.c.l.b16 %v651
    %v2404 = vunpack.c.l.b16 %v652
    %v2405 = vunpack.c.l.b16 %v653
    %v2406 = vunpack.c.l.b16 %v654
    %v2407 = vunpack.c.l.b16 %v655
    %v2408 = vunpack.c.l.b16 %v656
    %v2409 = vunpack.c.l.b16 %v657
    %v2410 = vunpack.c.l.b16 %v658
    %v2411 = vunpack.c.l.b16 %v659
    %v2412 = vunpack.c.l.b16 %v660
    %v2413 = vunpack.c.l.b16 %v661
    %v2414 = vunpack.c.l.b16 %v662
    %v2415 = vunpack.c.l.b16 %v663
    %v2416 = vunpack.c.l.b16 %v664
    %v2417 = vunpack.c.l.b16 %v665
    %v2418 = vunpack.c.l.b16 %v666
    %v2419 = vunpack.c.l.b16 %v667
    %v2420 = vunpack.c.l.b16 %v668
    %v2421 = vunpack.c.l.b16 %v669
    %v2422 = vunpack.c.l.b16 %v670
    %v2423 = vunpack.c.l.b16 %v671
    %v2424 = vunpack.c.l.b16 %v672
    %v2425 = vunpack.c.l.b16 %v673
    %v2426 = vunpack.c.l.b16 %v674
    %v2427 = vunpack.c.l.b16 %v675
    %v2428 = vunpack.c.l.b16 %v676
    %v2429 = vunpack.c.l.b16 %v677
    %v2430 = vunpack.c.l.b16 %v678
    %v2431 = vunpack.c.l.b16 %v679
    %v2432 = vunpack.c.l.b16 %v680
    %v2433 = vunpack.c.l.b16 %v681
    %v2434 = vunpack.c.l.b16 %v682
    %v2435 = vunpack.c.l.b16 %v683
    %v2436 = vunpack.c.l.b16 %v684
    %v2437 = vunpack.c.l.b16 %v685
    %v2438 = vunpack.c.l.b16 %v686
    %v2439 = vunpack.c.l.b16 %v687
    %v2440 = vunpack.c.l.b16 %v688
    %v2441 = vunpack.c.l.b16 %v689
    %v2442 = vunpack.c.l.b16 %v690
    %v2443 = vunpack.c.l.b16 %v691
    %v2444 = vunpack.c.l.b16 %v692
    %v2445 = vunpack.c.l.b16 %v693
    %v2446 = vunpack.c.l.b16 %v694
    %v2447 = vunpack.c.l.b16 %v695
    %v2448 = vunpack.c.l.b16 %v696
    %v2449 = vunpack.c.l.b16 %v697
    %v2450 = vunpack.c.l.b16 %v698
    %v2451 = vunpack.c.l.b16 %v699
    %v2452 = vunpack.c.l.b16 %v700
    %v2453 = vunpack.c.l.b16 %v701
    %v2454 = vunpack.c.l.b16 %v702
    %v2455 = vunpack.c.l.b16 %v703
    %v2456 = vunpack.c.l.b16 %v704
    %v2457 = vunpack.c.l.b16 %v705
    %v2458 = vunpack.c.l.b16 %v706
    %v2459 = vunpack.c.l.b16 %v707
    %v2460 = vunpack.c.l.b16 %v708
    %v2461 = vunpack.c.l.b16 %v709
    %v2462 = vunpack.c.l.b16 %v710
    %v2463 = vunpack.c.l.b16 %v711
    %v2464 = vunpack.c.l.b16 %v712
    %v2465 = vunpack.c.l.b16 %v713
    %v2466 = vunpack.c.l.b16 %v714
    %v2467 = vunpack.c.l.b16 %v715
    %v2468 = vunpack.c.l.b16 %v716
    %v2469 = vunpack.c.l.b16 %v717
    %v2470 = vunpack.c.l.b16 %v718
    %v2471 = vunpack.c.l.b16 %v719
    %v2472 = vunpack.c.l.b16 %v720
    %v2473 = vunpack.c.l.b16 %v721
    %v2474 = vunpack.c.l.b16 %v722
    %v2475 = vunpack.c.l.b16 %v723
    %v2476 = vunpack.c.l.b16 %v724
    %v2477 = vunpack.c.l.b16 %v725
    %v2478 = vunpack.c.l.b16 %v726
    %v2479 = vunpack.c.l.b16 %v727
    %v2480 = vunpack.c.l.b16 %v728
    %v2481 = vunpack.c.l.b16 %v729
    %v2482 = vunpack.c.l.b16 %v730
    %v2483 = vunpack.c.l.b16 %v731
    %v2484 = vunpack.c.l.b16 %v732
    %v2485 = vunpack.c.l.b16 %v733
    %v2486 = vunpack.c.l.b16 %v734
    %v2487 = vunpack.c.l.b16 %v735
    %v2488 = vunpack.c.l.b16 %v736
    %v2489 = vpack.c.b16 %v2234, %v2233
    %v2490 = vpack.c.b16 %v2236, %v2235
    %v2491 = vpack.c.b16 %v2238, %v2237
    %v2492 = vpack.c.b16 %v2240, %v2239
    %v2493 = vpack.c.b16 %v2242, %v2241
    %v2494 = vpack.c.b16 %v2244, %v2243
    %v2495 = vpack.c.b16 %v2246, %v2245
    %v2496 = vpack.c.b16 %v2248, %v2247
    %v2497 = vpack.c.b16 %v2250, %v2249
    %v2498 = vpack.c.b16 %v2252, %v2251
    %v2499 = vpack.c.b16 %v2254, %v2253
    %v2500 = vpack.c.b16 %v2256, %v2255
    %v2501 = vpack.c.b16 %v2258, %v2257
    %v2502 = vpack.c.b16 %v2260, %v2259
    %v2503 = vpack.c.b16 %v2262, %v2261
    %v2504 = vpack.c.b16 %v2264, %v2263
    %v2505 = vpack.c.b16 %v2266, %v2265
    %v2506 = vpack.c.b16 %v2268, %v2267
    %v2507 = vpack.c.b16 %v2270, %v2269
    %v2508 = vpack.c.b16 %v2272, %v2271
    %v2509 = vpack.c.b16 %v2274, %v2273
    %v2510 = vpack.c.b16 %v2276, %v2275
    %v2511 = vpack.c.b16 %v2278, %v2277
    %v2512 = vpack.c.b16 %v2280, %v2279
    %v2513 = vpack.c.b16 %v2282, %v2281
    %v2514 = vpack.c.b16 %v2284, %v2283
    %v2515 = vpack.c.b16 %v2286, %v2285
    %v2516 = vpack.c.b16 %v2288, %v2287
    %v2517 = vpack.c.b16 %v2290, %v2289
    %v2518 = vpack.c.b16 %v2292, %v2291
    %v2519 = vpack.c.b16 %v2294, %v2293
    %v2520 = vpack.c.b16 %v2296, %v2295
    %v2521 = vpack.c.b16 %v2298, %v2297
    %v2522 = vpack.c.b16 %v2300, %v2299
    %v2523 = vpack.c.b16 %v2302, %v2301
    %v2524 = vpack.c.b16 %v2304, %v2303
    %v2525 = vpack.c.b16 %v2306, %v2305
    %v2526 = vpack.c.b16 %v2308, %v2307
    %v2527 = vpack.c.b16 %v2310, %v2309
    %v2528 = vpack.c.b16 %v2312, %v2311
    %v2529 = vpack.c.b16 %v2314, %v2313
    %v2530 = vpack.c.b16 %v2316, %v2315
    %v2531 = vpack.c.b16 %v2318, %v2317
    %v2532 = vpack.c.b16 %v2320, %v2319
    %v2533 = vpack.c.b16 %v2322, %v2321
    %v2534 = vpack.c.b16 %v2324, %v2323
    %v2535 = vpack.c.b16 %v2326, %v2325
    %v2536 = vpack.c.b16 %v2328, %v2327
    %v2537 = vpack.c.b16 %v2330, %v2329
    %v2538 = vpack.c.b16 %v2332, %v2331
    %v2539 = vpack.c.b16 %v2334, %v2333
    %v2540 = vpack.c.b16 %v2336, %v2335
    %v2541 = vpack.c.b16 %v2338, %v2337
    %v2542 = vpack.c.b16 %v2340, %v2339
    %v2543 = vpack.c.b16 %v2342, %v2341
    %v2544 = vpack.c.b16 %v2344, %v2343
    %v2545 = vpack.c.b16 %v2346, %v2345
    %v2546 = vpack.c.b16 %v2348, %v2347
    %v2547 = vpack.c.b16 %v2350, %v2349
    %v2548 = vpack.c.b16 %v2352, %v2351
    %v2549 = vpack.c.b16 %v2354, %v2353
    %v2550 = vpack.c.b16 %v2356, %v2355
    %v2551 = vpack.c.b16 %v2358, %v2357
    %v2552 = vpack.c.b16 %v2360, %v2359
    %v2553 = vpack.c.b16 %v2362, %v2361
    %v2554 = vpack.c.b16 %v2364, %v2363
    %v2555 = vpack.c.b16 %v2366, %v2365
    %v2556 = vpack.c.b16 %v2368, %v2367
    %v2557 = vpack.c.b16 %v2370, %v2369
    %v2558 = vpack.c.b16 %v2372, %v2371
    %v2559 = vpack.c.b16 %v2374, %v2373
    %v2560 = vpack.c.b16 %v2376, %v2375
    %v2561 = vpack.c.b16 %v2378, %v2377
    %v2562 = vpack.c.b16 %v2380, %v2379
    %v2563 = vpack.c.b16 %v2382, %v2381
    %v2564 = vpack.c.b16 %v2384, %v2383
    %v2565 = vpack.c.b16 %v2386, %v2385
    %v2566 = vpack.c.b16 %v2388, %v2387
    %v2567 = vpack.c.b16 %v2390, %v2389
    %v2568 = vpack.c.b16 %v2392, %v2391
    %v2569 = vpack.c.b16 %v2394, %v2393
    %v2570 = vpack.c.b16 %v2396, %v2395
    %v2571 = vpack.c.b16 %v2398, %v2397
    %v2572 = vpack.c.b16 %v2400, %v2399
    %v2573 = vpack.c.b16 %v2402, %v2401
    %v2574 = vpack.c.b16 %v2404, %v2403
    %v2575 = vpack.c.b16 %v2406, %v2405
    %v2576 = vpack.c.b16 %v2408, %v2407
    %v2577 = vpack.c.b16 %v2410, %v2409
    %v2578 = vpack.c.b16 %v2412, %v2411
    %v2579 = vpack.c.b16 %v2414, %v2413
    %v2580 = vpack.c.b16 %v2416, %v2415
    %v2581 = vpack.c.b16 %v2418, %v2417
    %v2582 = vpack.c.b16 %v2420, %v2419
    %v2583 = vpack.c.b16 %v2422, %v2421
    %v2584 = vpack.c.b16 %v2424, %v2423
    %v2585 = vpack.c.b16 %v2426, %v2425
    %v2586 = vpack.c.b16 %v2428, %v2427
    %v2587 = vpack.c.b16 %v2430, %v2429
    %v2588 = vpack.c.b16 %v2432, %v2431
    %v2589 = vpack.c.b16 %v2434, %v2433
    %v2590 = vpack.c.b16 %v2436, %v2435
    %v2591 = vpack.c.b16 %v2438, %v2437
    %v2592 = vpack.c.b16 %v2440, %v2439
    %v2593 = vpack.c.b16 %v2442, %v2441
    %v2594 = vpack.c.b16 %v2444, %v2443
    %v2595 = vpack.c.b16 %v2446, %v2445
    %v2596 = vpack.c.b16 %v2448, %v2447
    %v2597 = vpack.c.b16 %v2450, %v2449
    %v2598 = vpack.c.b16 %v2452, %v2451
    %v2599 = vpack.c.b16 %v2454, %v2453
    %v2600 = vpack.c.b16 %v2456, %v2455
    %v2601 = vpack.c.b16 %v2458, %v2457
    %v2602 = vpack.c.b16 %v2460, %v2459
    %v2603 = vpack.c.b16 %v2462, %v2461
    %v2604 = vpack.c.b16 %v2464, %v2463
    %v2605 = vpack.c.b16 %v2466, %v2465
    %v2606 = vpack.c.b16 %v2468, %v2467
    %v2607 = vpack.c.b16 %v2470, %v2469
    %v2608 = vpack.c.b16 %v2472, %v2471
    %v2609 = vpack.c.b16 %v2474, %v2473
    %v2610 = vpack.c.b16 %v2476, %v2475
    %v2611 = vpack.c.b16 %v2478, %v2477
    %v2612 = vpack.c.b16 %v2480, %v2479
    %v2613 = vpack.c.b16 %v2482, %v2481
    %v2614 = vpack.c.b16 %v2484, %v2483
    %v2615 = vpack.c.b16 %v2486, %v2485
    %v2616 = vpack.c.b16 %v2488, %v2487
    %2745 = vmatpush.bf16.msra.mxu0 %v2496
    %2746 = vmatpush.bf16.msra.mxu0 %v2495
    %2747 = vmatpush.bf16.msra.mxu0 %v2494
    %2748 = vmatpush.bf16.msra.mxu0 %v2493
    %2749 = vmatpush.bf16.msra.mxu0 %v2492
    %2750 = vmatpush.bf16.msra.mxu0 %v2491
    %2751 = vmatpush.bf16.msra.mxu0 %v2490
    %2752 = vmatpush.bf16.msra.mxu0 %v2489
    %2753 = vmatmul.bf16.gmra.mxu0 %v1737
    %v2754 = vpop.f32.mrf.mxu0
    %v2755 = vadd.f32 0.0, %v2754
    %v2756 = vpop.f32.mrf.mxu0
    %2757 = vdwg.mxu0
    %2758 = vmatpush.bf16.msra.mxu0 %v2504
    %2759 = vmatpush.bf16.msra.mxu0 %v2503
    %2760 = vmatpush.bf16.msra.mxu0 %v2502
    %2761 = vmatpush.bf16.msra.mxu0 %v2501
    %2762 = vmatpush.bf16.msra.mxu0 %v2500
    %2763 = vmatpush.bf16.msra.mxu0 %v2499
    %2764 = vmatpush.bf16.msra.mxu0 %v2498
    %2765 = vmatpush.bf16.msra.mxu0 %v2497
    %2766 = vmatmul.bf16.gmra.mxu0 %v1738
    %v2767 = vpop.f32.mrf.mxu0
    %v2768 = vadd.f32 %v2755, %v2767
    %v2769 = vpop.f32.mrf.mxu0
    %2770 = vdwg.mxu0
    %2771 = vmatpush.bf16.msra.mxu0 %v2512
    %2772 = vmatpush.bf16.msra.mxu0 %v2511
    %2773 = vmatpush.bf16.msra.mxu0 %v2510
    %2774 = vmatpush.bf16.msra.mxu0 %v2509
    %2775 = vmatpush.bf16.msra.mxu0 %v2508
    %2776 = vmatpush.bf16.msra.mxu0 %v2507
    %2777 = vmatpush.bf16.msra.mxu0 %v2506
    %2778 = vmatpush.bf16.msra.mxu0 %v2505
    %2779 = vmatmul.bf16.gmra.mxu0 %v1739
    %v2780 = vpop.f32.mrf.mxu0
    %v2781 = vadd.f32 %v2768, %v2780
    %v2782 = vpop.f32.mrf.mxu0
    %2783 = vdwg.mxu0
    %2784 = vmatpush.bf16.msra.mxu0 %v2520
    %2785 = vmatpush.bf16.msra.mxu0 %v2519
    %2786 = vmatpush.bf16.msra.mxu0 %v2518
    %2787 = vmatpush.bf16.msra.mxu0 %v2517
    %2788 = vmatpush.bf16.msra.mxu0 %v2516
    %2789 = vmatpush.bf16.msra.mxu0 %v2515
    %2790 = vmatpush.bf16.msra.mxu0 %v2514
    %2791 = vmatpush.bf16.msra.mxu0 %v2513
    %2792 = vmatmul.bf16.gmra.mxu0 %v1740
    %v2793 = vpop.f32.mrf.mxu0
    %v2794 = vadd.f32 %v2781, %v2793
    %v2795 = vpop.f32.mrf.mxu0
    %2796 = vdwg.mxu0
    %2797 = vmatpush.bf16.msra.mxu0 %v2528
    %2798 = vmatpush.bf16.msra.mxu0 %v2527
    %2799 = vmatpush.bf16.msra.mxu0 %v2526
    %2800 = vmatpush.bf16.msra.mxu0 %v2525
    %2801 = vmatpush.bf16.msra.mxu0 %v2524
    %2802 = vmatpush.bf16.msra.mxu0 %v2523
    %2803 = vmatpush.bf16.msra.mxu0 %v2522
    %2804 = vmatpush.bf16.msra.mxu0 %v2521
    %2805 = vmatmul.bf16.gmra.mxu0 %v1741
    %v2806 = vpop.f32.mrf.mxu0
    %v2807 = vadd.f32 %v2794, %v2806
    %v2808 = vpop.f32.mrf.mxu0
    %2809 = vdwg.mxu0
    %2810 = vmatpush.bf16.msra.mxu0 %v2536
    %2811 = vmatpush.bf16.msra.mxu0 %v2535
    %2812 = vmatpush.bf16.msra.mxu0 %v2534
    %2813 = vmatpush.bf16.msra.mxu0 %v2533
    %2814 = vmatpush.bf16.msra.mxu0 %v2532
    %2815 = vmatpush.bf16.msra.mxu0 %v2531
    %2816 = vmatpush.bf16.msra.mxu0 %v2530
    %2817 = vmatpush.bf16.msra.mxu0 %v2529
    %2818 = vmatmul.bf16.gmra.mxu0 %v1742
    %v2819 = vpop.f32.mrf.mxu0
    %v2820 = vadd.f32 %v2807, %v2819
    %v2821 = vpop.f32.mrf.mxu0
    %2822 = vdwg.mxu0
    %2823 = vmatpush.bf16.msra.mxu0 %v2544
    %2824 = vmatpush.bf16.msra.mxu0 %v2543
    %2825 = vmatpush.bf16.msra.mxu0 %v2542
    %2826 = vmatpush.bf16.msra.mxu0 %v2541
    %2827 = vmatpush.bf16.msra.mxu0 %v2540
    %2828 = vmatpush.bf16.msra.mxu0 %v2539
    %2829 = vmatpush.bf16.msra.mxu0 %v2538
    %2830 = vmatpush.bf16.msra.mxu0 %v2537
    %2831 = vmatmul.bf16.gmra.mxu0 %v1743
    %v2832 = vpop.f32.mrf.mxu0
    %v2833 = vadd.f32 %v2820, %v2832
    %v2834 = vpop.f32.mrf.mxu0
    %2835 = vdwg.mxu0
    %2836 = vmatpush.bf16.msra.mxu0 %v2552
    %2837 = vmatpush.bf16.msra.mxu0 %v2551
    %2838 = vmatpush.bf16.msra.mxu0 %v2550
    %2839 = vmatpush.bf16.msra.mxu0 %v2549
    %2840 = vmatpush.bf16.msra.mxu0 %v2548
    %2841 = vmatpush.bf16.msra.mxu0 %v2547
    %2842 = vmatpush.bf16.msra.mxu0 %v2546
    %2843 = vmatpush.bf16.msra.mxu0 %v2545
    %2844 = vmatmul.bf16.gmra.mxu0 %v1744
    %v2845 = vpop.f32.mrf.mxu0
    %v2846 = vadd.f32 %v2833, %v2845
    %v2847 = vpop.f32.mrf.mxu0
    %2848 = vdwg.mxu0
    %2849 = vmatpush.bf16.msra.mxu0 %v2560
    %2850 = vmatpush.bf16.msra.mxu0 %v2559
    %2851 = vmatpush.bf16.msra.mxu0 %v2558
    %2852 = vmatpush.bf16.msra.mxu0 %v2557
    %2853 = vmatpush.bf16.msra.mxu0 %v2556
    %2854 = vmatpush.bf16.msra.mxu0 %v2555
    %2855 = vmatpush.bf16.msra.mxu0 %v2554
    %2856 = vmatpush.bf16.msra.mxu0 %v2553
    %2857 = vmatmul.bf16.gmra.mxu0 %v1745
    %v2858 = vpop.f32.mrf.mxu0
    %v2859 = vadd.f32 %v2846, %v2858
    %v2860 = vpop.f32.mrf.mxu0
    %2861 = vdwg.mxu0
    %2862 = vmatpush.bf16.msra.mxu0 %v2568
    %2863 = vmatpush.bf16.msra.mxu0 %v2567
    %2864 = vmatpush.bf16.msra.mxu0 %v2566
    %2865 = vmatpush.bf16.msra.mxu0 %v2565
    %2866 = vmatpush.bf16.msra.mxu0 %v2564
    %2867 = vmatpush.bf16.msra.mxu0 %v2563
    %2868 = vmatpush.bf16.msra.mxu0 %v2562
    %2869 = vmatpush.bf16.msra.mxu0 %v2561
    %2870 = vmatmul.bf16.gmra.mxu0 %v1746
    %v2871 = vpop.f32.mrf.mxu0
    %v2872 = vadd.f32 %v2859, %v2871
    %v2873 = vpop.f32.mrf.mxu0
    %2874 = vdwg.mxu0
    %2875 = vmatpush.bf16.msra.mxu0 %v2576
    %2876 = vmatpush.bf16.msra.mxu0 %v2575
    %2877 = vmatpush.bf16.msra.mxu0 %v2574
    %2878 = vmatpush.bf16.msra.mxu0 %v2573
    %2879 = vmatpush.bf16.msra.mxu0 %v2572
    %2880 = vmatpush.bf16.msra.mxu0 %v2571
    %2881 = vmatpush.bf16.msra.mxu0 %v2570
    %2882 = vmatpush.bf16.msra.mxu0 %v2569
    %2883 = vmatmul.bf16.gmra.mxu0 %v1747
    %v2884 = vpop.f32.mrf.mxu0
    %v2885 = vadd.f32 %v2872, %v2884
    %v2886 = vpop.f32.mrf.mxu0
    %2887 = vdwg.mxu0
    %2888 = vmatpush.bf16.msra.mxu0 %v2584
    %2889 = vmatpush.bf16.msra.mxu0 %v2583
    %2890 = vmatpush.bf16.msra.mxu0 %v2582
    %2891 = vmatpush.bf16.msra.mxu0 %v2581
    %2892 = vmatpush.bf16.msra.mxu0 %v2580
    %2893 = vmatpush.bf16.msra.mxu0 %v2579
    %2894 = vmatpush.bf16.msra.mxu0 %v2578
    %2895 = vmatpush.bf16.msra.mxu0 %v2577
    %2896 = vmatmul.bf16.gmra.mxu0 %v1748
    %v2897 = vpop.f32.mrf.mxu0
    %v2898 = vadd.f32 %v2885, %v2897
    %v2899 = vpop.f32.mrf.mxu0
    %2900 = vdwg.mxu0
    %2901 = vmatpush.bf16.msra.mxu0 %v2592
    %2902 = vmatpush.bf16.msra.mxu0 %v2591
    %2903 = vmatpush.bf16.msra.mxu0 %v2590
    %2904 = vmatpush.bf16.msra.mxu0 %v2589
    %2905 = vmatpush.bf16.msra.mxu0 %v2588
    %2906 = vmatpush.bf16.msra.mxu0 %v2587
    %2907 = vmatpush.bf16.msra.mxu0 %v2586
    %2908 = vmatpush.bf16.msra.mxu0 %v2585
    %2909 = vmatmul.bf16.gmra.mxu0 %v1749
    %v2910 = vpop.f32.mrf.mxu0
    %v2911 = vadd.f32 %v2898, %v2910
    %v2912 = vpop.f32.mrf.mxu0
    %2913 = vdwg.mxu0
    %2914 = vmatpush.bf16.msra.mxu0 %v2600
    %2915 = vmatpush.bf16.msra.mxu0 %v2599
    %2916 = vmatpush.bf16.msra.mxu0 %v2598
    %2917 = vmatpush.bf16.msra.mxu0 %v2597
    %2918 = vmatpush.bf16.msra.mxu0 %v2596
    %2919 = vmatpush.bf16.msra.mxu0 %v2595
    %2920 = vmatpush.bf16.msra.mxu0 %v2594
    %2921 = vmatpush.bf16.msra.mxu0 %v2593
    %2922 = vmatmul.bf16.gmra.mxu0 %v1750
    %v2923 = vpop.f32.mrf.mxu0
    %v2924 = vadd.f32 %v2911, %v2923
    %v2925 = vpop.f32.mrf.mxu0
    %2926 = vdwg.mxu0
    %2927 = vmatpush.bf16.msra.mxu0 %v2608
    %2928 = vmatpush.bf16.msra.mxu0 %v2607
    %2929 = vmatpush.bf16.msra.mxu0 %v2606
    %2930 = vmatpush.bf16.msra.mxu0 %v2605
    %2931 = vmatpush.bf16.msra.mxu0 %v2604
    %2932 = vmatpush.bf16.msra.mxu0 %v2603
    %2933 = vmatpush.bf16.msra.mxu0 %v2602
    %2934 = vmatpush.bf16.msra.mxu0 %v2601
    %2935 = vmatmul.bf16.gmra.mxu0 %v1751
    %v2936 = vpop.f32.mrf.mxu0
    %v2937 = vadd.f32 %v2924, %v2936
    %v2938 = vpop.f32.mrf.mxu0
    %2939 = vdwg.mxu0
    %2940 = vmatpush.bf16.msra.mxu0 %v2616
    %2941 = vmatpush.bf16.msra.mxu0 %v2615
    %2942 = vmatpush.bf16.msra.mxu0 %v2614
    %2943 = vmatpush.bf16.msra.mxu0 %v2613
    %2944 = vmatpush.bf16.msra.mxu0 %v2612
    %2945 = vmatpush.bf16.msra.mxu0 %v2611
    %2946 = vmatpush.bf16.msra.mxu0 %v2610
    %2947 = vmatpush.bf16.msra.mxu0 %v2609
    %2948 = vmatmul.bf16.gmra.mxu0 %v1752
    %v2949 = vpop.f32.mrf.mxu0
    %v2950 = vadd.f32 %v2937, %v2949
    %v2951 = vpop.f32.mrf.mxu0
    %2952 = vdwg.mxu0
    %v2953 = vadd.f32 %v1974, %v2950
    %2954 = vst [vmem:[#allocation8] sm:$0x1] %v2953
    // Predicated region
    $region26: #{tpu_custom_call.1} parent=1 // pred_check
      _
    $region27: #{tpu_custom_call.1} parent=1 // pred_check_branch
      %2956 = sbr.rel (0) target = $region29
    $region28: #{tpu_custom_call.1} parent=1 // pred_region
      %2958 = vsyncadd [#allocation4], 0
      %s2960 = sshll.u32 [#allocation8], 4
      %s2961 = int_to_ptr.vmem [resolvable:$true] %s2960
      %s2962 = sshll.u32 %s3, 4
      %s2963 = int_to_ptr.hbm [resolvable:$true] %s2962
      %2965 = dma.vmem_to_hbm [thread:$0]  %s2961, 16, %s2963, [#allocation4]
    $region29: #{tpu_custom_call.1} parent=1 // pred_fallthru
      _
    // Predicated region
    $region30: #{tpu_custom_call.1} parent=1 // pred_check
      _
    $region31: #{tpu_custom_call.1} parent=1 // pred_check_branch
      %2967 = sbr.rel (0) target = $region33
    $region32: #{tpu_custom_call.1} parent=1 // pred_region
      %2969 = dma.done [#allocation4], 16
    $region33: #{tpu_custom_call.1} parent=1 // pred_fallthru
      _
    %2970 = vsyncpa [#allocation3], 1
    %2971 = vsyncpa [#allocation6], 1
    %2972 = vsyncpa [#allocation4], 1

// kernel: tpu_custom_call.1
$region0: #{tpu_custom_call.1}
  #allocation0 [shape = 'u32[]', space=smem, size = 0x4, offset = 0x4, fixed_abs, tag = 'smem constant byte address 0x4 - core index']
  #allocation1 [shape = 'u32[72,128]{1,0:T(1,128)}', space=vmem, size = 0x9000, scoped, tag = 'internal scratch']
  %s0 = inlined_call_operand.hbm [shape: f32[1,2048], index: 0, kind: input, shape index: {}]
  %s1 = inlined_call_operand.hbm [shape: bf16[2048,128], index: 1, kind: input, shape index: {}]
  %s2 = inlined_call_operand.hbm [shape: bf16[2048,128], index: 2, kind: input, shape index: {}]
  %s3 = inlined_call_operand.hbm [shape: f32[1,128], index: 3, kind: output, shape index: {}]
  %s4 = sld [smem:[#allocation0]]
  $region34: #{tpu_custom_call.1} parent=0
    _
  %s6 = ssub.s32 1, %s4
  %s7 = scalar_select 0, %s6, %s4
  $region1: #{tpu_custom_call.1} parent=0
    #allocation2 [shape = 'u8[8192]{0}', space=vmem, size = 0x2000, scoped, tag = 'input window, operand 0, single buffered']
    #allocation3 [shape = 's32[1]{0}', space=sflag, size = 0x4, scoped, tag = 'scoped memory for tpu_custom_call.1']
    #allocation4 [shape = 's32[1]{0}', space=sflag, size = 0x4, scoped, tag = 'scoped memory for tpu_custom_call.1']
    #allocation5 [shape = 'u8[524288]{0}', space=vmem, size = 0x80000, scoped, tag = 'input window, operand 1, single buffered']
    #allocation6 [shape = 's32[1]{0}', space=sflag, size = 0x4, scoped, tag = 'scoped memory for tpu_custom_call.1']
    #allocation7 [shape = 'u8[524288]{0}', space=vmem, size = 0x80000, scoped, tag = 'input window, operand 2, single buffered']
    #allocation8 [shape = 'u8[512]{0}', space=vmem, size = 0x400, scoped, tag = 'output window, operand 0, single buffered']
    %8 = vsyncpa [#allocation3], 0
    %9 = vsyncpa [#allocation6], 0
    %10 = vsyncpa [#allocation4], 0
    // Predicated region
    $region2: #{tpu_custom_call.1} parent=1 // pred_check
      _
    $region3: #{tpu_custom_call.1} parent=1 // pred_check_branch
      %12 = sbr.rel (0) target = $region5
    $region4: #{tpu_custom_call.1} parent=1 // pred_region
      %14 = vsyncadd [#allocation3], 0
      %s16 = sshll.u32 %s0, 4
      %s17 = int_to_ptr.hbm [resolvable:$true] %s16
      %s18 = sshll.u32 [#allocation2], 4
      %s19 = int_to_ptr.vmem [resolvable:$true] %s18
      %21 = dma.hbm_to_vmem [thread:$0]  %s17, 256, %s19, [#allocation3]
    $region5: #{tpu_custom_call.1} parent=1 // pred_fallthru
      _
    // Predicated region
    $region6: #{tpu_custom_call.1} parent=1 // pred_check
      _
    $region7: #{tpu_custom_call.1} parent=1 // pred_check_branch
      %23 = sbr.rel (0) target = $region9
    $region8: #{tpu_custom_call.1} parent=1 // pred_region
      %25 = vsyncadd [#allocation6], 0
      %s26 = sshll.u32 %s1, 4
      %s27 = int_to_ptr.hbm [resolvable:$true] %s26
      %s28 = sshll.u32 [#allocation5], 4
      %s29 = int_to_ptr.vmem [resolvable:$true] %s28
      %34 = dma.hbm_to_vmem [thread:$0]  %s27, 16384, %s29, [#allocation6], 64, 64, 4
    $region9: #{tpu_custom_call.1} parent=1 // pred_fallthru
      _
    // Predicated region
    $region10: #{tpu_custom_call.1} parent=1 // pred_check
      _
    $region11: #{tpu_custom_call.1} parent=1 // pred_check_branch
      %36 = sbr.rel (0) target = $region13
    $region12: #{tpu_custom_call.1} parent=1 // pred_region
      %38 = vsyncadd [#allocation6], 0
      %s39 = sshll.u32 %s2, 4
      %s40 = int_to_ptr.hbm [resolvable:$true] %s39
      %s41 = sshll.u32 [#allocation7], 4
      %s42 = int_to_ptr.vmem [resolvable:$true] %s41
      %47 = dma.hbm_to_vmem [thread:$0]  %s40, 16384, %s42, [#allocation6], 64, 64, 4
    $region13: #{tpu_custom_call.1} parent=1 // pred_fallthru
      _
    // Predicated region
    $region14: #{tpu_custom_call.1} parent=1 // pred_check
      _
    $region15: #{tpu_custom_call.1} parent=1 // pred_check_branch
      %49 = sbr.rel (0) target = $region17
    $region16: #{tpu_custom_call.1} parent=1 // pred_region
      %51 = dma.done [#allocation3], 256
    $region17: #{tpu_custom_call.1} parent=1 // pred_fallthru
      _
    // Predicated region
    $region18: #{tpu_custom_call.1} parent=1 // pred_check
      _
    $region19: #{tpu_custom_call.1} parent=1 // pred_check_branch
      %53 = sbr.rel (0) target = $region21
    $region20: #{tpu_custom_call.1} parent=1 // pred_region
      %55 = dma.done [#allocation6], 16384
    $region21: #{tpu_custom_call.1} parent=1 // pred_fallthru
      _
    // Predicated region
    $region22: #{tpu_custom_call.1} parent=1 // pred_check
      _
    $region23: #{tpu_custom_call.1} parent=1 // pred_check_branch
      %57 = sbr.rel (0) target = $region25
    $region24: #{tpu_custom_call.1} parent=1 // pred_region
      %59 = dma.done [#allocation6], 16384
    $region25: #{tpu_custom_call.1} parent=1 // pred_fallthru
      _
    %v60 = vld [vmem:[#allocation2] sm:$0xff]
    %v61 = vld [vmem:[#allocation2 + $0x8] sm:$0xff]
    %v64 = vperm.slane %v60, 0
    %v65 = vperm.slane %v60, 1
    %v66 = vperm.slane %v60, 2
    %v67 = vperm.slane %v60, 3
    %v68 = vperm.slane %v60, 4
    %v69 = vperm.slane %v60, 5
    %v70 = vperm.slane %v60, 6
    %v71 = vperm.slane %v60, 7
    %v72 = vperm.slane %v61, 0
    %v73 = vperm.slane %v61, 1
    %v74 = vperm.slane %v61, 2
    %v75 = vperm.slane %v61, 3
    %v76 = vperm.slane %v61, 4
    %v77 = vperm.slane %v61, 5
    %v78 = vperm.slane %v61, 6
    %v79 = vperm.slane %v61, 7
    %v96 = vpack.c.bf16 %v65, %v64
    %v97 = vpack.c.bf16 %v67, %v66
    %v98 = vpack.c.bf16 %v69, %v68
    %v99 = vpack.c.bf16 %v71, %v70
    %v100 = vpack.c.bf16 %v73, %v72
    %v101 = vpack.c.bf16 %v75, %v74
    %v102 = vpack.c.bf16 %v77, %v76
    %v103 = vpack.c.bf16 %v79, %v78
    %v104 = vunpack.c.l.bf16 %v96
    %v105 = vunpack.c.h.bf16 %v96
    %v106 = vunpack.c.l.bf16 %v97
    %v107 = vunpack.c.h.bf16 %v97
    %v108 = vunpack.c.l.bf16 %v98
    %v109 = vunpack.c.h.bf16 %v98
    %v110 = vunpack.c.l.bf16 %v99
    %v111 = vunpack.c.h.bf16 %v99
    %v112 = vunpack.c.l.bf16 %v100
    %v113 = vunpack.c.h.bf16 %v100
    %v114 = vunpack.c.l.bf16 %v101
    %v115 = vunpack.c.h.bf16 %v101
    %v116 = vunpack.c.l.bf16 %v102
    %v117 = vunpack.c.h.bf16 %v102
    %v118 = vunpack.c.l.bf16 %v103
    %v119 = vunpack.c.h.bf16 %v103
    %v136 = vrot.slane %v105, 7
    %v137 = vrot.slane %v106, 6
    %v138 = vrot.slane %v107, 5
    %v139 = vrot.slane %v108, 4
    %v140 = vrot.slane %v109, 3
    %v141 = vrot.slane %v110, 2
    %v142 = vrot.slane %v111, 1
    %v143 = vrot.slane %v113, 7
    %v144 = vrot.slane %v114, 6
    %v145 = vrot.slane %v115, 5
    %v146 = vrot.slane %v116, 4
    %v147 = vrot.slane %v117, 3
    %v148 = vrot.slane %v118, 2
    %v149 = vrot.slane %v119, 1
    %vm150 = vcmask 1040384
    %v151 = vsel %vm150, %v104, %v136
    %vm152 = vcmask 1042434
    %v153 = vsel %vm152, %v137, %v138
    %vm154 = vcmask 1041408
    %v155 = vsel %vm154, %v151, %v153
    %vm156 = vcmask 1044484
    %v157 = vsel %vm156, %v139, %v140
    %vm158 = vcmask 1046534
    %v159 = vsel %vm158, %v141, %v142
    %vm160 = vcmask 1045508
    %v161 = vsel %vm160, %v157, %v159
    %vm162 = vcmask 1043456
    %v163 = vsel %vm162, %v155, %v161
    %v164 = vsel %vm150, %v112, %v143
    %v165 = vsel %vm152, %v144, %v145
    %v166 = vsel %vm154, %v164, %v165
    %v167 = vsel %vm156, %v146, %v147
    %v168 = vsel %vm158, %v148, %v149
    %v169 = vsel %vm160, %v167, %v168
    %v170 = vsel %vm162, %v166, %v169
    %v173 = vsub.f32 %v60, %v163
    %v174 = vsub.f32 %v61, %v170
    %v177 = vperm.slane %v173, 0
    %v178 = vperm.slane %v173, 1
    %v179 = vperm.slane %v173, 2
    %v180 = vperm.slane %v173, 3
    %v181 = vperm.slane %v173, 4
    %v182 = vperm.slane %v173, 5
    %v183 = vperm.slane %v173, 6
    %v184 = vperm.slane %v173, 7
    %v185 = vperm.slane %v174, 0
    %v186 = vperm.slane %v174, 1
    %v187 = vperm.slane %v174, 2
    %v188 = vperm.slane %v174, 3
    %v189 = vperm.slane %v174, 4
    %v190 = vperm.slane %v174, 5
    %v191 = vperm.slane %v174, 6
    %v192 = vperm.slane %v174, 7
    %v209 = vpack.c.bf16 %v177, %v177
    %v210 = vpack.c.bf16 %v178, %v178
    %v211 = vpack.c.bf16 %v179, %v179
    %v212 = vpack.c.bf16 %v180, %v180
    %v213 = vpack.c.bf16 %v181, %v181
    %v214 = vpack.c.bf16 %v182, %v182
    %v215 = vpack.c.bf16 %v183, %v183
    %v216 = vpack.c.bf16 %v184, %v184
    %v217 = vpack.c.bf16 %v185, %v185
    %v218 = vpack.c.bf16 %v186, %v186
    %v219 = vpack.c.bf16 %v187, %v187
    %v220 = vpack.c.bf16 %v188, %v188
    %v221 = vpack.c.bf16 %v189, %v189
    %v222 = vpack.c.bf16 %v190, %v190
    %v223 = vpack.c.bf16 %v191, %v191
    %v224 = vpack.c.bf16 %v192, %v192
    %v225 = vld [vmem:[#allocation5] sm:$0xf]
    %v226 = vld [vmem:[#allocation5 + $0x4] sm:$0xf]
    %v227 = vld [vmem:[#allocation5 + $0x8] sm:$0xf]
    %v228 = vld [vmem:[#allocation5 + $0xc] sm:$0xf]
    %v229 = vld [vmem:[#allocation5 + $0x10] sm:$0xf]
    %v230 = vld [vmem:[#allocation5 + $0x14] sm:$0xf]
    %v231 = vld [vmem:[#allocation5 + $0x18] sm:$0xf]
    %v232 = vld [vmem:[#allocation5 + $0x1c] sm:$0xf]
    %v233 = vld [vmem:[#allocation5 + $0x20] sm:$0xf]
    %v234 = vld [vmem:[#allocation5 + $0x24] sm:$0xf]
    %v235 = vld [vmem:[#allocation5 + $0x28] sm:$0xf]
    %v236 = vld [vmem:[#allocation5 + $0x2c] sm:$0xf]
    %v237 = vld [vmem:[#allocation5 + $0x30] sm:$0xf]
    %v238 = vld [vmem:[#allocation5 + $0x34] sm:$0xf]
    %v239 = vld [vmem:[#allocation5 + $0x38] sm:$0xf]
    %v240 = vld [vmem:[#allocation5 + $0x3c] sm:$0xf]
    %v241 = vld [vmem:[#allocation5 + $0x40] sm:$0xf]
    %v242 = vld [vmem:[#allocation5 + $0x44] sm:$0xf]
    %v243 = vld [vmem:[#allocation5 + $0x48] sm:$0xf]
    %v244 = vld [vmem:[#allocation5 + $0x4c] sm:$0xf]
    %v245 = vld [vmem:[#allocation5 + $0x50] sm:$0xf]
    %v246 = vld [vmem:[#allocation5 + $0x54] sm:$0xf]
    %v247 = vld [vmem:[#allocation5 + $0x58] sm:$0xf]
    %v248 = vld [vmem:[#allocation5 + $0x5c] sm:$0xf]
    %v249 = vld [vmem:[#allocation5 + $0x60] sm:$0xf]
    %v250 = vld [vmem:[#allocation5 + $0x64] sm:$0xf]
    %v251 = vld [vmem:[#allocation5 + $0x68] sm:$0xf]
    %v252 = vld [vmem:[#allocation5 + $0x6c] sm:$0xf]
    %v253 = vld [vmem:[#allocation5 + $0x70] sm:$0xf]
    %v254 = vld [vmem:[#allocation5 + $0x74] sm:$0xf]
    %v255 = vld [vmem:[#allocation5 + $0x78] sm:$0xf]
    %v256 = vld [vmem:[#allocation5 + $0x7c] sm:$0xf]
    %v257 = vld [vmem:[#allocation5 + $0x80] sm:$0xf]
    %v258 = vld [vmem:[#allocation5 + $0x84] sm:$0xf]
    %v259 = vld [vmem:[#allocation5 + $0x88] sm:$0xf]
    %v260 = vld [vmem:[#allocation5 + $0x8c] sm:$0xf]
    %v261 = vld [vmem:[#allocation5 + $0x90] sm:$0xf]
    %v262 = vld [vmem:[#allocation5 + $0x94] sm:$0xf]
    %v263 = vld [vmem:[#allocation5 + $0x98] sm:$0xf]
    %v264 = vld [vmem:[#allocation5 + $0x9c] sm:$0xf]
    %v265 = vld [vmem:[#allocation5 + $0xa0] sm:$0xf]
    %v266 = vld [vmem:[#allocation5 + $0xa4] sm:$0xf]
    %v267 = vld [vmem:[#allocation5 + $0xa8] sm:$0xf]
    %v268 = vld [vmem:[#allocation5 + $0xac] sm:$0xf]
    %v269 = vld [vmem:[#allocation5 + $0xb0] sm:$0xf]
    %v270 = vld [vmem:[#allocation5 + $0xb4] sm:$0xf]
    %v271 = vld [vmem:[#allocation5 + $0xb8] sm:$0xf]
    %v272 = vld [vmem:[#allocation5 + $0xbc] sm:$0xf]
    %v273 = vld [vmem:[#allocation5 + $0xc0] sm:$0xf]
    %v274 = vld [vmem:[#allocation5 + $0xc4] sm:$0xf]
    %v275 = vld [vmem:[#allocation5 + $0xc8] sm:$0xf]
    %v276 = vld [vmem:[#allocation5 + $0xcc] sm:$0xf]
    %v277 = vld [vmem:[#allocation5 + $0xd0] sm:$0xf]
    %v278 = vld [vmem:[#allocation5 + $0xd4] sm:$0xf]
    %v279 = vld [vmem:[#allocation5 + $0xd8] sm:$0xf]
    %v280 = vld [vmem:[#allocation5 + $0xdc] sm:$0xf]
    %v281 = vld [vmem:[#allocation5 + $0xe0] sm:$0xf]
    %v282 = vld [vmem:[#allocation5 + $0xe4] sm:$0xf]
    %v283 = vld [vmem:[#allocation5 + $0xe8] sm:$0xf]
    %v284 = vld [vmem:[#allocation5 + $0xec] sm:$0xf]
    %v285 = vld [vmem:[#allocation5 + $0xf0] sm:$0xf]
    %v286 = vld [vmem:[#allocation5 + $0xf4] sm:$0xf]
    %v287 = vld [vmem:[#allocation5 + $0xf8] sm:$0xf]
    %v288 = vld [vmem:[#allocation5 + $0xfc] sm:$0xf]
    %v289 = vld [vmem:[#allocation5 + $0x100] sm:$0xf]
    %v290 = vld [vmem:[#allocation5 + $0x104] sm:$0xf]
    %v291 = vld [vmem:[#allocation5 + $0x108] sm:$0xf]
    %v292 = vld [vmem:[#allocation5 + $0x10c] sm:$0xf]
    %v293 = vld [vmem:[#allocation5 + $0x110] sm:$0xf]
    %v294 = vld [vmem:[#allocation5 + $0x114] sm:$0xf]
    %v295 = vld [vmem:[#allocation5 + $0x118] sm:$0xf]
    %v296 = vld [vmem:[#allocation5 + $0x11c] sm:$0xf]
    %v297 = vld [vmem:[#allocation5 + $0x120] sm:$0xf]
    %v298 = vld [vmem:[#allocation5 + $0x124] sm:$0xf]
    %v299 = vld [vmem:[#allocation5 + $0x128] sm:$0xf]
    %v300 = vld [vmem:[#allocation5 + $0x12c] sm:$0xf]
    %v301 = vld [vmem:[#allocation5 + $0x130] sm:$0xf]
    %v302 = vld [vmem:[#allocation5 + $0x134] sm:$0xf]
    %v303 = vld [vmem:[#allocation5 + $0x138] sm:$0xf]
    %v304 = vld [vmem:[#allocation5 + $0x13c] sm:$0xf]
    %v305 = vld [vmem:[#allocation5 + $0x140] sm:$0xf]
    %v306 = vld [vmem:[#allocation5 + $0x144] sm:$0xf]
    %v307 = vld [vmem:[#allocation5 + $0x148] sm:$0xf]
    %v308 = vld [vmem:[#allocation5 + $0x14c] sm:$0xf]
    %v309 = vld [vmem:[#allocation5 + $0x150] sm:$0xf]
    %v310 = vld [vmem:[#allocation5 + $0x154] sm:$0xf]
    %v311 = vld [vmem:[#allocation5 + $0x158] sm:$0xf]
    %v312 = vld [vmem:[#allocation5 + $0x15c] sm:$0xf]
    %v313 = vld [vmem:[#allocation5 + $0x160] sm:$0xf]
    %v314 = vld [vmem:[#allocation5 + $0x164] sm:$0xf]
    %v315 = vld [vmem:[#allocation5 + $0x168] sm:$0xf]
    %v316 = vld [vmem:[#allocation5 + $0x16c] sm:$0xf]
    %v317 = vld [vmem:[#allocation5 + $0x170] sm:$0xf]
    %v318 = vld [vmem:[#allocation5 + $0x174] sm:$0xf]
    %v319 = vld [vmem:[#allocation5 + $0x178] sm:$0xf]
    %v320 = vld [vmem:[#allocation5 + $0x17c] sm:$0xf]
    %v321 = vld [vmem:[#allocation5 + $0x180] sm:$0xf]
    %v322 = vld [vmem:[#allocation5 + $0x184] sm:$0xf]
    %v323 = vld [vmem:[#allocation5 + $0x188] sm:$0xf]
    %v324 = vld [vmem:[#allocation5 + $0x18c] sm:$0xf]
    %v325 = vld [vmem:[#allocation5 + $0x190] sm:$0xf]
    %v326 = vld [vmem:[#allocation5 + $0x194] sm:$0xf]
    %v327 = vld [vmem:[#allocation5 + $0x198] sm:$0xf]
    %v328 = vld [vmem:[#allocation5 + $0x19c] sm:$0xf]
    %v329 = vld [vmem:[#allocation5 + $0x1a0] sm:$0xf]
    %v330 = vld [vmem:[#allocation5 + $0x1a4] sm:$0xf]
    %v331 = vld [vmem:[#allocation5 + $0x1a8] sm:$0xf]
    %v332 = vld [vmem:[#allocation5 + $0x1ac] sm:$0xf]
    %v333 = vld [vmem:[#allocation5 + $0x1b0] sm:$0xf]
    %v334 = vld [vmem:[#allocation5 + $0x1b4] sm:$0xf]
    %v335 = vld [vmem:[#allocation5 + $0x1b8] sm:$0xf]
    %v336 = vld [vmem:[#allocation5 + $0x1bc] sm:$0xf]
    %v337 = vld [vmem:[#allocation5 + $0x1c0] sm:$0xf]
    %v338 = vld [vmem:[#allocation5 + $0x1c4] sm:$0xf]
    %v339 = vld [vmem:[#allocation5 + $0x1c8] sm:$0xf]
    %v340 = vld [vmem:[#allocation5 + $0x1cc] sm:$0xf]
    %v341 = vld [vmem:[#allocation5 + $0x1d0] sm:$0xf]
    %v342 = vld [vmem:[#allocation5 + $0x1d4] sm:$0xf]
    %v343 = vld [vmem:[#allocation5 + $0x1d8] sm:$0xf]
    %v344 = vld [vmem:[#allocation5 + $0x1dc] sm:$0xf]
    %v345 = vld [vmem:[#allocation5 + $0x1e0] sm:$0xf]
    %v346 = vld [vmem:[#allocation5 + $0x1e4] sm:$0xf]
    %v347 = vld [vmem:[#allocation5 + $0x1e8] sm:$0xf]
    %v348 = vld [vmem:[#allocation5 + $0x1ec] sm:$0xf]
    %v349 = vld [vmem:[#allocation5 + $0x1f0] sm:$0xf]
    %v350 = vld [vmem:[#allocation5 + $0x1f4] sm:$0xf]
    %v351 = vld [vmem:[#allocation5 + $0x1f8] sm:$0xf]
    %v352 = vld [vmem:[#allocation5 + $0x1fc] sm:$0xf]
    %v353 = vld [vmem:[#allocation5 + $0x200] sm:$0xf]
    %v354 = vld [vmem:[#allocation5 + $0x204] sm:$0xf]
    %v355 = vld [vmem:[#allocation5 + $0x208] sm:$0xf]
    %v356 = vld [vmem:[#allocation5 + $0x20c] sm:$0xf]
    %v357 = vld [vmem:[#allocation5 + $0x210] sm:$0xf]
    %v358 = vld [vmem:[#allocation5 + $0x214] sm:$0xf]
    %v359 = vld [vmem:[#allocation5 + $0x218] sm:$0xf]
    %v360 = vld [vmem:[#allocation5 + $0x21c] sm:$0xf]
    %v361 = vld [vmem:[#allocation5 + $0x220] sm:$0xf]
    %v362 = vld [vmem:[#allocation5 + $0x224] sm:$0xf]
    %v363 = vld [vmem:[#allocation5 + $0x228] sm:$0xf]
    %v364 = vld [vmem:[#allocation5 + $0x22c] sm:$0xf]
    %v365 = vld [vmem:[#allocation5 + $0x230] sm:$0xf]
    %v366 = vld [vmem:[#allocation5 + $0x234] sm:$0xf]
    %v367 = vld [vmem:[#allocation5 + $0x238] sm:$0xf]
    %v368 = vld [vmem:[#allocation5 + $0x23c] sm:$0xf]
    %v369 = vld [vmem:[#allocation5 + $0x240] sm:$0xf]
    %v370 = vld [vmem:[#allocation5 + $0x244] sm:$0xf]
    %v371 = vld [vmem:[#allocation5 + $0x248] sm:$0xf]
    %v372 = vld [vmem:[#allocation5 + $0x24c] sm:$0xf]
    %v373 = vld [vmem:[#allocation5 + $0x250] sm:$0xf]
    %v374 = vld [vmem:[#allocation5 + $0x254] sm:$0xf]
    %v375 = vld [vmem:[#allocation5 + $0x258] sm:$0xf]
    %v376 = vld [vmem:[#allocation5 + $0x25c] sm:$0xf]
    %v377 = vld [vmem:[#allocation5 + $0x260] sm:$0xf]
    %v378 = vld [vmem:[#allocation5 + $0x264] sm:$0xf]
    %v379 = vld [vmem:[#allocation5 + $0x268] sm:$0xf]
    %v380 = vld [vmem:[#allocation5 + $0x26c] sm:$0xf]
    %v381 = vld [vmem:[#allocation5 + $0x270] sm:$0xf]
    %v382 = vld [vmem:[#allocation5 + $0x274] sm:$0xf]
    %v383 = vld [vmem:[#allocation5 + $0x278] sm:$0xf]
    %v384 = vld [vmem:[#allocation5 + $0x27c] sm:$0xf]
    %v385 = vld [vmem:[#allocation5 + $0x280] sm:$0xf]
    %v386 = vld [vmem:[#allocation5 + $0x284] sm:$0xf]
    %v387 = vld [vmem:[#allocation5 + $0x288] sm:$0xf]
    %v388 = vld [vmem:[#allocation5 + $0x28c] sm:$0xf]
    %v389 = vld [vmem:[#allocation5 + $0x290] sm:$0xf]
    %v390 = vld [vmem:[#allocation5 + $0x294] sm:$0xf]
    %v391 = vld [vmem:[#allocation5 + $0x298] sm:$0xf]
    %v392 = vld [vmem:[#allocation5 + $0x29c] sm:$0xf]
    %v393 = vld [vmem:[#allocation5 + $0x2a0] sm:$0xf]
    %v394 = vld [vmem:[#allocation5 + $0x2a4] sm:$0xf]
    %v395 = vld [vmem:[#allocation5 + $0x2a8] sm:$0xf]
    %v396 = vld [vmem:[#allocation5 + $0x2ac] sm:$0xf]
    %v397 = vld [vmem:[#allocation5 + $0x2b0] sm:$0xf]
    %v398 = vld [vmem:[#allocation5 + $0x2b4] sm:$0xf]
    %v399 = vld [vmem:[#allocation5 + $0x2b8] sm:$0xf]
    %v400 = vld [vmem:[#allocation5 + $0x2bc] sm:$0xf]
    %v401 = vld [vmem:[#allocation5 + $0x2c0] sm:$0xf]
    %v402 = vld [vmem:[#allocation5 + $0x2c4] sm:$0xf]
    %v403 = vld [vmem:[#allocation5 + $0x2c8] sm:$0xf]
    %v404 = vld [vmem:[#allocation5 + $0x2cc] sm:$0xf]
    %v405 = vld [vmem:[#allocation5 + $0x2d0] sm:$0xf]
    %v406 = vld [vmem:[#allocation5 + $0x2d4] sm:$0xf]
    %v407 = vld [vmem:[#allocation5 + $0x2d8] sm:$0xf]
    %v408 = vld [vmem:[#allocation5 + $0x2dc] sm:$0xf]
    %v409 = vld [vmem:[#allocation5 + $0x2e0] sm:$0xf]
    %v410 = vld [vmem:[#allocation5 + $0x2e4] sm:$0xf]
    %v411 = vld [vmem:[#allocation5 + $0x2e8] sm:$0xf]
    %v412 = vld [vmem:[#allocation5 + $0x2ec] sm:$0xf]
    %v413 = vld [vmem:[#allocation5 + $0x2f0] sm:$0xf]
    %v414 = vld [vmem:[#allocation5 + $0x2f4] sm:$0xf]
    %v415 = vld [vmem:[#allocation5 + $0x2f8] sm:$0xf]
    %v416 = vld [vmem:[#allocation5 + $0x2fc] sm:$0xf]
    %v417 = vld [vmem:[#allocation5 + $0x300] sm:$0xf]
    %v418 = vld [vmem:[#allocation5 + $0x304] sm:$0xf]
    %v419 = vld [vmem:[#allocation5 + $0x308] sm:$0xf]
    %v420 = vld [vmem:[#allocation5 + $0x30c] sm:$0xf]
    %v421 = vld [vmem:[#allocation5 + $0x310] sm:$0xf]
    %v422 = vld [vmem:[#allocation5 + $0x314] sm:$0xf]
    %v423 = vld [vmem:[#allocation5 + $0x318] sm:$0xf]
    %v424 = vld [vmem:[#allocation5 + $0x31c] sm:$0xf]
    %v425 = vld [vmem:[#allocation5 + $0x320] sm:$0xf]
    %v426 = vld [vmem:[#allocation5 + $0x324] sm:$0xf]
    %v427 = vld [vmem:[#allocation5 + $0x328] sm:$0xf]
    %v428 = vld [vmem:[#allocation5 + $0x32c] sm:$0xf]
    %v429 = vld [vmem:[#allocation5 + $0x330] sm:$0xf]
    %v430 = vld [vmem:[#allocation5 + $0x334] sm:$0xf]
    %v431 = vld [vmem:[#allocation5 + $0x338] sm:$0xf]
    %v432 = vld [vmem:[#allocation5 + $0x33c] sm:$0xf]
    %v433 = vld [vmem:[#allocation5 + $0x340] sm:$0xf]
    %v434 = vld [vmem:[#allocation5 + $0x344] sm:$0xf]
    %v435 = vld [vmem:[#allocation5 + $0x348] sm:$0xf]
    %v436 = vld [vmem:[#allocation5 + $0x34c] sm:$0xf]
    %v437 = vld [vmem:[#allocation5 + $0x350] sm:$0xf]
    %v438 = vld [vmem:[#allocation5 + $0x354] sm:$0xf]
    %v439 = vld [vmem:[#allocation5 + $0x358] sm:$0xf]
    %v440 = vld [vmem:[#allocation5 + $0x35c] sm:$0xf]
    %v441 = vld [vmem:[#allocation5 + $0x360] sm:$0xf]
    %v442 = vld [vmem:[#allocation5 + $0x364] sm:$0xf]
    %v443 = vld [vmem:[#allocation5 + $0x368] sm:$0xf]
    %v444 = vld [vmem:[#allocation5 + $0x36c] sm:$0xf]
    %v445 = vld [vmem:[#allocation5 + $0x370] sm:$0xf]
    %v446 = vld [vmem:[#allocation5 + $0x374] sm:$0xf]
    %v447 = vld [vmem:[#allocation5 + $0x378] sm:$0xf]
    %v448 = vld [vmem:[#allocation5 + $0x37c] sm:$0xf]
    %v449 = vld [vmem:[#allocation5 + $0x380] sm:$0xf]
    %v450 = vld [vmem:[#allocation5 + $0x384] sm:$0xf]
    %v451 = vld [vmem:[#allocation5 + $0x388] sm:$0xf]
    %v452 = vld [vmem:[#allocation5 + $0x38c] sm:$0xf]
    %v453 = vld [vmem:[#allocation5 + $0x390] sm:$0xf]
    %v454 = vld [vmem:[#allocation5 + $0x394] sm:$0xf]
    %v455 = vld [vmem:[#allocation5 + $0x398] sm:$0xf]
    %v456 = vld [vmem:[#allocation5 + $0x39c] sm:$0xf]
    %v457 = vld [vmem:[#allocation5 + $0x3a0] sm:$0xf]
    %v458 = vld [vmem:[#allocation5 + $0x3a4] sm:$0xf]
    %v459 = vld [vmem:[#allocation5 + $0x3a8] sm:$0xf]
    %v460 = vld [vmem:[#allocation5 + $0x3ac] sm:$0xf]
    %v461 = vld [vmem:[#allocation5 + $0x3b0] sm:$0xf]
    %v462 = vld [vmem:[#allocation5 + $0x3b4] sm:$0xf]
    %v463 = vld [vmem:[#allocation5 + $0x3b8] sm:$0xf]
    %v464 = vld [vmem:[#allocation5 + $0x3bc] sm:$0xf]
    %v465 = vld [vmem:[#allocation5 + $0x3c0] sm:$0xf]
    %v466 = vld [vmem:[#allocation5 + $0x3c4] sm:$0xf]
    %v467 = vld [vmem:[#allocation5 + $0x3c8] sm:$0xf]
    %v468 = vld [vmem:[#allocation5 + $0x3cc] sm:$0xf]
    %v469 = vld [vmem:[#allocation5 + $0x3d0] sm:$0xf]
    %v470 = vld [vmem:[#allocation5 + $0x3d4] sm:$0xf]
    %v471 = vld [vmem:[#allocation5 + $0x3d8] sm:$0xf]
    %v472 = vld [vmem:[#allocation5 + $0x3dc] sm:$0xf]
    %v473 = vld [vmem:[#allocation5 + $0x3e0] sm:$0xf]
    %v474 = vld [vmem:[#allocation5 + $0x3e4] sm:$0xf]
    %v475 = vld [vmem:[#allocation5 + $0x3e8] sm:$0xf]
    %v476 = vld [vmem:[#allocation5 + $0x3ec] sm:$0xf]
    %v477 = vld [vmem:[#allocation5 + $0x3f0] sm:$0xf]
    %v478 = vld [vmem:[#allocation5 + $0x3f4] sm:$0xf]
    %v479 = vld [vmem:[#allocation5 + $0x3f8] sm:$0xf]
    %v480 = vld [vmem:[#allocation5 + $0x3fc] sm:$0xf]
    %v481 = vld [vmem:[#allocation7] sm:$0xf]
    %v482 = vld [vmem:[#allocation7 + $0x4] sm:$0xf]
    %v483 = vld [vmem:[#allocation7 + $0x8] sm:$0xf]
    %v484 = vld [vmem:[#allocation7 + $0xc] sm:$0xf]
    %v485 = vld [vmem:[#allocation7 + $0x10] sm:$0xf]
    %v486 = vld [vmem:[#allocation7 + $0x14] sm:$0xf]
    %v487 = vld [vmem:[#allocation7 + $0x18] sm:$0xf]
    %v488 = vld [vmem:[#allocation7 + $0x1c] sm:$0xf]
    %v489 = vld [vmem:[#allocation7 + $0x20] sm:$0xf]
    %v490 = vld [vmem:[#allocation7 + $0x24] sm:$0xf]
    %v491 = vld [vmem:[#allocation7 + $0x28] sm:$0xf]
    %v492 = vld [vmem:[#allocation7 + $0x2c] sm:$0xf]
    %v493 = vld [vmem:[#allocation7 + $0x30] sm:$0xf]
    %v494 = vld [vmem:[#allocation7 + $0x34] sm:$0xf]
    %v495 = vld [vmem:[#allocation7 + $0x38] sm:$0xf]
    %v496 = vld [vmem:[#allocation7 + $0x3c] sm:$0xf]
    %v497 = vld [vmem:[#allocation7 + $0x40] sm:$0xf]
    %v498 = vld [vmem:[#allocation7 + $0x44] sm:$0xf]
    %v499 = vld [vmem:[#allocation7 + $0x48] sm:$0xf]
    %v500 = vld [vmem:[#allocation7 + $0x4c] sm:$0xf]
    %v501 = vld [vmem:[#allocation7 + $0x50] sm:$0xf]
    %v502 = vld [vmem:[#allocation7 + $0x54] sm:$0xf]
    %v503 = vld [vmem:[#allocation7 + $0x58] sm:$0xf]
    %v504 = vld [vmem:[#allocation7 + $0x5c] sm:$0xf]
    %v505 = vld [vmem:[#allocation7 + $0x60] sm:$0xf]
    %v506 = vld [vmem:[#allocation7 + $0x64] sm:$0xf]
    %v507 = vld [vmem:[#allocation7 + $0x68] sm:$0xf]
    %v508 = vld [vmem:[#allocation7 + $0x6c] sm:$0xf]
    %v509 = vld [vmem:[#allocation7 + $0x70] sm:$0xf]
    %v510 = vld [vmem:[#allocation7 + $0x74] sm:$0xf]
    %v511 = vld [vmem:[#allocation7 + $0x78] sm:$0xf]
    %v512 = vld [vmem:[#allocation7 + $0x7c] sm:$0xf]
    %v513 = vld [vmem:[#allocation7 + $0x80] sm:$0xf]
    %v514 = vld [vmem:[#allocation7 + $0x84] sm:$0xf]
    %v515 = vld [vmem:[#allocation7 + $0x88] sm:$0xf]
    %v516 = vld [vmem:[#allocation7 + $0x8c] sm:$0xf]
    %v517 = vld [vmem:[#allocation7 + $0x90] sm:$0xf]
    %v518 = vld [vmem:[#allocation7 + $0x94] sm:$0xf]
    %v519 = vld [vmem:[#allocation7 + $0x98] sm:$0xf]
    %v520 = vld [vmem:[#allocation7 + $0x9c] sm:$0xf]
    %v521 = vld [vmem:[#allocation7 + $0xa0] sm:$0xf]
    %v522 = vld [vmem:[#allocation7 + $0xa4] sm:$0xf]
    %v523 = vld [vmem:[#allocation7 + $0xa8] sm:$0xf]
    %v524 = vld [vmem:[#allocation7 + $0xac] sm:$0xf]
    %v525 = vld [vmem:[#allocation7 + $0xb0] sm:$0xf]
    %v526 = vld [vmem:[#allocation7 + $0xb4] sm:$0xf]
    %v527 = vld [vmem:[#allocation7 + $0xb8] sm:$0xf]
    %v528 = vld [vmem:[#allocation7 + $0xbc] sm:$0xf]
    %v529 = vld [vmem:[#allocation7 + $0xc0] sm:$0xf]
    %v530 = vld [vmem:[#allocation7 + $0xc4] sm:$0xf]
    %v531 = vld [vmem:[#allocation7 + $0xc8] sm:$0xf]
    %v532 = vld [vmem:[#allocation7 + $0xcc] sm:$0xf]
    %v533 = vld [vmem:[#allocation7 + $0xd0] sm:$0xf]
    %v534 = vld [vmem:[#allocation7 + $0xd4] sm:$0xf]
    %v535 = vld [vmem:[#allocation7 + $0xd8] sm:$0xf]
    %v536 = vld [vmem:[#allocation7 + $0xdc] sm:$0xf]
    %v537 = vld [vmem:[#allocation7 + $0xe0] sm:$0xf]
    %v538 = vld [vmem:[#allocation7 + $0xe4] sm:$0xf]
    %v539 = vld [vmem:[#allocation7 + $0xe8] sm:$0xf]
    %v540 = vld [vmem:[#allocation7 + $0xec] sm:$0xf]
    %v541 = vld [vmem:[#allocation7 + $0xf0] sm:$0xf]
    %v542 = vld [vmem:[#allocation7 + $0xf4] sm:$0xf]
    %v543 = vld [vmem:[#allocation7 + $0xf8] sm:$0xf]
    %v544 = vld [vmem:[#allocation7 + $0xfc] sm:$0xf]
    %v545 = vld [vmem:[#allocation7 + $0x100] sm:$0xf]
    %v546 = vld [vmem:[#allocation7 + $0x104] sm:$0xf]
    %v547 = vld [vmem:[#allocation7 + $0x108] sm:$0xf]
    %v548 = vld [vmem:[#allocation7 + $0x10c] sm:$0xf]
    %v549 = vld [vmem:[#allocation7 + $0x110] sm:$0xf]
    %v550 = vld [vmem:[#allocation7 + $0x114] sm:$0xf]
    %v551 = vld [vmem:[#allocation7 + $0x118] sm:$0xf]
    %v552 = vld [vmem:[#allocation7 + $0x11c] sm:$0xf]
    %v553 = vld [vmem:[#allocation7 + $0x120] sm:$0xf]
    %v554 = vld [vmem:[#allocation7 + $0x124] sm:$0xf]
    %v555 = vld [vmem:[#allocation7 + $0x128] sm:$0xf]
    %v556 = vld [vmem:[#allocation7 + $0x12c] sm:$0xf]
    %v557 = vld [vmem:[#allocation7 + $0x130] sm:$0xf]
    %v558 = vld [vmem:[#allocation7 + $0x134] sm:$0xf]
    %v559 = vld [vmem:[#allocation7 + $0x138] sm:$0xf]
    %v560 = vld [vmem:[#allocation7 + $0x13c] sm:$0xf]
    %v561 = vld [vmem:[#allocation7 + $0x140] sm:$0xf]
    %v562 = vld [vmem:[#allocation7 + $0x144] sm:$0xf]
    %v563 = vld [vmem:[#allocation7 + $0x148] sm:$0xf]
    %v564 = vld [vmem:[#allocation7 + $0x14c] sm:$0xf]
    %v565 = vld [vmem:[#allocation7 + $0x150] sm:$0xf]
    %v566 = vld [vmem:[#allocation7 + $0x154] sm:$0xf]
    %v567 = vld [vmem:[#allocation7 + $0x158] sm:$0xf]
    %v568 = vld [vmem:[#allocation7 + $0x15c] sm:$0xf]
    %v569 = vld [vmem:[#allocation7 + $0x160] sm:$0xf]
    %v570 = vld [vmem:[#allocation7 + $0x164] sm:$0xf]
    %v571 = vld [vmem:[#allocation7 + $0x168] sm:$0xf]
    %v572 = vld [vmem:[#allocation7 + $0x16c] sm:$0xf]
    %v573 = vld [vmem:[#allocation7 + $0x170] sm:$0xf]
    %v574 = vld [vmem:[#allocation7 + $0x174] sm:$0xf]
    %v575 = vld [vmem:[#allocation7 + $0x178] sm:$0xf]
    %v576 = vld [vmem:[#allocation7 + $0x17c] sm:$0xf]
    %v577 = vld [vmem:[#allocation7 + $0x180] sm:$0xf]
    %v578 = vld [vmem:[#allocation7 + $0x184] sm:$0xf]
    %v579 = vld [vmem:[#allocation7 + $0x188] sm:$0xf]
    %v580 = vld [vmem:[#allocation7 + $0x18c] sm:$0xf]
    %v581 = vld [vmem:[#allocation7 + $0x190] sm:$0xf]
    %v582 = vld [vmem:[#allocation7 + $0x194] sm:$0xf]
    %v583 = vld [vmem:[#allocation7 + $0x198] sm:$0xf]
    %v584 = vld [vmem:[#allocation7 + $0x19c] sm:$0xf]
    %v585 = vld [vmem:[#allocation7 + $0x1a0] sm:$0xf]
    %v586 = vld [vmem:[#allocation7 + $0x1a4] sm:$0xf]
    %v587 = vld [vmem:[#allocation7 + $0x1a8] sm:$0xf]
    %v588 = vld [vmem:[#allocation7 + $0x1ac] sm:$0xf]
    %v589 = vld [vmem:[#allocation7 + $0x1b0] sm:$0xf]
    %v590 = vld [vmem:[#allocation7 + $0x1b4] sm:$0xf]
    %v591 = vld [vmem:[#allocation7 + $0x1b8] sm:$0xf]
    %v592 = vld [vmem:[#allocation7 + $0x1bc] sm:$0xf]
    %v593 = vld [vmem:[#allocation7 + $0x1c0] sm:$0xf]
    %v594 = vld [vmem:[#allocation7 + $0x1c4] sm:$0xf]
    %v595 = vld [vmem:[#allocation7 + $0x1c8] sm:$0xf]
    %v596 = vld [vmem:[#allocation7 + $0x1cc] sm:$0xf]
    %v597 = vld [vmem:[#allocation7 + $0x1d0] sm:$0xf]
    %v598 = vld [vmem:[#allocation7 + $0x1d4] sm:$0xf]
    %v599 = vld [vmem:[#allocation7 + $0x1d8] sm:$0xf]
    %v600 = vld [vmem:[#allocation7 + $0x1dc] sm:$0xf]
    %v601 = vld [vmem:[#allocation7 + $0x1e0] sm:$0xf]
    %v602 = vld [vmem:[#allocation7 + $0x1e4] sm:$0xf]
    %v603 = vld [vmem:[#allocation7 + $0x1e8] sm:$0xf]
    %v604 = vld [vmem:[#allocation7 + $0x1ec] sm:$0xf]
    %v605 = vld [vmem:[#allocation7 + $0x1f0] sm:$0xf]
    %v606 = vld [vmem:[#allocation7 + $0x1f4] sm:$0xf]
    %v607 = vld [vmem:[#allocation7 + $0x1f8] sm:$0xf]
    %v608 = vld [vmem:[#allocation7 + $0x1fc] sm:$0xf]
    %v609 = vld [vmem:[#allocation7 + $0x200] sm:$0xf]
    %v610 = vld [vmem:[#allocation7 + $0x204] sm:$0xf]
    %v611 = vld [vmem:[#allocation7 + $0x208] sm:$0xf]
    %v612 = vld [vmem:[#allocation7 + $0x20c] sm:$0xf]
    %v613 = vld [vmem:[#allocation7 + $0x210] sm:$0xf]
    %v614 = vld [vmem:[#allocation7 + $0x214] sm:$0xf]
    %v615 = vld [vmem:[#allocation7 + $0x218] sm:$0xf]
    %v616 = vld [vmem:[#allocation7 + $0x21c] sm:$0xf]
    %v617 = vld [vmem:[#allocation7 + $0x220] sm:$0xf]
    %v618 = vld [vmem:[#allocation7 + $0x224] sm:$0xf]
    %v619 = vld [vmem:[#allocation7 + $0x228] sm:$0xf]
    %v620 = vld [vmem:[#allocation7 + $0x22c] sm:$0xf]
    %v621 = vld [vmem:[#allocation7 + $0x230] sm:$0xf]
    %v622 = vld [vmem:[#allocation7 + $0x234] sm:$0xf]
    %v623 = vld [vmem:[#allocation7 + $0x238] sm:$0xf]
    %v624 = vld [vmem:[#allocation7 + $0x23c] sm:$0xf]
    %v625 = vld [vmem:[#allocation7 + $0x240] sm:$0xf]
    %v626 = vld [vmem:[#allocation7 + $0x244] sm:$0xf]
    %v627 = vld [vmem:[#allocation7 + $0x248] sm:$0xf]
    %v628 = vld [vmem:[#allocation7 + $0x24c] sm:$0xf]
    %v629 = vld [vmem:[#allocation7 + $0x250] sm:$0xf]
    %v630 = vld [vmem:[#allocation7 + $0x254] sm:$0xf]
    %v631 = vld [vmem:[#allocation7 + $0x258] sm:$0xf]
    %v632 = vld [vmem:[#allocation7 + $0x25c] sm:$0xf]
    %v633 = vld [vmem:[#allocation7 + $0x260] sm:$0xf]
    %v634 = vld [vmem:[#allocation7 + $0x264] sm:$0xf]
    %v635 = vld [vmem:[#allocation7 + $0x268] sm:$0xf]
    %v636 = vld [vmem:[#allocation7 + $0x26c] sm:$0xf]
    %v637 = vld [vmem:[#allocation7 + $0x270] sm:$0xf]
    %v638 = vld [vmem:[#allocation7 + $0x274] sm:$0xf]
    %v639 = vld [vmem:[#allocation7 + $0x278] sm:$0xf]
    %v640 = vld [vmem:[#allocation7 + $0x27c] sm:$0xf]
    %v641 = vld [vmem:[#allocation7 + $0x280] sm:$0xf]
    %v642 = vld [vmem:[#allocation7 + $0x284] sm:$0xf]
    %v643 = vld [vmem:[#allocation7 + $0x288] sm:$0xf]
    %v644 = vld [vmem:[#allocation7 + $0x28c] sm:$0xf]
    %v645 = vld [vmem:[#allocation7 + $0x290] sm:$0xf]
    %v646 = vld [vmem:[#allocation7 + $0x294] sm:$0xf]
    %v647 = vld [vmem:[#allocation7 + $0x298] sm:$0xf]
    %v648 = vld [vmem:[#allocation7 + $0x29c] sm:$0xf]
    %v649 = vld [vmem:[#allocation7 + $0x2a0] sm:$0xf]
    %v650 = vld [vmem:[#allocation7 + $0x2a4] sm:$0xf]
    %v651 = vld [vmem:[#allocation7 + $0x2a8] sm:$0xf]
    %v652 = vld [vmem:[#allocation7 + $0x2ac] sm:$0xf]
    %v653 = vld [vmem:[#allocation7 + $0x2b0] sm:$0xf]
    %v654 = vld [vmem:[#allocation7 + $0x2b4] sm:$0xf]
    %v655 = vld [vmem:[#allocation7 + $0x2b8] sm:$0xf]
    %v656 = vld [vmem:[#allocation7 + $0x2bc] sm:$0xf]
    %v657 = vld [vmem:[#allocation7 + $0x2c0] sm:$0xf]
    %v658 = vld [vmem:[#allocation7 + $0x2c4] sm:$0xf]
    %v659 = vld [vmem:[#allocation7 + $0x2c8] sm:$0xf]
    %v660 = vld [vmem:[#allocation7 + $0x2cc] sm:$0xf]
    %v661 = vld [vmem:[#allocation7 + $0x2d0] sm:$0xf]
    %v662 = vld [vmem:[#allocation7 + $0x2d4] sm:$0xf]
    %v663 = vld [vmem:[#allocation7 + $0x2d8] sm:$0xf]
    %v664 = vld [vmem:[#allocation7 + $0x2dc] sm:$0xf]
    %v665 = vld [vmem:[#allocation7 + $0x2e0] sm:$0xf]
    %v666 = vld [vmem:[#allocation7 + $0x2e4] sm:$0xf]
    %v667 = vld [vmem:[#allocation7 + $0x2e8] sm:$0xf]
    %v668 = vld [vmem:[#allocation7 + $0x2ec] sm:$0xf]
    %v669 = vld [vmem:[#allocation7 + $0x2f0] sm:$0xf]
    %v670 = vld [vmem:[#allocation7 + $0x2f4] sm:$0xf]
    %v671 = vld [vmem:[#allocation7 + $0x2f8] sm:$0xf]
    %v672 = vld [vmem:[#allocation7 + $0x2fc] sm:$0xf]
    %v673 = vld [vmem:[#allocation7 + $0x300] sm:$0xf]
    %v674 = vld [vmem:[#allocation7 + $0x304] sm:$0xf]
    %v675 = vld [vmem:[#allocation7 + $0x308] sm:$0xf]
    %v676 = vld [vmem:[#allocation7 + $0x30c] sm:$0xf]
    %v677 = vld [vmem:[#allocation7 + $0x310] sm:$0xf]
    %v678 = vld [vmem:[#allocation7 + $0x314] sm:$0xf]
    %v679 = vld [vmem:[#allocation7 + $0x318] sm:$0xf]
    %v680 = vld [vmem:[#allocation7 + $0x31c] sm:$0xf]
    %v681 = vld [vmem:[#allocation7 + $0x320] sm:$0xf]
    %v682 = vld [vmem:[#allocation7 + $0x324] sm:$0xf]
    %v683 = vld [vmem:[#allocation7 + $0x328] sm:$0xf]
    %v684 = vld [vmem:[#allocation7 + $0x32c] sm:$0xf]
    %v685 = vld [vmem:[#allocation7 + $0x330] sm:$0xf]
    %v686 = vld [vmem:[#allocation7 + $0x334] sm:$0xf]
    %v687 = vld [vmem:[#allocation7 + $0x338] sm:$0xf]
    %v688 = vld [vmem:[#allocation7 + $0x33c] sm:$0xf]
    %v689 = vld [vmem:[#allocation7 + $0x340] sm:$0xf]
    %v690 = vld [vmem:[#allocation7 + $0x344] sm:$0xf]
    %v691 = vld [vmem:[#allocation7 + $0x348] sm:$0xf]
    %v692 = vld [vmem:[#allocation7 + $0x34c] sm:$0xf]
    %v693 = vld [vmem:[#allocation7 + $0x350] sm:$0xf]
    %v694 = vld [vmem:[#allocation7 + $0x354] sm:$0xf]
    %v695 = vld [vmem:[#allocation7 + $0x358] sm:$0xf]
    %v696 = vld [vmem:[#allocation7 + $0x35c] sm:$0xf]
    %v697 = vld [vmem:[#allocation7 + $0x360] sm:$0xf]
    %v698 = vld [vmem:[#allocation7 + $0x364] sm:$0xf]
    %v699 = vld [vmem:[#allocation7 + $0x368] sm:$0xf]
    %v700 = vld [vmem:[#allocation7 + $0x36c] sm:$0xf]
    %v701 = vld [vmem:[#allocation7 + $0x370] sm:$0xf]
    %v702 = vld [vmem:[#allocation7 + $0x374] sm:$0xf]
    %v703 = vld [vmem:[#allocation7 + $0x378] sm:$0xf]
    %v704 = vld [vmem:[#allocation7 + $0x37c] sm:$0xf]
    %v705 = vld [vmem:[#allocation7 + $0x380] sm:$0xf]
    %v706 = vld [vmem:[#allocation7 + $0x384] sm:$0xf]
    %v707 = vld [vmem:[#allocation7 + $0x388] sm:$0xf]
    %v708 = vld [vmem:[#allocation7 + $0x38c] sm:$0xf]
    %v709 = vld [vmem:[#allocation7 + $0x390] sm:$0xf]
    %v710 = vld [vmem:[#allocation7 + $0x394] sm:$0xf]
    %v711 = vld [vmem:[#allocation7 + $0x398] sm:$0xf]
    %v712 = vld [vmem:[#allocation7 + $0x39c] sm:$0xf]
    %v713 = vld [vmem:[#allocation7 + $0x3a0] sm:$0xf]
    %v714 = vld [vmem:[#allocation7 + $0x3a4] sm:$0xf]
    %v715 = vld [vmem:[#allocation7 + $0x3a8] sm:$0xf]
    %v716 = vld [vmem:[#allocation7 + $0x3ac] sm:$0xf]
    %v717 = vld [vmem:[#allocation7 + $0x3b0] sm:$0xf]
    %v718 = vld [vmem:[#allocation7 + $0x3b4] sm:$0xf]
    %v719 = vld [vmem:[#allocation7 + $0x3b8] sm:$0xf]
    %v720 = vld [vmem:[#allocation7 + $0x3bc] sm:$0xf]
    %v721 = vld [vmem:[#allocation7 + $0x3c0] sm:$0xf]
    %v722 = vld [vmem:[#allocation7 + $0x3c4] sm:$0xf]
    %v723 = vld [vmem:[#allocation7 + $0x3c8] sm:$0xf]
    %v724 = vld [vmem:[#allocation7 + $0x3cc] sm:$0xf]
    %v725 = vld [vmem:[#allocation7 + $0x3d0] sm:$0xf]
    %v726 = vld [vmem:[#allocation7 + $0x3d4] sm:$0xf]
    %v727 = vld [vmem:[#allocation7 + $0x3d8] sm:$0xf]
    %v728 = vld [vmem:[#allocation7 + $0x3dc] sm:$0xf]
    %v729 = vld [vmem:[#allocation7 + $0x3e0] sm:$0xf]
    %v730 = vld [vmem:[#allocation7 + $0x3e4] sm:$0xf]
    %v731 = vld [vmem:[#allocation7 + $0x3e8] sm:$0xf]
    %v732 = vld [vmem:[#allocation7 + $0x3ec] sm:$0xf]
    %v733 = vld [vmem:[#allocation7 + $0x3f0] sm:$0xf]
    %v734 = vld [vmem:[#allocation7 + $0x3f4] sm:$0xf]
    %v735 = vld [vmem:[#allocation7 + $0x3f8] sm:$0xf]
    %v736 = vld [vmem:[#allocation7 + $0x3fc] sm:$0xf]
    %v993 = vunpack.c.l.b16 %v225
    %v994 = vunpack.c.l.b16 %v226
    %v995 = vunpack.c.l.b16 %v227
    %v996 = vunpack.c.l.b16 %v228
    %v997 = vunpack.c.l.b16 %v229
    %v998 = vunpack.c.l.b16 %v230
    %v999 = vunpack.c.l.b16 %v231
    %v1000 = vunpack.c.l.b16 %v232
    %v1001 = vunpack.c.l.b16 %v233
    %v1002 = vunpack.c.l.b16 %v234
    %v1003 = vunpack.c.l.b16 %v235
    %v1004 = vunpack.c.l.b16 %v236
    %v1005 = vunpack.c.l.b16 %v237
    %v1006 = vunpack.c.l.b16 %v238
    %v1007 = vunpack.c.l.b16 %v239
    %v1008 = vunpack.c.l.b16 %v240
    %v1009 = vunpack.c.l.b16 %v241
    %v1010 = vunpack.c.l.b16 %v242
    %v1011 = vunpack.c.l.b16 %v243
    %v1012 = vunpack.c.l.b16 %v244
    %v1013 = vunpack.c.l.b16 %v245
    %v1014 = vunpack.c.l.b16 %v246
    %v1015 = vunpack.c.l.b16 %v247
    %v1016 = vunpack.c.l.b16 %v248
    %v1017 = vunpack.c.l.b16 %v249
    %v1018 = vunpack.c.l.b16 %v250
    %v1019 = vunpack.c.l.b16 %v251
    %v1020 = vunpack.c.l.b16 %v252
    %v1021 = vunpack.c.l.b16 %v253
    %v1022 = vunpack.c.l.b16 %v254
    %v1023 = vunpack.c.l.b16 %v255
    %v1024 = vunpack.c.l.b16 %v256
    %v1025 = vunpack.c.l.b16 %v257
    %v1026 = vunpack.c.l.b16 %v258
    %v1027 = vunpack.c.l.b16 %v259
    %v1028 = vunpack.c.l.b16 %v260
    %v1029 = vunpack.c.l.b16 %v261
    %v1030 = vunpack.c.l.b16 %v262
    %v1031 = vunpack.c.l.b16 %v263
    %v1032 = vunpack.c.l.b16 %v264
    %v1033 = vunpack.c.l.b16 %v265
    %v1034 = vunpack.c.l.b16 %v266
    %v1035 = vunpack.c.l.b16 %v267
    %v1036 = vunpack.c.l.b16 %v268
    %v1037 = vunpack.c.l.b16 %v269
    %v1038 = vunpack.c.l.b16 %v270
    %v1039 = vunpack.c.l.b16 %v271
    %v1040 = vunpack.c.l.b16 %v272
    %v1041 = vunpack.c.l.b16 %v273
    %v1042 = vunpack.c.l.b16 %v274
    %v1043 = vunpack.c.l.b16 %v275
    %v1044 = vunpack.c.l.b16 %v276
    %v1045 = vunpack.c.l.b16 %v277
    %v1046 = vunpack.c.l.b16 %v278
    %v1047 = vunpack.c.l.b16 %v279
    %v1048 = vunpack.c.l.b16 %v280
    %v1049 = vunpack.c.l.b16 %v281
    %v1050 = vunpack.c.l.b16 %v282
    %v1051 = vunpack.c.l.b16 %v283
    %v1052 = vunpack.c.l.b16 %v284
    %v1053 = vunpack.c.l.b16 %v285
    %v1054 = vunpack.c.l.b16 %v286
    %v1055 = vunpack.c.l.b16 %v287
    %v1056 = vunpack.c.l.b16 %v288
    %v1057 = vunpack.c.l.b16 %v289
    %v1058 = vunpack.c.l.b16 %v290
    %v1059 = vunpack.c.l.b16 %v291
    %v1060 = vunpack.c.l.b16 %v292
    %v1061 = vunpack.c.l.b16 %v293
    %v1062 = vunpack.c.l.b16 %v294
    %v1063 = vunpack.c.l.b16 %v295
    %v1064 = vunpack.c.l.b16 %v296
    %v1065 = vunpack.c.l.b16 %v297
    %v1066 = vunpack.c.l.b16 %v298
    %v1067 = vunpack.c.l.b16 %v299
    %v1068 = vunpack.c.l.b16 %v300
    %v1069 = vunpack.c.l.b16 %v301
    %v1070 = vunpack.c.l.b16 %v302
    %v1071 = vunpack.c.l.b16 %v303
    %v1072 = vunpack.c.l.b16 %v304
    %v1073 = vunpack.c.l.b16 %v305
    %v1074 = vunpack.c.l.b16 %v306
    %v1075 = vunpack.c.l.b16 %v307
    %v1076 = vunpack.c.l.b16 %v308
    %v1077 = vunpack.c.l.b16 %v309
    %v1078 = vunpack.c.l.b16 %v310
    %v1079 = vunpack.c.l.b16 %v311
    %v1080 = vunpack.c.l.b16 %v312
    %v1081 = vunpack.c.l.b16 %v313
    %v1082 = vunpack.c.l.b16 %v314
    %v1083 = vunpack.c.l.b16 %v315
    %v1084 = vunpack.c.l.b16 %v316
    %v1085 = vunpack.c.l.b16 %v317
    %v1086 = vunpack.c.l.b16 %v318
    %v1087 = vunpack.c.l.b16 %v319
    %v1088 = vunpack.c.l.b16 %v320
    %v1089 = vunpack.c.l.b16 %v321
    %v1090 = vunpack.c.l.b16 %v322
    %v1091 = vunpack.c.l.b16 %v323
    %v1092 = vunpack.c.l.b16 %v324
    %v1093 = vunpack.c.l.b16 %v325
    %v1094 = vunpack.c.l.b16 %v326
    %v1095 = vunpack.c.l.b16 %v327
    %v1096 = vunpack.c.l.b16 %v328
    %v1097 = vunpack.c.l.b16 %v329
    %v1098 = vunpack.c.l.b16 %v330
    %v1099 = vunpack.c.l.b16 %v331
    %v1100 = vunpack.c.l.b16 %v332
    %v1101 = vunpack.c.l.b16 %v333
    %v1102 = vunpack.c.l.b16 %v334
    %v1103 = vunpack.c.l.b16 %v335
    %v1104 = vunpack.c.l.b16 %v336
    %v1105 = vunpack.c.l.b16 %v337
    %v1106 = vunpack.c.l.b16 %v338
    %v1107 = vunpack.c.l.b16 %v339
    %v1108 = vunpack.c.l.b16 %v340
    %v1109 = vunpack.c.l.b16 %v341
    %v1110 = vunpack.c.l.b16 %v342
    %v1111 = vunpack.c.l.b16 %v343
    %v1112 = vunpack.c.l.b16 %v344
    %v1113 = vunpack.c.l.b16 %v345
    %v1114 = vunpack.c.l.b16 %v346
    %v1115 = vunpack.c.l.b16 %v347
    %v1116 = vunpack.c.l.b16 %v348
    %v1117 = vunpack.c.l.b16 %v349
    %v1118 = vunpack.c.l.b16 %v350
    %v1119 = vunpack.c.l.b16 %v351
    %v1120 = vunpack.c.l.b16 %v352
    %v1121 = vunpack.c.l.b16 %v353
    %v1122 = vunpack.c.l.b16 %v354
    %v1123 = vunpack.c.l.b16 %v355
    %v1124 = vunpack.c.l.b16 %v356
    %v1125 = vunpack.c.l.b16 %v357
    %v1126 = vunpack.c.l.b16 %v358
    %v1127 = vunpack.c.l.b16 %v359
    %v1128 = vunpack.c.l.b16 %v360
    %v1129 = vunpack.c.l.b16 %v361
    %v1130 = vunpack.c.l.b16 %v362
    %v1131 = vunpack.c.l.b16 %v363
    %v1132 = vunpack.c.l.b16 %v364
    %v1133 = vunpack.c.l.b16 %v365
    %v1134 = vunpack.c.l.b16 %v366
    %v1135 = vunpack.c.l.b16 %v367
    %v1136 = vunpack.c.l.b16 %v368
    %v1137 = vunpack.c.l.b16 %v369
    %v1138 = vunpack.c.l.b16 %v370
    %v1139 = vunpack.c.l.b16 %v371
    %v1140 = vunpack.c.l.b16 %v372
    %v1141 = vunpack.c.l.b16 %v373
    %v1142 = vunpack.c.l.b16 %v374
    %v1143 = vunpack.c.l.b16 %v375
    %v1144 = vunpack.c.l.b16 %v376
    %v1145 = vunpack.c.l.b16 %v377
    %v1146 = vunpack.c.l.b16 %v378
    %v1147 = vunpack.c.l.b16 %v379
    %v1148 = vunpack.c.l.b16 %v380
    %v1149 = vunpack.c.l.b16 %v381
    %v1150 = vunpack.c.l.b16 %v382
    %v1151 = vunpack.c.l.b16 %v383
    %v1152 = vunpack.c.l.b16 %v384
    %v1153 = vunpack.c.l.b16 %v385
    %v1154 = vunpack.c.l.b16 %v386
    %v1155 = vunpack.c.l.b16 %v387
    %v1156 = vunpack.c.l.b16 %v388
    %v1157 = vunpack.c.l.b16 %v389
    %v1158 = vunpack.c.l.b16 %v390
    %v1159 = vunpack.c.l.b16 %v391
    %v1160 = vunpack.c.l.b16 %v392
    %v1161 = vunpack.c.l.b16 %v393
    %v1162 = vunpack.c.l.b16 %v394
    %v1163 = vunpack.c.l.b16 %v395
    %v1164 = vunpack.c.l.b16 %v396
    %v1165 = vunpack.c.l.b16 %v397
    %v1166 = vunpack.c.l.b16 %v398
    %v1167 = vunpack.c.l.b16 %v399
    %v1168 = vunpack.c.l.b16 %v400
    %v1169 = vunpack.c.l.b16 %v401
    %v1170 = vunpack.c.l.b16 %v402
    %v1171 = vunpack.c.l.b16 %v403
    %v1172 = vunpack.c.l.b16 %v404
    %v1173 = vunpack.c.l.b16 %v405
    %v1174 = vunpack.c.l.b16 %v406
    %v1175 = vunpack.c.l.b16 %v407
    %v1176 = vunpack.c.l.b16 %v408
    %v1177 = vunpack.c.l.b16 %v409
    %v1178 = vunpack.c.l.b16 %v410
    %v1179 = vunpack.c.l.b16 %v411
    %v1180 = vunpack.c.l.b16 %v412
    %v1181 = vunpack.c.l.b16 %v413
    %v1182 = vunpack.c.l.b16 %v414
    %v1183 = vunpack.c.l.b16 %v415
    %v1184 = vunpack.c.l.b16 %v416
    %v1185 = vunpack.c.l.b16 %v417
    %v1186 = vunpack.c.l.b16 %v418
    %v1187 = vunpack.c.l.b16 %v419
    %v1188 = vunpack.c.l.b16 %v420
    %v1189 = vunpack.c.l.b16 %v421
    %v1190 = vunpack.c.l.b16 %v422
    %v1191 = vunpack.c.l.b16 %v423
    %v1192 = vunpack.c.l.b16 %v424
    %v1193 = vunpack.c.l.b16 %v425
    %v1194 = vunpack.c.l.b16 %v426
    %v1195 = vunpack.c.l.b16 %v427
    %v1196 = vunpack.c.l.b16 %v428
    %v1197 = vunpack.c.l.b16 %v429
    %v1198 = vunpack.c.l.b16 %v430
    %v1199 = vunpack.c.l.b16 %v431
    %v1200 = vunpack.c.l.b16 %v432
    %v1201 = vunpack.c.l.b16 %v433
    %v1202 = vunpack.c.l.b16 %v434
    %v1203 = vunpack.c.l.b16 %v435
    %v1204 = vunpack.c.l.b16 %v436
    %v1205 = vunpack.c.l.b16 %v437
    %v1206 = vunpack.c.l.b16 %v438
    %v1207 = vunpack.c.l.b16 %v439
    %v1208 = vunpack.c.l.b16 %v440
    %v1209 = vunpack.c.l.b16 %v441
    %v1210 = vunpack.c.l.b16 %v442
    %v1211 = vunpack.c.l.b16 %v443
    %v1212 = vunpack.c.l.b16 %v444
    %v1213 = vunpack.c.l.b16 %v445
    %v1214 = vunpack.c.l.b16 %v446
    %v1215 = vunpack.c.l.b16 %v447
    %v1216 = vunpack.c.l.b16 %v448
    %v1217 = vunpack.c.l.b16 %v449
    %v1218 = vunpack.c.l.b16 %v450
    %v1219 = vunpack.c.l.b16 %v451
    %v1220 = vunpack.c.l.b16 %v452
    %v1221 = vunpack.c.l.b16 %v453
    %v1222 = vunpack.c.l.b16 %v454
    %v1223 = vunpack.c.l.b16 %v455
    %v1224 = vunpack.c.l.b16 %v456
    %v1225 = vunpack.c.l.b16 %v457
    %v1226 = vunpack.c.l.b16 %v458
    %v1227 = vunpack.c.l.b16 %v459
    %v1228 = vunpack.c.l.b16 %v460
    %v1229 = vunpack.c.l.b16 %v461
    %v1230 = vunpack.c.l.b16 %v462
    %v1231 = vunpack.c.l.b16 %v463
    %v1232 = vunpack.c.l.b16 %v464
    %v1233 = vunpack.c.l.b16 %v465
    %v1234 = vunpack.c.l.b16 %v466
    %v1235 = vunpack.c.l.b16 %v467
    %v1236 = vunpack.c.l.b16 %v468
    %v1237 = vunpack.c.l.b16 %v469
    %v1238 = vunpack.c.l.b16 %v470
    %v1239 = vunpack.c.l.b16 %v471
    %v1240 = vunpack.c.l.b16 %v472
    %v1241 = vunpack.c.l.b16 %v473
    %v1242 = vunpack.c.l.b16 %v474
    %v1243 = vunpack.c.l.b16 %v475
    %v1244 = vunpack.c.l.b16 %v476
    %v1245 = vunpack.c.l.b16 %v477
    %v1246 = vunpack.c.l.b16 %v478
    %v1247 = vunpack.c.l.b16 %v479
    %v1248 = vunpack.c.l.b16 %v480
    %v1249 = vpack.c.b16 %v994, %v993
    %v1250 = vpack.c.b16 %v996, %v995
    %v1251 = vpack.c.b16 %v998, %v997
    %v1252 = vpack.c.b16 %v1000, %v999
    %v1253 = vpack.c.b16 %v1002, %v1001
    %v1254 = vpack.c.b16 %v1004, %v1003
    %v1255 = vpack.c.b16 %v1006, %v1005
    %v1256 = vpack.c.b16 %v1008, %v1007
    %v1257 = vpack.c.b16 %v1010, %v1009
    %v1258 = vpack.c.b16 %v1012, %v1011
    %v1259 = vpack.c.b16 %v1014, %v1013
    %v1260 = vpack.c.b16 %v1016, %v1015
    %v1261 = vpack.c.b16 %v1018, %v1017
    %v1262 = vpack.c.b16 %v1020, %v1019
    %v1263 = vpack.c.b16 %v1022, %v1021
    %v1264 = vpack.c.b16 %v1024, %v1023
    %v1265 = vpack.c.b16 %v1026, %v1025
    %v1266 = vpack.c.b16 %v1028, %v1027
    %v1267 = vpack.c.b16 %v1030, %v1029
    %v1268 = vpack.c.b16 %v1032, %v1031
    %v1269 = vpack.c.b16 %v1034, %v1033
    %v1270 = vpack.c.b16 %v1036, %v1035
    %v1271 = vpack.c.b16 %v1038, %v1037
    %v1272 = vpack.c.b16 %v1040, %v1039
    %v1273 = vpack.c.b16 %v1042, %v1041
    %v1274 = vpack.c.b16 %v1044, %v1043
    %v1275 = vpack.c.b16 %v1046, %v1045
    %v1276 = vpack.c.b16 %v1048, %v1047
    %v1277 = vpack.c.b16 %v1050, %v1049
    %v1278 = vpack.c.b16 %v1052, %v1051
    %v1279 = vpack.c.b16 %v1054, %v1053
    %v1280 = vpack.c.b16 %v1056, %v1055
    %v1281 = vpack.c.b16 %v1058, %v1057
    %v1282 = vpack.c.b16 %v1060, %v1059
    %v1283 = vpack.c.b16 %v1062, %v1061
    %v1284 = vpack.c.b16 %v1064, %v1063
    %v1285 = vpack.c.b16 %v1066, %v1065
    %v1286 = vpack.c.b16 %v1068, %v1067
    %v1287 = vpack.c.b16 %v1070, %v1069
    %v1288 = vpack.c.b16 %v1072, %v1071
    %v1289 = vpack.c.b16 %v1074, %v1073
    %v1290 = vpack.c.b16 %v1076, %v1075
    %v1291 = vpack.c.b16 %v1078, %v1077
    %v1292 = vpack.c.b16 %v1080, %v1079
    %v1293 = vpack.c.b16 %v1082, %v1081
    %v1294 = vpack.c.b16 %v1084, %v1083
    %v1295 = vpack.c.b16 %v1086, %v1085
    %v1296 = vpack.c.b16 %v1088, %v1087
    %v1297 = vpack.c.b16 %v1090, %v1089
    %v1298 = vpack.c.b16 %v1092, %v1091
    %v1299 = vpack.c.b16 %v1094, %v1093
    %v1300 = vpack.c.b16 %v1096, %v1095
    %v1301 = vpack.c.b16 %v1098, %v1097
    %v1302 = vpack.c.b16 %v1100, %v1099
    %v1303 = vpack.c.b16 %v1102, %v1101
    %v1304 = vpack.c.b16 %v1104, %v1103
    %v1305 = vpack.c.b16 %v1106, %v1105
    %v1306 = vpack.c.b16 %v1108, %v1107
    %v1307 = vpack.c.b16 %v1110, %v1109
    %v1308 = vpack.c.b16 %v1112, %v1111
    %v1309 = vpack.c.b16 %v1114, %v1113
    %v1310 = vpack.c.b16 %v1116, %v1115
    %v1311 = vpack.c.b16 %v1118, %v1117
    %v1312 = vpack.c.b16 %v1120, %v1119
    %v1313 = vpack.c.b16 %v1122, %v1121
    %v1314 = vpack.c.b16 %v1124, %v1123
    %v1315 = vpack.c.b16 %v1126, %v1125
    %v1316 = vpack.c.b16 %v1128, %v1127
    %v1317 = vpack.c.b16 %v1130, %v1129
    %v1318 = vpack.c.b16 %v1132, %v1131
    %v1319 = vpack.c.b16 %v1134, %v1133
    %v1320 = vpack.c.b16 %v1136, %v1135
    %v1321 = vpack.c.b16 %v1138, %v1137
    %v1322 = vpack.c.b16 %v1140, %v1139
    %v1323 = vpack.c.b16 %v1142, %v1141
    %v1324 = vpack.c.b16 %v1144, %v1143
    %v1325 = vpack.c.b16 %v1146, %v1145
    %v1326 = vpack.c.b16 %v1148, %v1147
    %v1327 = vpack.c.b16 %v1150, %v1149
    %v1328 = vpack.c.b16 %v1152, %v1151
    %v1329 = vpack.c.b16 %v1154, %v1153
    %v1330 = vpack.c.b16 %v1156, %v1155
    %v1331 = vpack.c.b16 %v1158, %v1157
    %v1332 = vpack.c.b16 %v1160, %v1159
    %v1333 = vpack.c.b16 %v1162, %v1161
    %v1334 = vpack.c.b16 %v1164, %v1163
    %v1335 = vpack.c.b16 %v1166, %v1165
    %v1336 = vpack.c.b16 %v1168, %v1167
    %v1337 = vpack.c.b16 %v1170, %v1169
    %v1338 = vpack.c.b16 %v1172, %v1171
    %v1339 = vpack.c.b16 %v1174, %v1173
    %v1340 = vpack.c.b16 %v1176, %v1175
    %v1341 = vpack.c.b16 %v1178, %v1177
    %v1342 = vpack.c.b16 %v1180, %v1179
    %v1343 = vpack.c.b16 %v1182, %v1181
    %v1344 = vpack.c.b16 %v1184, %v1183
    %v1345 = vpack.c.b16 %v1186, %v1185
    %v1346 = vpack.c.b16 %v1188, %v1187
    %v1347 = vpack.c.b16 %v1190, %v1189
    %v1348 = vpack.c.b16 %v1192, %v1191
    %v1349 = vpack.c.b16 %v1194, %v1193
    %v1350 = vpack.c.b16 %v1196, %v1195
    %v1351 = vpack.c.b16 %v1198, %v1197
    %v1352 = vpack.c.b16 %v1200, %v1199
    %v1353 = vpack.c.b16 %v1202, %v1201
    %v1354 = vpack.c.b16 %v1204, %v1203
    %v1355 = vpack.c.b16 %v1206, %v1205
    %v1356 = vpack.c.b16 %v1208, %v1207
    %v1357 = vpack.c.b16 %v1210, %v1209
    %v1358 = vpack.c.b16 %v1212, %v1211
    %v1359 = vpack.c.b16 %v1214, %v1213
    %v1360 = vpack.c.b16 %v1216, %v1215
    %v1361 = vpack.c.b16 %v1218, %v1217
    %v1362 = vpack.c.b16 %v1220, %v1219
    %v1363 = vpack.c.b16 %v1222, %v1221
    %v1364 = vpack.c.b16 %v1224, %v1223
    %v1365 = vpack.c.b16 %v1226, %v1225
    %v1366 = vpack.c.b16 %v1228, %v1227
    %v1367 = vpack.c.b16 %v1230, %v1229
    %v1368 = vpack.c.b16 %v1232, %v1231
    %v1369 = vpack.c.b16 %v1234, %v1233
    %v1370 = vpack.c.b16 %v1236, %v1235
    %v1371 = vpack.c.b16 %v1238, %v1237
    %v1372 = vpack.c.b16 %v1240, %v1239
    %v1373 = vpack.c.b16 %v1242, %v1241
    %v1374 = vpack.c.b16 %v1244, %v1243
    %v1375 = vpack.c.b16 %v1246, %v1245
    %v1376 = vpack.c.b16 %v1248, %v1247
    %1505 = vmatpush.bf16.msra.mxu0 %v1256
    %1506 = vmatpush.bf16.msra.mxu0 %v1255
    %1507 = vmatpush.bf16.msra.mxu0 %v1254
    %1508 = vmatpush.bf16.msra.mxu0 %v1253
    %1509 = vmatpush.bf16.msra.mxu0 %v1252
    %1510 = vmatpush.bf16.msra.mxu0 %v1251
    %1511 = vmatpush.bf16.msra.mxu0 %v1250
    %1512 = vmatpush.bf16.msra.mxu0 %v1249
    %1513 = vmatmul.bf16.gmra.mxu0 %v209
    %v1514 = vpop.f32.mrf.mxu0
    %v1515 = vadd.f32 0.0, %v1514
    %v1516 = vpop.f32.mrf.mxu0
    %1517 = vdwg.mxu0
    %1518 = vmatpush.bf16.msra.mxu0 %v1264
    %1519 = vmatpush.bf16.msra.mxu0 %v1263
    %1520 = vmatpush.bf16.msra.mxu0 %v1262
    %1521 = vmatpush.bf16.msra.mxu0 %v1261
    %1522 = vmatpush.bf16.msra.mxu0 %v1260
    %1523 = vmatpush.bf16.msra.mxu0 %v1259
    %1524 = vmatpush.bf16.msra.mxu0 %v1258
    %1525 = vmatpush.bf16.msra.mxu0 %v1257
    %1526 = vmatmul.bf16.gmra.mxu0 %v210
    %v1527 = vpop.f32.mrf.mxu0
    %v1528 = vadd.f32 %v1515, %v1527
    %v1529 = vpop.f32.mrf.mxu0
    %1530 = vdwg.mxu0
    %1531 = vmatpush.bf16.msra.mxu0 %v1272
    %1532 = vmatpush.bf16.msra.mxu0 %v1271
    %1533 = vmatpush.bf16.msra.mxu0 %v1270
    %1534 = vmatpush.bf16.msra.mxu0 %v1269
    %1535 = vmatpush.bf16.msra.mxu0 %v1268
    %1536 = vmatpush.bf16.msra.mxu0 %v1267
    %1537 = vmatpush.bf16.msra.mxu0 %v1266
    %1538 = vmatpush.bf16.msra.mxu0 %v1265
    %1539 = vmatmul.bf16.gmra.mxu0 %v211
    %v1540 = vpop.f32.mrf.mxu0
    %v1541 = vadd.f32 %v1528, %v1540
    %v1542 = vpop.f32.mrf.mxu0
    %1543 = vdwg.mxu0
    %1544 = vmatpush.bf16.msra.mxu0 %v1280
    %1545 = vmatpush.bf16.msra.mxu0 %v1279
    %1546 = vmatpush.bf16.msra.mxu0 %v1278
    %1547 = vmatpush.bf16.msra.mxu0 %v1277
    %1548 = vmatpush.bf16.msra.mxu0 %v1276
    %1549 = vmatpush.bf16.msra.mxu0 %v1275
    %1550 = vmatpush.bf16.msra.mxu0 %v1274
    %1551 = vmatpush.bf16.msra.mxu0 %v1273
    %1552 = vmatmul.bf16.gmra.mxu0 %v212
    %v1553 = vpop.f32.mrf.mxu0
    %v1554 = vadd.f32 %v1541, %v1553
    %v1555 = vpop.f32.mrf.mxu0
    %1556 = vdwg.mxu0
    %1557 = vmatpush.bf16.msra.mxu0 %v1288
    %1558 = vmatpush.bf16.msra.mxu0 %v1287
    %1559 = vmatpush.bf16.msra.mxu0 %v1286
    %1560 = vmatpush.bf16.msra.mxu0 %v1285
    %1561 = vmatpush.bf16.msra.mxu0 %v1284
    %1562 = vmatpush.bf16.msra.mxu0 %v1283
    %1563 = vmatpush.bf16.msra.mxu0 %v1282
    %1564 = vmatpush.bf16.msra.mxu0 %v1281
    %1565 = vmatmul.bf16.gmra.mxu0 %v213
    %v1566 = vpop.f32.mrf.mxu0
    %v1567 = vadd.f32 %v1554, %v1566
    %v1568 = vpop.f32.mrf.mxu0
    %1569 = vdwg.mxu0
    %1570 = vmatpush.bf16.msra.mxu0 %v1296
    %1571 = vmatpush.bf16.msra.mxu0 %v1295
    %1572 = vmatpush.bf16.msra.mxu0 %v1294
    %1573 = vmatpush.bf16.msra.mxu0 %v1293
    %1574 = vmatpush.bf16.msra.mxu0 %v1292
    %1575 = vmatpush.bf16.msra.mxu0 %v1291
    %1576 = vmatpush.bf16.msra.mxu0 %v1290
    %1577 = vmatpush.bf16.msra.mxu0 %v1289
    %1578 = vmatmul.bf16.gmra.mxu0 %v214
    %v1579 = vpop.f32.mrf.mxu0
    %v1580 = vadd.f32 %v1567, %v1579
    %v1581 = vpop.f32.mrf.mxu0
    %1582 = vdwg.mxu0
    %1583 = vmatpush.bf16.msra.mxu0 %v1304
    %1584 = vmatpush.bf16.msra.mxu0 %v1303
    %1585 = vmatpush.bf16.msra.mxu0 %v1302
    %1586 = vmatpush.bf16.msra.mxu0 %v1301
    %1587 = vmatpush.bf16.msra.mxu0 %v1300
    %1588 = vmatpush.bf16.msra.mxu0 %v1299
    %1589 = vmatpush.bf16.msra.mxu0 %v1298
    %1590 = vmatpush.bf16.msra.mxu0 %v1297
    %1591 = vmatmul.bf16.gmra.mxu0 %v215
    %v1592 = vpop.f32.mrf.mxu0
    %v1593 = vadd.f32 %v1580, %v1592
    %v1594 = vpop.f32.mrf.mxu0
    %1595 = vdwg.mxu0
    %1596 = vmatpush.bf16.msra.mxu0 %v1312
    %1597 = vmatpush.bf16.msra.mxu0 %v1311
    %1598 = vmatpush.bf16.msra.mxu0 %v1310
    %1599 = vmatpush.bf16.msra.mxu0 %v1309
    %1600 = vmatpush.bf16.msra.mxu0 %v1308
    %1601 = vmatpush.bf16.msra.mxu0 %v1307
    %1602 = vmatpush.bf16.msra.mxu0 %v1306
    %1603 = vmatpush.bf16.msra.mxu0 %v1305
    %1604 = vmatmul.bf16.gmra.mxu0 %v216
    %v1605 = vpop.f32.mrf.mxu0
    %v1606 = vadd.f32 %v1593, %v1605
    %v1607 = vpop.f32.mrf.mxu0
    %1608 = vdwg.mxu0
    %1609 = vmatpush.bf16.msra.mxu0 %v1320
    %1610 = vmatpush.bf16.msra.mxu0 %v1319
    %1611 = vmatpush.bf16.msra.mxu0 %v1318
    %1612 = vmatpush.bf16.msra.mxu0 %v1317
    %1613 = vmatpush.bf16.msra.mxu0 %v1316
    %1614 = vmatpush.bf16.msra.mxu0 %v1315
    %1615 = vmatpush.bf16.msra.mxu0 %v1314
    %1616 = vmatpush.bf16.msra.mxu0 %v1313
    %1617 = vmatmul.bf16.gmra.mxu0 %v217
    %v1618 = vpop.f32.mrf.mxu0
    %v1619 = vadd.f32 %v1606, %v1618
    %v1620 = vpop.f32.mrf.mxu0
    %1621 = vdwg.mxu0
    %1622 = vmatpush.bf16.msra.mxu0 %v1328
    %1623 = vmatpush.bf16.msra.mxu0 %v1327
    %1624 = vmatpush.bf16.msra.mxu0 %v1326
    %1625 = vmatpush.bf16.msra.mxu0 %v1325
    %1626 = vmatpush.bf16.msra.mxu0 %v1324
    %1627 = vmatpush.bf16.msra.mxu0 %v1323
    %1628 = vmatpush.bf16.msra.mxu0 %v1322
    %1629 = vmatpush.bf16.msra.mxu0 %v1321
    %1630 = vmatmul.bf16.gmra.mxu0 %v218
    %v1631 = vpop.f32.mrf.mxu0
    %v1632 = vadd.f32 %v1619, %v1631
    %v1633 = vpop.f32.mrf.mxu0
    %1634 = vdwg.mxu0
    %1635 = vmatpush.bf16.msra.mxu0 %v1336
    %1636 = vmatpush.bf16.msra.mxu0 %v1335
    %1637 = vmatpush.bf16.msra.mxu0 %v1334
    %1638 = vmatpush.bf16.msra.mxu0 %v1333
    %1639 = vmatpush.bf16.msra.mxu0 %v1332
    %1640 = vmatpush.bf16.msra.mxu0 %v1331
    %1641 = vmatpush.bf16.msra.mxu0 %v1330
    %1642 = vmatpush.bf16.msra.mxu0 %v1329
    %1643 = vmatmul.bf16.gmra.mxu0 %v219
    %v1644 = vpop.f32.mrf.mxu0
    %v1645 = vadd.f32 %v1632, %v1644
    %v1646 = vpop.f32.mrf.mxu0
    %1647 = vdwg.mxu0
    %1648 = vmatpush.bf16.msra.mxu0 %v1344
    %1649 = vmatpush.bf16.msra.mxu0 %v1343
    %1650 = vmatpush.bf16.msra.mxu0 %v1342
    %1651 = vmatpush.bf16.msra.mxu0 %v1341
    %1652 = vmatpush.bf16.msra.mxu0 %v1340
    %1653 = vmatpush.bf16.msra.mxu0 %v1339
    %1654 = vmatpush.bf16.msra.mxu0 %v1338
    %1655 = vmatpush.bf16.msra.mxu0 %v1337
    %1656 = vmatmul.bf16.gmra.mxu0 %v220
    %v1657 = vpop.f32.mrf.mxu0
    %v1658 = vadd.f32 %v1645, %v1657
    %v1659 = vpop.f32.mrf.mxu0
    %1660 = vdwg.mxu0
    %1661 = vmatpush.bf16.msra.mxu0 %v1352
    %1662 = vmatpush.bf16.msra.mxu0 %v1351
    %1663 = vmatpush.bf16.msra.mxu0 %v1350
    %1664 = vmatpush.bf16.msra.mxu0 %v1349
    %1665 = vmatpush.bf16.msra.mxu0 %v1348
    %1666 = vmatpush.bf16.msra.mxu0 %v1347
    %1667 = vmatpush.bf16.msra.mxu0 %v1346
    %1668 = vmatpush.bf16.msra.mxu0 %v1345
    %1669 = vmatmul.bf16.gmra.mxu0 %v221
    %v1670 = vpop.f32.mrf.mxu0
    %v1671 = vadd.f32 %v1658, %v1670
    %v1672 = vpop.f32.mrf.mxu0
    %1673 = vdwg.mxu0
    %1674 = vmatpush.bf16.msra.mxu0 %v1360
    %1675 = vmatpush.bf16.msra.mxu0 %v1359
    %1676 = vmatpush.bf16.msra.mxu0 %v1358
    %1677 = vmatpush.bf16.msra.mxu0 %v1357
    %1678 = vmatpush.bf16.msra.mxu0 %v1356
    %1679 = vmatpush.bf16.msra.mxu0 %v1355
    %1680 = vmatpush.bf16.msra.mxu0 %v1354
    %1681 = vmatpush.bf16.msra.mxu0 %v1353
    %1682 = vmatmul.bf16.gmra.mxu0 %v222
    %v1683 = vpop.f32.mrf.mxu0
    %v1684 = vadd.f32 %v1671, %v1683
    %v1685 = vpop.f32.mrf.mxu0
    %1686 = vdwg.mxu0
    %1687 = vmatpush.bf16.msra.mxu0 %v1368
    %1688 = vmatpush.bf16.msra.mxu0 %v1367
    %1689 = vmatpush.bf16.msra.mxu0 %v1366
    %1690 = vmatpush.bf16.msra.mxu0 %v1365
    %1691 = vmatpush.bf16.msra.mxu0 %v1364
    %1692 = vmatpush.bf16.msra.mxu0 %v1363
    %1693 = vmatpush.bf16.msra.mxu0 %v1362
    %1694 = vmatpush.bf16.msra.mxu0 %v1361
    %1695 = vmatmul.bf16.gmra.mxu0 %v223
    %v1696 = vpop.f32.mrf.mxu0
    %v1697 = vadd.f32 %v1684, %v1696
    %v1698 = vpop.f32.mrf.mxu0
    %1699 = vdwg.mxu0
    %1700 = vmatpush.bf16.msra.mxu0 %v1376
    %1701 = vmatpush.bf16.msra.mxu0 %v1375
    %1702 = vmatpush.bf16.msra.mxu0 %v1374
    %1703 = vmatpush.bf16.msra.mxu0 %v1373
    %1704 = vmatpush.bf16.msra.mxu0 %v1372
    %1705 = vmatpush.bf16.msra.mxu0 %v1371
    %1706 = vmatpush.bf16.msra.mxu0 %v1370
    %1707 = vmatpush.bf16.msra.mxu0 %v1369
    %1708 = vmatmul.bf16.gmra.mxu0 %v224
    %v1709 = vpop.f32.mrf.mxu0
    %v1710 = vadd.f32 %v1697, %v1709
    %v1711 = vpop.f32.mrf.mxu0
    %1712 = vdwg.mxu0
    %v1721 = vunpack.c.l.b16 %v96
    %v1722 = vunpack.c.h.b16 %v96
    %v1723 = vunpack.c.l.b16 %v97
    %v1724 = vunpack.c.h.b16 %v97
    %v1725 = vunpack.c.l.b16 %v98
    %v1726 = vunpack.c.h.b16 %v98
    %v1727 = vunpack.c.l.b16 %v99
    %v1728 = vunpack.c.h.b16 %v99
    %v1729 = vunpack.c.l.b16 %v100
    %v1730 = vunpack.c.h.b16 %v100
    %v1731 = vunpack.c.l.b16 %v101
    %v1732 = vunpack.c.h.b16 %v101
    %v1733 = vunpack.c.l.b16 %v102
    %v1734 = vunpack.c.h.b16 %v102
    %v1735 = vunpack.c.l.b16 %v103
    %v1736 = vunpack.c.h.b16 %v103
    %v1737 = vpack.c.b16 %v1721, %v1721
    %v1738 = vpack.c.b16 %v1722, %v1722
    %v1739 = vpack.c.b16 %v1723, %v1723
    %v1740 = vpack.c.b16 %v1724, %v1724
    %v1741 = vpack.c.b16 %v1725, %v1725
    %v1742 = vpack.c.b16 %v1726, %v1726
    %v1743 = vpack.c.b16 %v1727, %v1727
    %v1744 = vpack.c.b16 %v1728, %v1728
    %v1745 = vpack.c.b16 %v1729, %v1729
    %v1746 = vpack.c.b16 %v1730, %v1730
    %v1747 = vpack.c.b16 %v1731, %v1731
    %v1748 = vpack.c.b16 %v1732, %v1732
    %v1749 = vpack.c.b16 %v1733, %v1733
    %v1750 = vpack.c.b16 %v1734, %v1734
    %v1751 = vpack.c.b16 %v1735, %v1735
    %v1752 = vpack.c.b16 %v1736, %v1736
    %1769 = vmatpush.bf16.msra.mxu0 %v1256
    %1770 = vmatpush.bf16.msra.mxu0 %v1255
    %1771 = vmatpush.bf16.msra.mxu0 %v1254
    %1772 = vmatpush.bf16.msra.mxu0 %v1253
    %1773 = vmatpush.bf16.msra.mxu0 %v1252
    %1774 = vmatpush.bf16.msra.mxu0 %v1251
    %1775 = vmatpush.bf16.msra.mxu0 %v1250
    %1776 = vmatpush.bf16.msra.mxu0 %v1249
    %1777 = vmatmul.bf16.gmra.mxu0 %v1737
    %v1778 = vpop.f32.mrf.mxu0
    %v1779 = vadd.f32 %v1710, %v1778
    %v1780 = vpop.f32.mrf.mxu0
    %1781 = vdwg.mxu0
    %1782 = vmatpush.bf16.msra.mxu0 %v1264
    %1783 = vmatpush.bf16.msra.mxu0 %v1263
    %1784 = vmatpush.bf16.msra.mxu0 %v1262
    %1785 = vmatpush.bf16.msra.mxu0 %v1261
    %1786 = vmatpush.bf16.msra.mxu0 %v1260
    %1787 = vmatpush.bf16.msra.mxu0 %v1259
    %1788 = vmatpush.bf16.msra.mxu0 %v1258
    %1789 = vmatpush.bf16.msra.mxu0 %v1257
    %1790 = vmatmul.bf16.gmra.mxu0 %v1738
    %v1791 = vpop.f32.mrf.mxu0
    %v1792 = vadd.f32 %v1779, %v1791
    %v1793 = vpop.f32.mrf.mxu0
    %1794 = vdwg.mxu0
    %1795 = vmatpush.bf16.msra.mxu0 %v1272
    %1796 = vmatpush.bf16.msra.mxu0 %v1271
    %1797 = vmatpush.bf16.msra.mxu0 %v1270
    %1798 = vmatpush.bf16.msra.mxu0 %v1269
    %1799 = vmatpush.bf16.msra.mxu0 %v1268
    %1800 = vmatpush.bf16.msra.mxu0 %v1267
    %1801 = vmatpush.bf16.msra.mxu0 %v1266
    %1802 = vmatpush.bf16.msra.mxu0 %v1265
    %1803 = vmatmul.bf16.gmra.mxu0 %v1739
    %v1804 = vpop.f32.mrf.mxu0
    %v1805 = vadd.f32 %v1792, %v1804
    %v1806 = vpop.f32.mrf.mxu0
    %1807 = vdwg.mxu0
    %1808 = vmatpush.bf16.msra.mxu0 %v1280
    %1809 = vmatpush.bf16.msra.mxu0 %v1279
    %1810 = vmatpush.bf16.msra.mxu0 %v1278
    %1811 = vmatpush.bf16.msra.mxu0 %v1277
    %1812 = vmatpush.bf16.msra.mxu0 %v1276
    %1813 = vmatpush.bf16.msra.mxu0 %v1275
    %1814 = vmatpush.bf16.msra.mxu0 %v1274
    %1815 = vmatpush.bf16.msra.mxu0 %v1273
    %1816 = vmatmul.bf16.gmra.mxu0 %v1740
    %v1817 = vpop.f32.mrf.mxu0
    %v1818 = vadd.f32 %v1805, %v1817
    %v1819 = vpop.f32.mrf.mxu0
    %1820 = vdwg.mxu0
    %1821 = vmatpush.bf16.msra.mxu0 %v1288
    %1822 = vmatpush.bf16.msra.mxu0 %v1287
    %1823 = vmatpush.bf16.msra.mxu0 %v1286
    %1824 = vmatpush.bf16.msra.mxu0 %v1285
    %1825 = vmatpush.bf16.msra.mxu0 %v1284
    %1826 = vmatpush.bf16.msra.mxu0 %v1283
    %1827 = vmatpush.bf16.msra.mxu0 %v1282
    %1828 = vmatpush.bf16.msra.mxu0 %v1281
    %1829 = vmatmul.bf16.gmra.mxu0 %v1741
    %v1830 = vpop.f32.mrf.mxu0
    %v1831 = vadd.f32 %v1818, %v1830
    %v1832 = vpop.f32.mrf.mxu0
    %1833 = vdwg.mxu0
    %1834 = vmatpush.bf16.msra.mxu0 %v1296
    %1835 = vmatpush.bf16.msra.mxu0 %v1295
    %1836 = vmatpush.bf16.msra.mxu0 %v1294
    %1837 = vmatpush.bf16.msra.mxu0 %v1293
    %1838 = vmatpush.bf16.msra.mxu0 %v1292
    %1839 = vmatpush.bf16.msra.mxu0 %v1291
    %1840 = vmatpush.bf16.msra.mxu0 %v1290
    %1841 = vmatpush.bf16.msra.mxu0 %v1289
    %1842 = vmatmul.bf16.gmra.mxu0 %v1742
    %v1843 = vpop.f32.mrf.mxu0
    %v1844 = vadd.f32 %v1831, %v1843
    %v1845 = vpop.f32.mrf.mxu0
    %1846 = vdwg.mxu0
    %1847 = vmatpush.bf16.msra.mxu0 %v1304
    %1848 = vmatpush.bf16.msra.mxu0 %v1303
    %1849 = vmatpush.bf16.msra.mxu0 %v1302
    %1850 = vmatpush.bf16.msra.mxu0 %v1301
    %1851 = vmatpush.bf16.msra.mxu0 %v1300
    %1852 = vmatpush.bf16.msra.mxu0 %v1299
    %1853 = vmatpush.bf16.msra.mxu0 %v1298
    %1854 = vmatpush.bf16.msra.mxu0 %v1297
    %1855 = vmatmul.bf16.gmra.mxu0 %v1743
    %v1856 = vpop.f32.mrf.mxu0
    %v1857 = vadd.f32 %v1844, %v1856
    %v1858 = vpop.f32.mrf.mxu0
    %1859 = vdwg.mxu0
    %1860 = vmatpush.bf16.msra.mxu0 %v1312
    %1861 = vmatpush.bf16.msra.mxu0 %v1311
    %1862 = vmatpush.bf16.msra.mxu0 %v1310
    %1863 = vmatpush.bf16.msra.mxu0 %v1309
    %1864 = vmatpush.bf16.msra.mxu0 %v1308
    %1865 = vmatpush.bf16.msra.mxu0 %v1307
    %1866 = vmatpush.bf16.msra.mxu0 %v1306
    %1867 = vmatpush.bf16.msra.mxu0 %v1305
    %1868 = vmatmul.bf16.gmra.mxu0 %v1744
    %v1869 = vpop.f32.mrf.mxu0
    %v1870 = vadd.f32 %v1857, %v1869
    %v1871 = vpop.f32.mrf.mxu0
    %1872 = vdwg.mxu0
    %1873 = vmatpush.bf16.msra.mxu0 %v1320
    %1874 = vmatpush.bf16.msra.mxu0 %v1319
    %1875 = vmatpush.bf16.msra.mxu0 %v1318
    %1876 = vmatpush.bf16.msra.mxu0 %v1317
    %1877 = vmatpush.bf16.msra.mxu0 %v1316
    %1878 = vmatpush.bf16.msra.mxu0 %v1315
    %1879 = vmatpush.bf16.msra.mxu0 %v1314
    %1880 = vmatpush.bf16.msra.mxu0 %v1313
    %1881 = vmatmul.bf16.gmra.mxu0 %v1745
    %v1882 = vpop.f32.mrf.mxu0
    %v1883 = vadd.f32 %v1870, %v1882
    %v1884 = vpop.f32.mrf.mxu0
    %1885 = vdwg.mxu0
    %1886 = vmatpush.bf16.msra.mxu0 %v1328
    %1887 = vmatpush.bf16.msra.mxu0 %v1327
    %1888 = vmatpush.bf16.msra.mxu0 %v1326
    %1889 = vmatpush.bf16.msra.mxu0 %v1325
    %1890 = vmatpush.bf16.msra.mxu0 %v1324
    %1891 = vmatpush.bf16.msra.mxu0 %v1323
    %1892 = vmatpush.bf16.msra.mxu0 %v1322
    %1893 = vmatpush.bf16.msra.mxu0 %v1321
    %1894 = vmatmul.bf16.gmra.mxu0 %v1746
    %v1895 = vpop.f32.mrf.mxu0
    %v1896 = vadd.f32 %v1883, %v1895
    %v1897 = vpop.f32.mrf.mxu0
    %1898 = vdwg.mxu0
    %1899 = vmatpush.bf16.msra.mxu0 %v1336
    %1900 = vmatpush.bf16.msra.mxu0 %v1335
    %1901 = vmatpush.bf16.msra.mxu0 %v1334
    %1902 = vmatpush.bf16.msra.mxu0 %v1333
    %1903 = vmatpush.bf16.msra.mxu0 %v1332
    %1904 = vmatpush.bf16.msra.mxu0 %v1331
    %1905 = vmatpush.bf16.msra.mxu0 %v1330
    %1906 = vmatpush.bf16.msra.mxu0 %v1329
    %1907 = vmatmul.bf16.gmra.mxu0 %v1747
    %v1908 = vpop.f32.mrf.mxu0
    %v1909 = vadd.f32 %v1896, %v1908
    %v1910 = vpop.f32.mrf.mxu0
    %1911 = vdwg.mxu0
    %1912 = vmatpush.bf16.msra.mxu0 %v1344
    %1913 = vmatpush.bf16.msra.mxu0 %v1343
    %1914 = vmatpush.bf16.msra.mxu0 %v1342
    %1915 = vmatpush.bf16.msra.mxu0 %v1341
    %1916 = vmatpush.bf16.msra.mxu0 %v1340
    %1917 = vmatpush.bf16.msra.mxu0 %v1339
    %1918 = vmatpush.bf16.msra.mxu0 %v1338
    %1919 = vmatpush.bf16.msra.mxu0 %v1337
    %1920 = vmatmul.bf16.gmra.mxu0 %v1748
    %v1921 = vpop.f32.mrf.mxu0
    %v1922 = vadd.f32 %v1909, %v1921
    %v1923 = vpop.f32.mrf.mxu0
    %1924 = vdwg.mxu0
    %1925 = vmatpush.bf16.msra.mxu0 %v1352
    %1926 = vmatpush.bf16.msra.mxu0 %v1351
    %1927 = vmatpush.bf16.msra.mxu0 %v1350
    %1928 = vmatpush.bf16.msra.mxu0 %v1349
    %1929 = vmatpush.bf16.msra.mxu0 %v1348
    %1930 = vmatpush.bf16.msra.mxu0 %v1347
    %1931 = vmatpush.bf16.msra.mxu0 %v1346
    %1932 = vmatpush.bf16.msra.mxu0 %v1345
    %1933 = vmatmul.bf16.gmra.mxu0 %v1749
    %v1934 = vpop.f32.mrf.mxu0
    %v1935 = vadd.f32 %v1922, %v1934
    %v1936 = vpop.f32.mrf.mxu0
    %1937 = vdwg.mxu0
    %1938 = vmatpush.bf16.msra.mxu0 %v1360
    %1939 = vmatpush.bf16.msra.mxu0 %v1359
    %1940 = vmatpush.bf16.msra.mxu0 %v1358
    %1941 = vmatpush.bf16.msra.mxu0 %v1357
    %1942 = vmatpush.bf16.msra.mxu0 %v1356
    %1943 = vmatpush.bf16.msra.mxu0 %v1355
    %1944 = vmatpush.bf16.msra.mxu0 %v1354
    %1945 = vmatpush.bf16.msra.mxu0 %v1353
    %1946 = vmatmul.bf16.gmra.mxu0 %v1750
    %v1947 = vpop.f32.mrf.mxu0
    %v1948 = vadd.f32 %v1935, %v1947
    %v1949 = vpop.f32.mrf.mxu0
    %1950 = vdwg.mxu0
    %1951 = vmatpush.bf16.msra.mxu0 %v1368
    %1952 = vmatpush.bf16.msra.mxu0 %v1367
    %1953 = vmatpush.bf16.msra.mxu0 %v1366
    %1954 = vmatpush.bf16.msra.mxu0 %v1365
    %1955 = vmatpush.bf16.msra.mxu0 %v1364
    %1956 = vmatpush.bf16.msra.mxu0 %v1363
    %1957 = vmatpush.bf16.msra.mxu0 %v1362
    %1958 = vmatpush.bf16.msra.mxu0 %v1361
    %1959 = vmatmul.bf16.gmra.mxu0 %v1751
    %v1960 = vpop.f32.mrf.mxu0
    %v1961 = vadd.f32 %v1948, %v1960
    %v1962 = vpop.f32.mrf.mxu0
    %1963 = vdwg.mxu0
    %1964 = vmatpush.bf16.msra.mxu0 %v1376
    %1965 = vmatpush.bf16.msra.mxu0 %v1375
    %1966 = vmatpush.bf16.msra.mxu0 %v1374
    %1967 = vmatpush.bf16.msra.mxu0 %v1373
    %1968 = vmatpush.bf16.msra.mxu0 %v1372
    %1969 = vmatpush.bf16.msra.mxu0 %v1371
    %1970 = vmatpush.bf16.msra.mxu0 %v1370
    %1971 = vmatpush.bf16.msra.mxu0 %v1369
    %1972 = vmatmul.bf16.gmra.mxu0 %v1752
    %v1973 = vpop.f32.mrf.mxu0
    %v1974 = vadd.f32 %v1961, %v1973
    %v1975 = vpop.f32.mrf.mxu0
    %1976 = vdwg.mxu0
    %v2233 = vunpack.c.l.b16 %v481
    %v2234 = vunpack.c.l.b16 %v482
    %v2235 = vunpack.c.l.b16 %v483
    %v2236 = vunpack.c.l.b16 %v484
    %v2237 = vunpack.c.l.b16 %v485
    %v2238 = vunpack.c.l.b16 %v486
    %v2239 = vunpack.c.l.b16 %v487
    %v2240 = vunpack.c.l.b16 %v488
    %v2241 = vunpack.c.l.b16 %v489
    %v2242 = vunpack.c.l.b16 %v490
    %v2243 = vunpack.c.l.b16 %v491
    %v2244 = vunpack.c.l.b16 %v492
    %v2245 = vunpack.c.l.b16 %v493
    %v2246 = vunpack.c.l.b16 %v494
    %v2247 = vunpack.c.l.b16 %v495
    %v2248 = vunpack.c.l.b16 %v496
    %v2249 = vunpack.c.l.b16 %v497
    %v2250 = vunpack.c.l.b16 %v498
    %v2251 = vunpack.c.l.b16 %v499
    %v2252 = vunpack.c.l.b16 %v500
    %v2253 = vunpack.c.l.b16 %v501
    %v2254 = vunpack.c.l.b16 %v502
    %v2255 = vunpack.c.l.b16 %v503
    %v2256 = vunpack.c.l.b16 %v504
    %v2257 = vunpack.c.l.b16 %v505
    %v2258 = vunpack.c.l.b16 %v506
    %v2259 = vunpack.c.l.b16 %v507
    %v2260 = vunpack.c.l.b16 %v508
    %v2261 = vunpack.c.l.b16 %v509
    %v2262 = vunpack.c.l.b16 %v510
    %v2263 = vunpack.c.l.b16 %v511
    %v2264 = vunpack.c.l.b16 %v512
    %v2265 = vunpack.c.l.b16 %v513
    %v2266 = vunpack.c.l.b16 %v514
    %v2267 = vunpack.c.l.b16 %v515
    %v2268 = vunpack.c.l.b16 %v516
    %v2269 = vunpack.c.l.b16 %v517
    %v2270 = vunpack.c.l.b16 %v518
    %v2271 = vunpack.c.l.b16 %v519
    %v2272 = vunpack.c.l.b16 %v520
    %v2273 = vunpack.c.l.b16 %v521
    %v2274 = vunpack.c.l.b16 %v522
    %v2275 = vunpack.c.l.b16 %v523
    %v2276 = vunpack.c.l.b16 %v524
    %v2277 = vunpack.c.l.b16 %v525
    %v2278 = vunpack.c.l.b16 %v526
    %v2279 = vunpack.c.l.b16 %v527
    %v2280 = vunpack.c.l.b16 %v528
    %v2281 = vunpack.c.l.b16 %v529
    %v2282 = vunpack.c.l.b16 %v530
    %v2283 = vunpack.c.l.b16 %v531
    %v2284 = vunpack.c.l.b16 %v532
    %v2285 = vunpack.c.l.b16 %v533
    %v2286 = vunpack.c.l.b16 %v534
    %v2287 = vunpack.c.l.b16 %v535
    %v2288 = vunpack.c.l.b16 %v536
    %v2289 = vunpack.c.l.b16 %v537
    %v2290 = vunpack.c.l.b16 %v538
    %v2291 = vunpack.c.l.b16 %v539
    %v2292 = vunpack.c.l.b16 %v540
    %v2293 = vunpack.c.l.b16 %v541
    %v2294 = vunpack.c.l.b16 %v542
    %v2295 = vunpack.c.l.b16 %v543
    %v2296 = vunpack.c.l.b16 %v544
    %v2297 = vunpack.c.l.b16 %v545
    %v2298 = vunpack.c.l.b16 %v546
    %v2299 = vunpack.c.l.b16 %v547
    %v2300 = vunpack.c.l.b16 %v548
    %v2301 = vunpack.c.l.b16 %v549
    %v2302 = vunpack.c.l.b16 %v550
    %v2303 = vunpack.c.l.b16 %v551
    %v2304 = vunpack.c.l.b16 %v552
    %v2305 = vunpack.c.l.b16 %v553
    %v2306 = vunpack.c.l.b16 %v554
    %v2307 = vunpack.c.l.b16 %v555
    %v2308 = vunpack.c.l.b16 %v556
    %v2309 = vunpack.c.l.b16 %v557
    %v2310 = vunpack.c.l.b16 %v558
    %v2311 = vunpack.c.l.b16 %v559
    %v2312 = vunpack.c.l.b16 %v560
    %v2313 = vunpack.c.l.b16 %v561
    %v2314 = vunpack.c.l.b16 %v562
    %v2315 = vunpack.c.l.b16 %v563
    %v2316 = vunpack.c.l.b16 %v564
    %v2317 = vunpack.c.l.b16 %v565
    %v2318 = vunpack.c.l.b16 %v566
    %v2319 = vunpack.c.l.b16 %v567
    %v2320 = vunpack.c.l.b16 %v568
    %v2321 = vunpack.c.l.b16 %v569
    %v2322 = vunpack.c.l.b16 %v570
    %v2323 = vunpack.c.l.b16 %v571
    %v2324 = vunpack.c.l.b16 %v572
    %v2325 = vunpack.c.l.b16 %v573
    %v2326 = vunpack.c.l.b16 %v574
    %v2327 = vunpack.c.l.b16 %v575
    %v2328 = vunpack.c.l.b16 %v576
    %v2329 = vunpack.c.l.b16 %v577
    %v2330 = vunpack.c.l.b16 %v578
    %v2331 = vunpack.c.l.b16 %v579
    %v2332 = vunpack.c.l.b16 %v580
    %v2333 = vunpack.c.l.b16 %v581
    %v2334 = vunpack.c.l.b16 %v582
    %v2335 = vunpack.c.l.b16 %v583
    %v2336 = vunpack.c.l.b16 %v584
    %v2337 = vunpack.c.l.b16 %v585
    %v2338 = vunpack.c.l.b16 %v586
    %v2339 = vunpack.c.l.b16 %v587
    %v2340 = vunpack.c.l.b16 %v588
    %v2341 = vunpack.c.l.b16 %v589
    %v2342 = vunpack.c.l.b16 %v590
    %v2343 = vunpack.c.l.b16 %v591
    %v2344 = vunpack.c.l.b16 %v592
    %v2345 = vunpack.c.l.b16 %v593
    %v2346 = vunpack.c.l.b16 %v594
    %v2347 = vunpack.c.l.b16 %v595
    %v2348 = vunpack.c.l.b16 %v596
    %v2349 = vunpack.c.l.b16 %v597
    %v2350 = vunpack.c.l.b16 %v598
    %v2351 = vunpack.c.l.b16 %v599
    %v2352 = vunpack.c.l.b16 %v600
    %v2353 = vunpack.c.l.b16 %v601
    %v2354 = vunpack.c.l.b16 %v602
    %v2355 = vunpack.c.l.b16 %v603
    %v2356 = vunpack.c.l.b16 %v604
    %v2357 = vunpack.c.l.b16 %v605
    %v2358 = vunpack.c.l.b16 %v606
    %v2359 = vunpack.c.l.b16 %v607
    %v2360 = vunpack.c.l.b16 %v608
    %v2361 = vunpack.c.l.b16 %v609
    %v2362 = vunpack.c.l.b16 %v610
    %v2363 = vunpack.c.l.b16 %v611
    %v2364 = vunpack.c.l.b16 %v612
    %v2365 = vunpack.c.l.b16 %v613
    %v2366 = vunpack.c.l.b16 %v614
    %v2367 = vunpack.c.l.b16 %v615
    %v2368 = vunpack.c.l.b16 %v616
    %v2369 = vunpack.c.l.b16 %v617
    %v2370 = vunpack.c.l.b16 %v618
    %v2371 = vunpack.c.l.b16 %v619
    %v2372 = vunpack.c.l.b16 %v620
    %v2373 = vunpack.c.l.b16 %v621
    %v2374 = vunpack.c.l.b16 %v622
    %v2375 = vunpack.c.l.b16 %v623
    %v2376 = vunpack.c.l.b16 %v624
    %v2377 = vunpack.c.l.b16 %v625
    %v2378 = vunpack.c.l.b16 %v626
    %v2379 = vunpack.c.l.b16 %v627
    %v2380 = vunpack.c.l.b16 %v628
    %v2381 = vunpack.c.l.b16 %v629
    %v2382 = vunpack.c.l.b16 %v630
    %v2383 = vunpack.c.l.b16 %v631
    %v2384 = vunpack.c.l.b16 %v632
    %v2385 = vunpack.c.l.b16 %v633
    %v2386 = vunpack.c.l.b16 %v634
    %v2387 = vunpack.c.l.b16 %v635
    %v2388 = vunpack.c.l.b16 %v636
    %v2389 = vunpack.c.l.b16 %v637
    %v2390 = vunpack.c.l.b16 %v638
    %v2391 = vunpack.c.l.b16 %v639
    %v2392 = vunpack.c.l.b16 %v640
    %v2393 = vunpack.c.l.b16 %v641
    %v2394 = vunpack.c.l.b16 %v642
    %v2395 = vunpack.c.l.b16 %v643
    %v2396 = vunpack.c.l.b16 %v644
    %v2397 = vunpack.c.l.b16 %v645
    %v2398 = vunpack.c.l.b16 %v646
    %v2399 = vunpack.c.l.b16 %v647
    %v2400 = vunpack.c.l.b16 %v648
    %v2401 = vunpack.c.l.b16 %v649
    %v2402 = vunpack.c.l.b16 %v650
    %v2403 = vunpack.c.l.b16 %v651
    %v2404 = vunpack.c.l.b16 %v652
    %v2405 = vunpack.c.l.b16 %v653
    %v2406 = vunpack.c.l.b16 %v654
    %v2407 = vunpack.c.l.b16 %v655
    %v2408 = vunpack.c.l.b16 %v656
    %v2409 = vunpack.c.l.b16 %v657
    %v2410 = vunpack.c.l.b16 %v658
    %v2411 = vunpack.c.l.b16 %v659
    %v2412 = vunpack.c.l.b16 %v660
    %v2413 = vunpack.c.l.b16 %v661
    %v2414 = vunpack.c.l.b16 %v662
    %v2415 = vunpack.c.l.b16 %v663
    %v2416 = vunpack.c.l.b16 %v664
    %v2417 = vunpack.c.l.b16 %v665
    %v2418 = vunpack.c.l.b16 %v666
    %v2419 = vunpack.c.l.b16 %v667
    %v2420 = vunpack.c.l.b16 %v668
    %v2421 = vunpack.c.l.b16 %v669
    %v2422 = vunpack.c.l.b16 %v670
    %v2423 = vunpack.c.l.b16 %v671
    %v2424 = vunpack.c.l.b16 %v672
    %v2425 = vunpack.c.l.b16 %v673
    %v2426 = vunpack.c.l.b16 %v674
    %v2427 = vunpack.c.l.b16 %v675
    %v2428 = vunpack.c.l.b16 %v676
    %v2429 = vunpack.c.l.b16 %v677
    %v2430 = vunpack.c.l.b16 %v678
    %v2431 = vunpack.c.l.b16 %v679
    %v2432 = vunpack.c.l.b16 %v680
    %v2433 = vunpack.c.l.b16 %v681
    %v2434 = vunpack.c.l.b16 %v682
    %v2435 = vunpack.c.l.b16 %v683
    %v2436 = vunpack.c.l.b16 %v684
    %v2437 = vunpack.c.l.b16 %v685
    %v2438 = vunpack.c.l.b16 %v686
    %v2439 = vunpack.c.l.b16 %v687
    %v2440 = vunpack.c.l.b16 %v688
    %v2441 = vunpack.c.l.b16 %v689
    %v2442 = vunpack.c.l.b16 %v690
    %v2443 = vunpack.c.l.b16 %v691
    %v2444 = vunpack.c.l.b16 %v692
    %v2445 = vunpack.c.l.b16 %v693
    %v2446 = vunpack.c.l.b16 %v694
    %v2447 = vunpack.c.l.b16 %v695
    %v2448 = vunpack.c.l.b16 %v696
    %v2449 = vunpack.c.l.b16 %v697
    %v2450 = vunpack.c.l.b16 %v698
    %v2451 = vunpack.c.l.b16 %v699
    %v2452 = vunpack.c.l.b16 %v700
    %v2453 = vunpack.c.l.b16 %v701
    %v2454 = vunpack.c.l.b16 %v702
    %v2455 = vunpack.c.l.b16 %v703
    %v2456 = vunpack.c.l.b16 %v704
    %v2457 = vunpack.c.l.b16 %v705
    %v2458 = vunpack.c.l.b16 %v706
    %v2459 = vunpack.c.l.b16 %v707
    %v2460 = vunpack.c.l.b16 %v708
    %v2461 = vunpack.c.l.b16 %v709
    %v2462 = vunpack.c.l.b16 %v710
    %v2463 = vunpack.c.l.b16 %v711
    %v2464 = vunpack.c.l.b16 %v712
    %v2465 = vunpack.c.l.b16 %v713
    %v2466 = vunpack.c.l.b16 %v714
    %v2467 = vunpack.c.l.b16 %v715
    %v2468 = vunpack.c.l.b16 %v716
    %v2469 = vunpack.c.l.b16 %v717
    %v2470 = vunpack.c.l.b16 %v718
    %v2471 = vunpack.c.l.b16 %v719
    %v2472 = vunpack.c.l.b16 %v720
    %v2473 = vunpack.c.l.b16 %v721
    %v2474 = vunpack.c.l.b16 %v722
    %v2475 = vunpack.c.l.b16 %v723
    %v2476 = vunpack.c.l.b16 %v724
    %v2477 = vunpack.c.l.b16 %v725
    %v2478 = vunpack.c.l.b16 %v726
    %v2479 = vunpack.c.l.b16 %v727
    %v2480 = vunpack.c.l.b16 %v728
    %v2481 = vunpack.c.l.b16 %v729
    %v2482 = vunpack.c.l.b16 %v730
    %v2483 = vunpack.c.l.b16 %v731
    %v2484 = vunpack.c.l.b16 %v732
    %v2485 = vunpack.c.l.b16 %v733
    %v2486 = vunpack.c.l.b16 %v734
    %v2487 = vunpack.c.l.b16 %v735
    %v2488 = vunpack.c.l.b16 %v736
    %v2489 = vpack.c.b16 %v2234, %v2233
    %v2490 = vpack.c.b16 %v2236, %v2235
    %v2491 = vpack.c.b16 %v2238, %v2237
    %v2492 = vpack.c.b16 %v2240, %v2239
    %v2493 = vpack.c.b16 %v2242, %v2241
    %v2494 = vpack.c.b16 %v2244, %v2243
    %v2495 = vpack.c.b16 %v2246, %v2245
    %v2496 = vpack.c.b16 %v2248, %v2247
    %v2497 = vpack.c.b16 %v2250, %v2249
    %v2498 = vpack.c.b16 %v2252, %v2251
    %v2499 = vpack.c.b16 %v2254, %v2253
    %v2500 = vpack.c.b16 %v2256, %v2255
    %v2501 = vpack.c.b16 %v2258, %v2257
    %v2502 = vpack.c.b16 %v2260, %v2259
    %v2503 = vpack.c.b16 %v2262, %v2261
    %v2504 = vpack.c.b16 %v2264, %v2263
    %v2505 = vpack.c.b16 %v2266, %v2265
    %v2506 = vpack.c.b16 %v2268, %v2267
    %v2507 = vpack.c.b16 %v2270, %v2269
    %v2508 = vpack.c.b16 %v2272, %v2271
    %v2509 = vpack.c.b16 %v2274, %v2273
    %v2510 = vpack.c.b16 %v2276, %v2275
    %v2511 = vpack.c.b16 %v2278, %v2277
    %v2512 = vpack.c.b16 %v2280, %v2279
    %v2513 = vpack.c.b16 %v2282, %v2281
    %v2514 = vpack.c.b16 %v2284, %v2283
    %v2515 = vpack.c.b16 %v2286, %v2285
    %v2516 = vpack.c.b16 %v2288, %v2287
    %v2517 = vpack.c.b16 %v2290, %v2289
    %v2518 = vpack.c.b16 %v2292, %v2291
    %v2519 = vpack.c.b16 %v2294, %v2293
    %v2520 = vpack.c.b16 %v2296, %v2295
    %v2521 = vpack.c.b16 %v2298, %v2297
    %v2522 = vpack.c.b16 %v2300, %v2299
    %v2523 = vpack.c.b16 %v2302, %v2301
    %v2524 = vpack.c.b16 %v2304, %v2303
    %v2525 = vpack.c.b16 %v2306, %v2305
    %v2526 = vpack.c.b16 %v2308, %v2307
    %v2527 = vpack.c.b16 %v2310, %v2309
    %v2528 = vpack.c.b16 %v2312, %v2311
    %v2529 = vpack.c.b16 %v2314, %v2313
    %v2530 = vpack.c.b16 %v2316, %v2315
    %v2531 = vpack.c.b16 %v2318, %v2317
    %v2532 = vpack.c.b16 %v2320, %v2319
    %v2533 = vpack.c.b16 %v2322, %v2321
    %v2534 = vpack.c.b16 %v2324, %v2323
    %v2535 = vpack.c.b16 %v2326, %v2325
    %v2536 = vpack.c.b16 %v2328, %v2327
    %v2537 = vpack.c.b16 %v2330, %v2329
    %v2538 = vpack.c.b16 %v2332, %v2331
    %v2539 = vpack.c.b16 %v2334, %v2333
    %v2540 = vpack.c.b16 %v2336, %v2335
    %v2541 = vpack.c.b16 %v2338, %v2337
    %v2542 = vpack.c.b16 %v2340, %v2339
    %v2543 = vpack.c.b16 %v2342, %v2341
    %v2544 = vpack.c.b16 %v2344, %v2343
    %v2545 = vpack.c.b16 %v2346, %v2345
    %v2546 = vpack.c.b16 %v2348, %v2347
    %v2547 = vpack.c.b16 %v2350, %v2349
    %v2548 = vpack.c.b16 %v2352, %v2351
    %v2549 = vpack.c.b16 %v2354, %v2353
    %v2550 = vpack.c.b16 %v2356, %v2355
    %v2551 = vpack.c.b16 %v2358, %v2357
    %v2552 = vpack.c.b16 %v2360, %v2359
    %v2553 = vpack.c.b16 %v2362, %v2361
    %v2554 = vpack.c.b16 %v2364, %v2363
    %v2555 = vpack.c.b16 %v2366, %v2365
    %v2556 = vpack.c.b16 %v2368, %v2367
    %v2557 = vpack.c.b16 %v2370, %v2369
    %v2558 = vpack.c.b16 %v2372, %v2371
    %v2559 = vpack.c.b16 %v2374, %v2373
    %v2560 = vpack.c.b16 %v2376, %v2375
    %v2561 = vpack.c.b16 %v2378, %v2377
    %v2562 = vpack.c.b16 %v2380, %v2379
    %v2563 = vpack.c.b16 %v2382, %v2381
    %v2564 = vpack.c.b16 %v2384, %v2383
    %v2565 = vpack.c.b16 %v2386, %v2385
    %v2566 = vpack.c.b16 %v2388, %v2387
    %v2567 = vpack.c.b16 %v2390, %v2389
    %v2568 = vpack.c.b16 %v2392, %v2391
    %v2569 = vpack.c.b16 %v2394, %v2393
    %v2570 = vpack.c.b16 %v2396, %v2395
    %v2571 = vpack.c.b16 %v2398, %v2397
    %v2572 = vpack.c.b16 %v2400, %v2399
    %v2573 = vpack.c.b16 %v2402, %v2401
    %v2574 = vpack.c.b16 %v2404, %v2403
    %v2575 = vpack.c.b16 %v2406, %v2405
    %v2576 = vpack.c.b16 %v2408, %v2407
    %v2577 = vpack.c.b16 %v2410, %v2409
    %v2578 = vpack.c.b16 %v2412, %v2411
    %v2579 = vpack.c.b16 %v2414, %v2413
    %v2580 = vpack.c.b16 %v2416, %v2415
    %v2581 = vpack.c.b16 %v2418, %v2417
    %v2582 = vpack.c.b16 %v2420, %v2419
    %v2583 = vpack.c.b16 %v2422, %v2421
    %v2584 = vpack.c.b16 %v2424, %v2423
    %v2585 = vpack.c.b16 %v2426, %v2425
    %v2586 = vpack.c.b16 %v2428, %v2427
    %v2587 = vpack.c.b16 %v2430, %v2429
    %v2588 = vpack.c.b16 %v2432, %v2431
    %v2589 = vpack.c.b16 %v2434, %v2433
    %v2590 = vpack.c.b16 %v2436, %v2435
    %v2591 = vpack.c.b16 %v2438, %v2437
    %v2592 = vpack.c.b16 %v2440, %v2439
    %v2593 = vpack.c.b16 %v2442, %v2441
    %v2594 = vpack.c.b16 %v2444, %v2443
    %v2595 = vpack.c.b16 %v2446, %v2445
    %v2596 = vpack.c.b16 %v2448, %v2447
    %v2597 = vpack.c.b16 %v2450, %v2449
    %v2598 = vpack.c.b16 %v2452, %v2451
    %v2599 = vpack.c.b16 %v2454, %v2453
    %v2600 = vpack.c.b16 %v2456, %v2455
    %v2601 = vpack.c.b16 %v2458, %v2457
    %v2602 = vpack.c.b16 %v2460, %v2459
    %v2603 = vpack.c.b16 %v2462, %v2461
    %v2604 = vpack.c.b16 %v2464, %v2463
    %v2605 = vpack.c.b16 %v2466, %v2465
    %v2606 = vpack.c.b16 %v2468, %v2467
    %v2607 = vpack.c.b16 %v2470, %v2469
    %v2608 = vpack.c.b16 %v2472, %v2471
    %v2609 = vpack.c.b16 %v2474, %v2473
    %v2610 = vpack.c.b16 %v2476, %v2475
    %v2611 = vpack.c.b16 %v2478, %v2477
    %v2612 = vpack.c.b16 %v2480, %v2479
    %v2613 = vpack.c.b16 %v2482, %v2481
    %v2614 = vpack.c.b16 %v2484, %v2483
    %v2615 = vpack.c.b16 %v2486, %v2485
    %v2616 = vpack.c.b16 %v2488, %v2487
    %2745 = vmatpush.bf16.msra.mxu0 %v2496
    %2746 = vmatpush.bf16.msra.mxu0 %v2495
    %2747 = vmatpush.bf16.msra.mxu0 %v2494
    %2748 = vmatpush.bf16.msra.mxu0 %v2493
    %2749 = vmatpush.bf16.msra.mxu0 %v2492
    %2750 = vmatpush.bf16.msra.mxu0 %v2491
    %2751 = vmatpush.bf16.msra.mxu0 %v2490
    %2752 = vmatpush.bf16.msra.mxu0 %v2489
    %2753 = vmatmul.bf16.gmra.mxu0 %v1737
    %v2754 = vpop.f32.mrf.mxu0
    %v2755 = vadd.f32 0.0, %v2754
    %v2756 = vpop.f32.mrf.mxu0
    %2757 = vdwg.mxu0
    %2758 = vmatpush.bf16.msra.mxu0 %v2504
    %2759 = vmatpush.bf16.msra.mxu0 %v2503
    %2760 = vmatpush.bf16.msra.mxu0 %v2502
    %2761 = vmatpush.bf16.msra.mxu0 %v2501
    %2762 = vmatpush.bf16.msra.mxu0 %v2500
    %2763 = vmatpush.bf16.msra.mxu0 %v2499
    %2764 = vmatpush.bf16.msra.mxu0 %v2498
    %2765 = vmatpush.bf16.msra.mxu0 %v2497
    %2766 = vmatmul.bf16.gmra.mxu0 %v1738
    %v2767 = vpop.f32.mrf.mxu0
    %v2768 = vadd.f32 %v2755, %v2767
    %v2769 = vpop.f32.mrf.mxu0
    %2770 = vdwg.mxu0
    %2771 = vmatpush.bf16.msra.mxu0 %v2512
    %2772 = vmatpush.bf16.msra.mxu0 %v2511
    %2773 = vmatpush.bf16.msra.mxu0 %v2510
    %2774 = vmatpush.bf16.msra.mxu0 %v2509
    %2775 = vmatpush.bf16.msra.mxu0 %v2508
    %2776 = vmatpush.bf16.msra.mxu0 %v2507
    %2777 = vmatpush.bf16.msra.mxu0 %v2506
    %2778 = vmatpush.bf16.msra.mxu0 %v2505
    %2779 = vmatmul.bf16.gmra.mxu0 %v1739
    %v2780 = vpop.f32.mrf.mxu0
    %v2781 = vadd.f32 %v2768, %v2780
    %v2782 = vpop.f32.mrf.mxu0
    %2783 = vdwg.mxu0
    %2784 = vmatpush.bf16.msra.mxu0 %v2520
    %2785 = vmatpush.bf16.msra.mxu0 %v2519
    %2786 = vmatpush.bf16.msra.mxu0 %v2518
    %2787 = vmatpush.bf16.msra.mxu0 %v2517
    %2788 = vmatpush.bf16.msra.mxu0 %v2516
    %2789 = vmatpush.bf16.msra.mxu0 %v2515
    %2790 = vmatpush.bf16.msra.mxu0 %v2514
    %2791 = vmatpush.bf16.msra.mxu0 %v2513
    %2792 = vmatmul.bf16.gmra.mxu0 %v1740
    %v2793 = vpop.f32.mrf.mxu0
    %v2794 = vadd.f32 %v2781, %v2793
    %v2795 = vpop.f32.mrf.mxu0
    %2796 = vdwg.mxu0
    %2797 = vmatpush.bf16.msra.mxu0 %v2528
    %2798 = vmatpush.bf16.msra.mxu0 %v2527
    %2799 = vmatpush.bf16.msra.mxu0 %v2526
    %2800 = vmatpush.bf16.msra.mxu0 %v2525
    %2801 = vmatpush.bf16.msra.mxu0 %v2524
    %2802 = vmatpush.bf16.msra.mxu0 %v2523
    %2803 = vmatpush.bf16.msra.mxu0 %v2522
    %2804 = vmatpush.bf16.msra.mxu0 %v2521
    %2805 = vmatmul.bf16.gmra.mxu0 %v1741
    %v2806 = vpop.f32.mrf.mxu0
    %v2807 = vadd.f32 %v2794, %v2806
    %v2808 = vpop.f32.mrf.mxu0
    %2809 = vdwg.mxu0
    %2810 = vmatpush.bf16.msra.mxu0 %v2536
    %2811 = vmatpush.bf16.msra.mxu0 %v2535
    %2812 = vmatpush.bf16.msra.mxu0 %v2534
    %2813 = vmatpush.bf16.msra.mxu0 %v2533
    %2814 = vmatpush.bf16.msra.mxu0 %v2532
    %2815 = vmatpush.bf16.msra.mxu0 %v2531
    %2816 = vmatpush.bf16.msra.mxu0 %v2530
    %2817 = vmatpush.bf16.msra.mxu0 %v2529
    %2818 = vmatmul.bf16.gmra.mxu0 %v1742
    %v2819 = vpop.f32.mrf.mxu0
    %v2820 = vadd.f32 %v2807, %v2819
    %v2821 = vpop.f32.mrf.mxu0
    %2822 = vdwg.mxu0
    %2823 = vmatpush.bf16.msra.mxu0 %v2544
    %2824 = vmatpush.bf16.msra.mxu0 %v2543
    %2825 = vmatpush.bf16.msra.mxu0 %v2542
    %2826 = vmatpush.bf16.msra.mxu0 %v2541
    %2827 = vmatpush.bf16.msra.mxu0 %v2540
    %2828 = vmatpush.bf16.msra.mxu0 %v2539
    %2829 = vmatpush.bf16.msra.mxu0 %v2538
    %2830 = vmatpush.bf16.msra.mxu0 %v2537
    %2831 = vmatmul.bf16.gmra.mxu0 %v1743
    %v2832 = vpop.f32.mrf.mxu0
    %v2833 = vadd.f32 %v2820, %v2832
    %v2834 = vpop.f32.mrf.mxu0
    %2835 = vdwg.mxu0
    %2836 = vmatpush.bf16.msra.mxu0 %v2552
    %2837 = vmatpush.bf16.msra.mxu0 %v2551
    %2838 = vmatpush.bf16.msra.mxu0 %v2550
    %2839 = vmatpush.bf16.msra.mxu0 %v2549
    %2840 = vmatpush.bf16.msra.mxu0 %v2548
    %2841 = vmatpush.bf16.msra.mxu0 %v2547
    %2842 = vmatpush.bf16.msra.mxu0 %v2546
    %2843 = vmatpush.bf16.msra.mxu0 %v2545
    %2844 = vmatmul.bf16.gmra.mxu0 %v1744
    %v2845 = vpop.f32.mrf.mxu0
    %v2846 = vadd.f32 %v2833, %v2845
    %v2847 = vpop.f32.mrf.mxu0
    %2848 = vdwg.mxu0
    %2849 = vmatpush.bf16.msra.mxu0 %v2560
    %2850 = vmatpush.bf16.msra.mxu0 %v2559
    %2851 = vmatpush.bf16.msra.mxu0 %v2558
    %2852 = vmatpush.bf16.msra.mxu0 %v2557
    %2853 = vmatpush.bf16.msra.mxu0 %v2556
    %2854 = vmatpush.bf16.msra.mxu0 %v2555
    %2855 = vmatpush.bf16.msra.mxu0 %v2554
    %2856 = vmatpush.bf16.msra.mxu0 %v2553
    %2857 = vmatmul.bf16.gmra.mxu0 %v1745
    %v2858 = vpop.f32.mrf.mxu0
    %v2859 = vadd.f32 %v2846, %v2858
    %v2860 = vpop.f32.mrf.mxu0
    %2861 = vdwg.mxu0
    %2862 = vmatpush.bf16.msra.mxu0 %v2568
    %2863 = vmatpush.bf16.msra.mxu0 %v2567
    %2864 = vmatpush.bf16.msra.mxu0 %v2566
    %2865 = vmatpush.bf16.msra.mxu0 %v2565
    %2866 = vmatpush.bf16.msra.mxu0 %v2564
    %2867 = vmatpush.bf16.msra.mxu0 %v2563
    %2868 = vmatpush.bf16.msra.mxu0 %v2562
    %2869 = vmatpush.bf16.msra.mxu0 %v2561
    %2870 = vmatmul.bf16.gmra.mxu0 %v1746
    %v2871 = vpop.f32.mrf.mxu0
    %v2872 = vadd.f32 %v2859, %v2871
    %v2873 = vpop.f32.mrf.mxu0
    %2874 = vdwg.mxu0
    %2875 = vmatpush.bf16.msra.mxu0 %v2576
    %2876 = vmatpush.bf16.msra.mxu0 %v2575
    %2877 = vmatpush.bf16.msra.mxu0 %v2574
    %2878 = vmatpush.bf16.msra.mxu0 %v2573
    %2879 = vmatpush.bf16.msra.mxu0 %v2572
    %2880 = vmatpush.bf16.msra.mxu0 %v2571
    %2881 = vmatpush.bf16.msra.mxu0 %v2570
    %2882 = vmatpush.bf16.msra.mxu0 %v2569
    %2883 = vmatmul.bf16.gmra.mxu0 %v1747
    %v2884 = vpop.f32.mrf.mxu0
    %v2885 = vadd.f32 %v2872, %v2884
    %v2886 = vpop.f32.mrf.mxu0
    %2887 = vdwg.mxu0
    %2888 = vmatpush.bf16.msra.mxu0 %v2584
    %2889 = vmatpush.bf16.msra.mxu0 %v2583
    %2890 = vmatpush.bf16.msra.mxu0 %v2582
    %2891 = vmatpush.bf16.msra.mxu0 %v2581
    %2892 = vmatpush.bf16.msra.mxu0 %v2580
    %2893 = vmatpush.bf16.msra.mxu0 %v2579
    %2894 = vmatpush.bf16.msra.mxu0 %v2578
    %2895 = vmatpush.bf16.msra.mxu0 %v2577
    %2896 = vmatmul.bf16.gmra.mxu0 %v1748
    %v2897 = vpop.f32.mrf.mxu0
    %v2898 = vadd.f32 %v2885, %v2897
    %v2899 = vpop.f32.mrf.mxu0
    %2900 = vdwg.mxu0
    %2901 = vmatpush.bf16.msra.mxu0 %v2592
    %2902 = vmatpush.bf16.msra.mxu0 %v2591
    %2903 = vmatpush.bf16.msra.mxu0 %v2590
    %2904 = vmatpush.bf16.msra.mxu0 %v2589
    %2905 = vmatpush.bf16.msra.mxu0 %v2588
    %2906 = vmatpush.bf16.msra.mxu0 %v2587
    %2907 = vmatpush.bf16.msra.mxu0 %v2586
    %2908 = vmatpush.bf16.msra.mxu0 %v2585
    %2909 = vmatmul.bf16.gmra.mxu0 %v1749
    %v2910 = vpop.f32.mrf.mxu0
    %v2911 = vadd.f32 %v2898, %v2910
    %v2912 = vpop.f32.mrf.mxu0
    %2913 = vdwg.mxu0
    %2914 = vmatpush.bf16.msra.mxu0 %v2600
    %2915 = vmatpush.bf16.msra.mxu0 %v2599
    %2916 = vmatpush.bf16.msra.mxu0 %v2598
    %2917 = vmatpush.bf16.msra.mxu0 %v2597
    %2918 = vmatpush.bf16.msra.mxu0 %v2596
    %2919 = vmatpush.bf16.msra.mxu0 %v2595
    %2920 = vmatpush.bf16.msra.mxu0 %v2594
    %2921 = vmatpush.bf16.msra.mxu0 %v2593
    %2922 = vmatmul.bf16.gmra.mxu0 %v1750
    %v2923 = vpop.f32.mrf.mxu0
    %v2924 = vadd.f32 %v2911, %v2923
    %v2925 = vpop.f32.mrf.mxu0
    %2926 = vdwg.mxu0
    %2927 = vmatpush.bf16.msra.mxu0 %v2608
    %2928 = vmatpush.bf16.msra.mxu0 %v2607
    %2929 = vmatpush.bf16.msra.mxu0 %v2606
    %2930 = vmatpush.bf16.msra.mxu0 %v2605
    %2931 = vmatpush.bf16.msra.mxu0 %v2604
    %2932 = vmatpush.bf16.msra.mxu0 %v2603
    %2933 = vmatpush.bf16.msra.mxu0 %v2602
    %2934 = vmatpush.bf16.msra.mxu0 %v2601
    %2935 = vmatmul.bf16.gmra.mxu0 %v1751
    %v2936 = vpop.f32.mrf.mxu0
    %v2937 = vadd.f32 %v2924, %v2936
    %v2938 = vpop.f32.mrf.mxu0
    %2939 = vdwg.mxu0
    %2940 = vmatpush.bf16.msra.mxu0 %v2616
    %2941 = vmatpush.bf16.msra.mxu0 %v2615
    %2942 = vmatpush.bf16.msra.mxu0 %v2614
    %2943 = vmatpush.bf16.msra.mxu0 %v2613
    %2944 = vmatpush.bf16.msra.mxu0 %v2612
    %2945 = vmatpush.bf16.msra.mxu0 %v2611
    %2946 = vmatpush.bf16.msra.mxu0 %v2610
    %2947 = vmatpush.bf16.msra.mxu0 %v2609
    %2948 = vmatmul.bf16.gmra.mxu0 %v1752
    %v2949 = vpop.f32.mrf.mxu0
    %v2950 = vadd.f32 %v2937, %v2949
    %v2951 = vpop.f32.mrf.mxu0
    %2952 = vdwg.mxu0
    %v2953 = vadd.f32 %v1974, %v2950
    %2954 = vst [vmem:[#allocation8] sm:$0x1] %v2953
    // Predicated region
    $region26: #{tpu_custom_call.1} parent=1 // pred_check
      _
    $region27: #{tpu_custom_call.1} parent=1 // pred_check_branch
      %2956 = sbr.rel (0) target = $region29
    $region28: #{tpu_custom_call.1} parent=1 // pred_region
      %2958 = vsyncadd [#allocation4], 0
      %s2960 = sshll.u32 [#allocation8], 4
      %s2961 = int_to_ptr.vmem [resolvable:$true] %s2960
      %s2962 = sshll.u32 %s3, 4
      %s2963 = int_to_ptr.hbm [resolvable:$true] %s2962
      %2965 = dma.vmem_to_hbm [thread:$0]  %s2961, 16, %s2963, [#allocation4]
    $region29: #{tpu_custom_call.1} parent=1 // pred_fallthru
      _
    // Predicated region
    $region30: #{tpu_custom_call.1} parent=1 // pred_check
      _
    $region31: #{tpu_custom_call.1} parent=1 // pred_check_branch
      %2967 = sbr.rel (0) target = $region33
    $region32: #{tpu_custom_call.1} parent=1 // pred_region
      %2969 = dma.done [#allocation4], 16
    $region33: #{tpu_custom_call.1} parent=1 // pred_fallthru
      _
    %2970 = vsyncpa [#allocation3], 1
    %2971 = vsyncpa [#allocation6], 1
    %2972 = vsyncpa [#allocation4], 1

</llo_original>
